<compile_context>
chip_gen: v5e
topology: v5e:2x2
jax: 0.10.0
libtpu: 0.0.40
codegen_flags: <defaults>
</compile_context>

<pallas_src>
import math
from functools import partial

import jax
import jax.numpy as jnp
from jax.experimental import pallas as pl
from jax.experimental.pallas import tpu as pltpu

LN_EPS = 1e-5
NEG_INF = float(jnp.finfo(jnp.float32).min)


# ----------------------------- shared math helpers -----------------------------
def _layernorm(x, g, b):
    mu = jnp.mean(x, axis=-1, keepdims=True)
    var = jnp.mean((x - mu) ** 2, axis=-1, keepdims=True)
    return (x - mu) * jax.lax.rsqrt(var + LN_EPS) * g + b


def _softmax_last(x):
    m = jnp.max(x, axis=-1, keepdims=True)
    e = jnp.exp(x - m)
    return e / jnp.sum(e, axis=-1, keepdims=True)


# ----------------------------- the fused Pallas kernel -----------------------------
def fused_switch_kernel(
    x_ref, mask_ref,
    ln1_g, ln1_b, wqkv, bqkv, wo, bo, ln2_g, ln2_b, wfe, bfe,   # stacked [L, ...]
    w2, b2,                                                     # shared expert fc2
    fn_g, fn_b,                                                 # final LayerNorm
    y_ref, counts_ref, probsum_ref, pmax_ref,
    *, n_head, expert_dim,
):
    S = x_ref.shape[1]
    D = x_ref.shape[2]
    L = wqkv.shape[0]
    E = wfe.shape[2] - expert_dim
    dk = D // n_head
    scale = 1.0 / math.sqrt(dk)

    x = x_ref[0]           # (S, D) tokens of this batch row
    m = mask_ref[0]        # (S, S) key mask, 1.0 = attend

    # Hoisted mask work: ONE compare/select for the whole kernel instead of L*H.
    mbias = jnp.where(m > 0, 0.0, NEG_INF)     # additive pre-softmax bias
    # `m` itself is the post-softmax multiplicative zeroing factor (ESPnet style).

    counts_rows, probsum_rows, pmax_cols = [], [], []

    for l in range(L):      # static unroll: activations stay resident in vregs/VMEM
        # ---- pre-norm + fused QKV projection (one MXU push instead of three) ----
        h = _layernorm(x, ln1_g[l], ln1_b[l])
        qkv = jnp.dot(h, wqkv[l], preferred_element_type=jnp.float32) + bqkv[l]
        q = qkv[:, 0:D]
        kT = qkv[:, D:2 * D].T          # single (S,D)->(D,S) transpose per layer
        v = qkv[:, 2 * D:3 * D]
        wol = wo[l]

        # ---- multi-head self-attention.  Per-head scores use sublane slices of kT
        # and the hoisted additive mask; head outputs fold directly into the output
        # projection (no 8-way lane concatenate).
        attn_out = jnp.zeros((S, D), jnp.float32)
        for hh in range(n_head):
            lo = hh * dk
            sc = jnp.dot(q[:, lo:lo + dk], kT[lo:lo + dk, :],
                         preferred_element_type=jnp.float32) * scale + mbias
            p = _softmax_last(sc) * m          # masked probs exactly zeroed
            head = jnp.dot(p, v[:, lo:lo + dk], preferred_element_type=jnp.float32)
            attn_out = attn_out + jnp.dot(head, wol[lo:lo + dk, :],
                                          preferred_element_type=jnp.float32)
        attn_out = attn_out + bo[l]

        # module does: x = attn_out + dropout(attn_out); dropout is identity at eval
        x2 = attn_out + attn_out

        # ---- norm2 + Switch MoE feed-forward ----
        x3 = _layernorm(x2, ln2_g[l], ln2_b[l])

        # Fused [expert fc1 | router] matmul: one MXU push, one bias add.
        fused = jnp.dot(x3, wfe[l], preferred_element_type=jnp.float32) + bfe[l]
        h1 = jnp.maximum(fused[:, :expert_dim], 0.0)
        logits = fused[:, expert_dim:]

        rp = _softmax_last(logits)                    # routing softmax stays exact f32
        pmax = jnp.max(rp, axis=-1, keepdims=True)    # (S, 1)

        # first-argmax one-hot (torch.max tie-break) without jnp.argmax
        lane = jax.lax.broadcasted_iota(jnp.int32, rp.shape, 1)
        first_idx = jnp.min(jnp.where(rp >= pmax, lane, jnp.int32(E)),
                            axis=-1, keepdims=True)
        one_hot = (lane == first_idx).astype(jnp.float32)

        counts_rows.append(jnp.sum(one_hot, axis=0, keepdims=True))
        probsum_rows.append(jnp.sum(rp, axis=0, keepdims=True))
        pmax_cols.append(pmax)

        # Shared-weight expert MLP (drop_tokens=False, same MLP instance everywhere)
        # == dense per-token MLP; MLP ends in Softmax over features; is_scale_prob=True.
        h2 = jnp.dot(h1, w2[...], preferred_element_type=jnp.float32) + b2[...]
        ff = _softmax_last(h2) * pmax

        x = x3 + ff                     # x = x3 + dropout(ff) at eval

    # Single lane-dense slab stores at the end (no per-layer trailing-1 partial stores).
    counts_ref[0] = jnp.concatenate(counts_rows, axis=0)         # (L, E)
    probsum_ref[0] = jnp.concatenate(probsum_rows, axis=0)       # (L, E)
    pmax_ref[0] = jnp.concatenate(pmax_cols, axis=1).T           # (L, S), S lanes

    # ---- final LayerNorm ----
    y_ref[0] = _layernorm(x, fn_g[...], fn_b[...])


# ----------------------------- wrappers -----------------------------
def _stack(layers, key_):
    return jnp.stack([lp[key_] for lp in layers], axis=0)


def _rep_spec(a):
    # Whole array, same block for every grid step (Pallas skips re-fetching it).
    return pl.BlockSpec(a.shape, lambda b, _n=a.ndim: (0,) * _n)


@partial(jax.jit, static_argnames=("n_head",))
def _forward_jit(x, mask, params, n_head):
    B, S, D = x.shape
    layers = params["layers"]
    L = len(layers)
    ep = params["expert"]
    E = layers[0]["wsw"].shape[1]
    expert_dim = ep["w1"].shape[1]

    # Stacked per-layer params; QKV fused along the output axis; expert fc1 and the
    # router fused along the output axis (wider fc1 block first).
    wqkv = jnp.stack(
        [jnp.concatenate([lp["wq"], lp["wk"], lp["wv"]], axis=1) for lp in layers])
    bqkv = jnp.stack(
        [jnp.concatenate([lp["bq"], lp["bk"], lp["bv"]], axis=1) for lp in layers])
    wfe = jnp.stack(
        [jnp.concatenate([ep["w1"], lp["wsw"]], axis=1) for lp in layers])
    bfe = jnp.stack(
        [jnp.concatenate([ep["b1"], lp["bsw"]], axis=1) for lp in layers])
    ln1_g = _stack(layers, "ln1_g"); ln1_b = _stack(layers, "ln1_b")
    wo = _stack(layers, "wo");       bo = _stack(layers, "bo")
    ln2_g = _stack(layers, "ln2_g"); ln2_b = _stack(layers, "ln2_b")

    weights = (ln1_g, ln1_b, wqkv, bqkv, wo, bo, ln2_g, ln2_b, wfe, bfe,
               ep["w2"], ep["b2"], params["norm_g"], params["norm_b"])

    out_shape = (
        jax.ShapeDtypeStruct((B, S, D), jnp.float32),   # final normed output
        jax.ShapeDtypeStruct((B, L, E), jnp.float32),   # per-batch expert token counts
        jax.ShapeDtypeStruct((B, L, E), jnp.float32),   # per-batch route_prob sums
        jax.ShapeDtypeStruct((B, L, S), jnp.float32),   # per-batch route_prob_max
    )

    grid_spec = pltpu.PrefetchScalarGridSpec(
        num_scalar_prefetch=0,
        grid=(B,),
        in_specs=[pl.BlockSpec((1, S, D), lambda b: (b, 0, 0)),
                  pl.BlockSpec((1, S, S), lambda b: (b, 0, 0))]
                 + [_rep_spec(w) for w in weights],
        out_specs=(pl.BlockSpec((1, S, D), lambda b: (b, 0, 0)),
                   pl.BlockSpec((1, L, E), lambda b: (b, 0, 0)),
                   pl.BlockSpec((1, L, E), lambda b: (b, 0, 0)),
                   pl.BlockSpec((1, L, S), lambda b: (b, 0, 0))),
    )

    y, counts_b, probsum_b, pmax_b = pl.pallas_call(
        partial(fused_switch_kernel, n_head=n_head, expert_dim=expert_dim),
        out_shape=out_shape,
        grid_spec=grid_spec,
        compiler_params=pltpu.CompilerParams(
            dimension_semantics=("parallel",),          # shards batches across TCs (v7x)
            vmem_limit_bytes=32 * 1024 * 1024),
    )(x, mask, *weights)

    counts = jnp.sum(counts_b, axis=0)                  # (L, E) over all tokens
    probsum = jnp.sum(probsum_b, axis=0)                # (L, E)
    pmax = pmax_b.transpose(1, 0, 2).reshape(L, B * S)  # (L, B*S), batch-major tokens
    return y, counts, probsum, pmax


def switch_transformer_forward(x, mask, params, n_head):
    y, counts, probsum, pmax = _forward_jit(x, mask, params, n_head=n_head)
    n_dropped = [0] * len(params["layers"])   # drop_tokens=False -> never drops
    return y, counts, probsum, n_dropped, pmax


# ----------------------------- deterministic parameter init -----------------------------
def init_params(key, num_layers, d_model, n_experts, expert_dim):
    def lin(k, fan_in, fan_out):
        kw, kb = jax.random.split(k)
        w = 0.1 * jax.random.normal(kw, (fan_in, fan_out), jnp.float32)  # pre-transposed
        b = 0.1 * jax.random.normal(kb, (1, fan_out), jnp.float32)
        return w, b

    keys = jax.random.split(key, num_layers + 1)

    # ONE shared expert MLP (PyTorch reuses the same MLP instance everywhere)
    e1, e2 = jax.random.split(keys[0])
    w1, b1 = lin(e1, d_model, expert_dim)
    w2, b2 = lin(e2, expert_dim, d_model)
    expert = dict(w1=w1, b1=b1, w2=w2, b2=b2)

    layers = []
    for li in range(num_layers):
        lk = jax.random.split(keys[1 + li], 9)
        wq, bq = lin(lk[0], d_model, d_model)
        wk, bk = lin(lk[1], d_model, d_model)
        wv, bv = lin(lk[2], d_model, d_model)
        wo, bo = lin(lk[3], d_model, d_model)
        wsw, bsw = lin(lk[4], d_model, n_experts)
        ln1_g = 1.0 + 0.05 * jax.random.normal(lk[5], (1, d_model), jnp.float32)
        ln1_b = 0.05 * jax.random.normal(lk[6], (1, d_model), jnp.float32)
        ln2_g = 1.0 + 0.05 * jax.random.normal(lk[7], (1, d_model), jnp.float32)
        ln2_b = 0.05 * jax.random.normal(lk[8], (1, d_model), jnp.float32)
        layers.append(dict(
            ln1_g=ln1_g, ln1_b=ln1_b,
            wq=wq, bq=bq, wk=wk, bk=bk, wv=wv, bv=bv, wo=wo, bo=bo,
            ln2_g=ln2_g, ln2_b=ln2_b,
            wsw=wsw, bsw=bsw,
        ))

    norm_g = jnp.ones((1, d_model), jnp.float32)
    norm_b = jnp.zeros((1, d_model), jnp.float32)
    return dict(layers=layers, expert=expert, norm_g=norm_g, norm_b=norm_b)


# ----------------------------- pure-JAX reference (for verification) -----------------------------
def reference_forward(x, mask, params, n_head):
    B, S, D = x.shape
    dk = D // n_head
    scale = 1.0 / math.sqrt(dk)
    ep = params["expert"]
    counts_l, probsum_l, pmax_l = [], [], []
    for lp in params["layers"]:
        h = _layernorm(x, lp["ln1_g"], lp["ln1_b"])
        q = h @ lp["wq"] + lp["bq"]
        k = h @ lp["wk"] + lp["bk"]
        v = h @ lp["wv"] + lp["bv"]
        qh = q.reshape(B, S, n_head, dk).transpose(0, 2, 1, 3)
        kh = k.reshape(B, S, n_head, dk).transpose(0, 2, 1, 3)
        vh = v.reshape(B, S, n_head, dk).transpose(0, 2, 1, 3)
        sc = jnp.einsum("bhqd,bhkd->bhqk", qh, kh) * scale
        m = mask[:, None, :, :]
        sc = jnp.where(m > 0, sc, NEG_INF)
        p = _softmax_last(sc)
        p = jnp.where(m > 0, p, 0.0)
        ctx = jnp.einsum("bhqk,bhkd->bhqd", p, vh).transpose(0, 2, 1, 3).reshape(B, S, D)
        attn_out = ctx @ lp["wo"] + lp["bo"]
        x2 = attn_out + attn_out
        x3 = _layernorm(x2, lp["ln2_g"], lp["ln2_b"])
        rp = _softmax_last(x3 @ lp["wsw"] + lp["bsw"])        # (B,S,E)
        E = rp.shape[-1]
        pmax = jnp.max(rp, axis=-1)
        routes = jnp.argmax(rp, axis=-1)
        one_hot = jax.nn.one_hot(routes, E, dtype=jnp.float32)
        counts_l.append(one_hot.reshape(-1, E).sum(0))
        probsum_l.append(rp.reshape(-1, E).sum(0))
        pmax_l.append(pmax.reshape(-1))
        h1 = jax.nn.relu(x3 @ ep["w1"] + ep["b1"])
        ff = _softmax_last(h1 @ ep["w2"] + ep["b2"]) * pmax[..., None]
        x = x3 + ff
    x = _layernorm(x, params["norm_g"], params["norm_b"])
    return x, jnp.stack(counts_l), jnp.stack(probsum_l), [0] * len(params["layers"]), jnp.stack(pmax_l)


# ----------------------------- main -----------------------------
if __name__ == "__main__":
    # Small shapes consistent with the module: batch=2, seq=8, d_model=32,
    # 8 heads (d_k=4), 8 experts, expert_dim=64, 2 layers.
    B, S, D = 2, 8, 32
    n_head, n_experts, expert_dim, num_layers = 8, 8, 64, 2

    key = jax.random.PRNGKey(0)
    kx, kp = jax.random.split(key)
    x = jax.random.normal(kx, (B, S, D), jnp.float32)

    # key-padding style mask: batch 0 attends to all 8 keys, batch 1 to first 6
    lengths = jnp.array([S, S - 2])
    key_pos = jnp.arange(S)
    mask = (key_pos[None, None, :] < lengths[:, None, None]).astype(jnp.float32)
    mask = jnp.broadcast_to(mask, (B, S, S))

    params = init_params(kp, num_layers, D, n_experts, expert_dim)

    y, counts, probsum, n_dropped, pmax = switch_transformer_forward(x, mask, params, n_head)
    jax.block_until_ready(y)

    # verify against pure-JAX reference
    y_r, counts_r, probsum_r, _, pmax_r = reference_forward(x, mask, params, n_head)
    assert y.shape == (B, S, D)
    assert counts.shape == (num_layers, n_experts)
    assert probsum.shape == (num_layers, n_experts)
    assert pmax.shape == (num_layers, B * S)
    assert len(n_dropped) == num_layers
    assert jnp.allclose(y, y_r, atol=2e-3, rtol=2e-3)
    assert jnp.allclose(counts, counts_r)
    assert jnp.allclose(probsum, probsum_r, atol=2e-3, rtol=2e-3)
    assert jnp.allclose(pmax, pmax_r, atol=2e-3, rtol=2e-3)

    print("KERNEL_OK")
</pallas_src>

<mosaic_0001>
module attributes {stable_mosaic.version = 11 : i64} {
  func.func @fused_switch_kernel(%arg0: i32, %arg1: memref<1x8x32xf32, #tpu.memory_space<vmem>>, %arg2: memref<1x8x8xf32, #tpu.memory_space<vmem>>, %arg3: memref<2x1x32xf32, #tpu.memory_space<vmem>>, %arg4: memref<2x1x32xf32, #tpu.memory_space<vmem>>, %arg5: memref<2x32x96xf32, #tpu.memory_space<vmem>>, %arg6: memref<2x1x96xf32, #tpu.memory_space<vmem>>, %arg7: memref<2x32x32xf32, #tpu.memory_space<vmem>>, %arg8: memref<2x1x32xf32, #tpu.memory_space<vmem>>, %arg9: memref<2x1x32xf32, #tpu.memory_space<vmem>>, %arg10: memref<2x1x32xf32, #tpu.memory_space<vmem>>, %arg11: memref<2x32x72xf32, #tpu.memory_space<vmem>>, %arg12: memref<2x1x72xf32, #tpu.memory_space<vmem>>, %arg13: memref<64x32xf32, #tpu.memory_space<vmem>>, %arg14: memref<1x32xf32, #tpu.memory_space<vmem>>, %arg15: memref<1x32xf32, #tpu.memory_space<vmem>>, %arg16: memref<1x32xf32, #tpu.memory_space<vmem>>, %arg17: memref<1x8x32xf32, #tpu.memory_space<vmem>>, %arg18: memref<1x2x8xf32, #tpu.memory_space<vmem>>, %arg19: memref<1x2x8xf32, #tpu.memory_space<vmem>>, %arg20: memref<1x2x8xf32, #tpu.memory_space<vmem>>) attributes {dimension_semantics = [#tpu.dimension_semantics<parallel>], iteration_bounds = array<i64: 2>, scalar_prefetch = 0 : i64, scratch_operands = 0 : i64, tpu.core_type = #tpu.core_type<tc>, window_params = [{transform_indices = @transform_0, window_bounds = array<i64: 1, 8, 32>}, {transform_indices = @transform_1, window_bounds = array<i64: 1, 8, 8>}, {pipeline_mode = #tpu.pipeline_mode<synchronous>, transform_indices = @transform_2, window_bounds = array<i64: 2, 1, 32>}, {pipeline_mode = #tpu.pipeline_mode<synchronous>, transform_indices = @transform_3, window_bounds = array<i64: 2, 1, 32>}, {pipeline_mode = #tpu.pipeline_mode<synchronous>, transform_indices = @transform_4, window_bounds = array<i64: 2, 32, 96>}, {pipeline_mode = #tpu.pipeline_mode<synchronous>, transform_indices = @transform_5, window_bounds = array<i64: 2, 1, 96>}, {pipeline_mode = #tpu.pipeline_mode<synchronous>, transform_indices = @transform_6, window_bounds = array<i64: 2, 32, 32>}, {pipeline_mode = #tpu.pipeline_mode<synchronous>, transform_indices = @transform_7, window_bounds = array<i64: 2, 1, 32>}, {pipeline_mode = #tpu.pipeline_mode<synchronous>, transform_indices = @transform_8, window_bounds = array<i64: 2, 1, 32>}, {pipeline_mode = #tpu.pipeline_mode<synchronous>, transform_indices = @transform_9, window_bounds = array<i64: 2, 1, 32>}, {pipeline_mode = #tpu.pipeline_mode<synchronous>, transform_indices = @transform_10, window_bounds = array<i64: 2, 32, 72>}, {pipeline_mode = #tpu.pipeline_mode<synchronous>, transform_indices = @transform_11, window_bounds = array<i64: 2, 1, 72>}, {pipeline_mode = #tpu.pipeline_mode<synchronous>, transform_indices = @transform_12, window_bounds = array<i64: 64, 32>}, {pipeline_mode = #tpu.pipeline_mode<synchronous>, transform_indices = @transform_13, window_bounds = array<i64: 1, 32>}, {pipeline_mode = #tpu.pipeline_mode<synchronous>, transform_indices = @transform_14, window_bounds = array<i64: 1, 32>}, {pipeline_mode = #tpu.pipeline_mode<synchronous>, transform_indices = @transform_15, window_bounds = array<i64: 1, 32>}, {transform_indices = @transform_16, window_bounds = array<i64: 1, 8, 32>}, {transform_indices = @transform_17, window_bounds = array<i64: 1, 2, 8>}, {transform_indices = @transform_18, window_bounds = array<i64: 1, 2, 8>}, {transform_indices = @transform_19, window_bounds = array<i64: 1, 2, 8>}]} {
    %c0 = arith.constant 0 : index
    %c0_0 = arith.constant 0 : index
    %c0_1 = arith.constant 0 : index
    %0 = vector.load %arg1[%c0, %c0_0, %c0_1] : memref<1x8x32xf32, #tpu.memory_space<vmem>>, vector<1x8x32xf32>
    %1 = vector.shape_cast %0 : vector<1x8x32xf32> to vector<8x32xf32>
    %c0_2 = arith.constant 0 : index
    %c0_3 = arith.constant 0 : index
    %c0_4 = arith.constant 0 : index
    %2 = vector.load %arg2[%c0_2, %c0_3, %c0_4] : memref<1x8x8xf32, #tpu.memory_space<vmem>>, vector<1x8x8xf32>
    %3 = vector.shape_cast %2 : vector<1x8x8xf32> to vector<8x8xf32>
    %cst = arith.constant 0.000000e+00 : f32
    %4 = vector.broadcast %cst : f32 to vector<8x8xf32>
    %5 = arith.cmpf ogt, %3, %4 : vector<8x8xf32>
    %cst_5 = arith.constant 0.000000e+00 : f32
    %cst_6 = arith.constant -3.40282347E+38 : f32
    %6 = vector.broadcast %cst_5 : f32 to vector<8x8xf32>
    %7 = vector.broadcast %cst_6 : f32 to vector<8x8xf32>
    %8 = arith.select %5, %6, %7 : vector<8x8xi1>, vector<8x8xf32>
    %c0_7 = arith.constant 0 : index
    %c0_8 = arith.constant 0 : index
    %c0_9 = arith.constant 0 : index
    %9 = vector.load %arg3[%c0_7, %c0_8, %c0_9] : memref<2x1x32xf32, #tpu.memory_space<vmem>>, vector<1x1x32xf32>
    %10 = vector.shape_cast %9 : vector<1x1x32xf32> to vector<1x32xf32>
    %c0_10 = arith.constant 0 : index
    %c0_11 = arith.constant 0 : index
    %c0_12 = arith.constant 0 : index
    %11 = vector.load %arg4[%c0_10, %c0_11, %c0_12] : memref<2x1x32xf32, #tpu.memory_space<vmem>>, vector<1x1x32xf32>
    %12 = vector.shape_cast %11 : vector<1x1x32xf32> to vector<1x32xf32>
    %cst_13 = arith.constant dense<0.000000e+00> : vector<8xf32>
    %13 = vector.multi_reduction <add>, %1, %cst_13 [1] : vector<8x32xf32> to vector<8xf32>
    %14 = vector.shape_cast %13 : vector<8xf32> to vector<8x1xf32>
    %cst_14 = arith.constant 3.200000e+01 : f32
    %15 = vector.broadcast %cst_14 : f32 to vector<8x1xf32>
    %16 = arith.divf %14, %15 : vector<8x1xf32>
    %17 = vector.broadcast %16 : vector<8x1xf32> to vector<8x32xf32>
    %18 = arith.subf %1, %17 : vector<8x32xf32>
    %19 = arith.mulf %18, %18 : vector<8x32xf32>
    %cst_15 = arith.constant dense<0.000000e+00> : vector<8xf32>
    %20 = vector.multi_reduction <add>, %19, %cst_15 [1] : vector<8x32xf32> to vector<8xf32>
    %21 = vector.shape_cast %20 : vector<8xf32> to vector<8x1xf32>
    %cst_16 = arith.constant 3.200000e+01 : f32
    %22 = vector.broadcast %cst_16 : f32 to vector<8x1xf32>
    %23 = arith.divf %21, %22 : vector<8x1xf32>
    %24 = vector.broadcast %16 : vector<8x1xf32> to vector<8x32xf32>
    %25 = arith.subf %1, %24 : vector<8x32xf32>
    %cst_17 = arith.constant 9.99999974E-6 : f32
    %26 = vector.broadcast %cst_17 : f32 to vector<8x1xf32>
    %27 = arith.addf %23, %26 : vector<8x1xf32>
    %28 = math.rsqrt %27 : vector<8x1xf32>
    %29 = vector.broadcast %28 : vector<8x1xf32> to vector<8x32xf32>
    %30 = arith.mulf %25, %29 : vector<8x32xf32>
    %31 = vector.broadcast %10 : vector<1x32xf32> to vector<8x32xf32>
    %32 = arith.mulf %30, %31 : vector<8x32xf32>
    %33 = vector.broadcast %12 : vector<1x32xf32> to vector<8x32xf32>
    %34 = arith.addf %32, %33 : vector<8x32xf32>
    %c0_18 = arith.constant 0 : index
    %c0_19 = arith.constant 0 : index
    %c0_20 = arith.constant 0 : index
    %35 = vector.load %arg5[%c0_18, %c0_19, %c0_20] : memref<2x32x96xf32, #tpu.memory_space<vmem>>, vector<1x32x96xf32>
    %36 = vector.shape_cast %35 : vector<1x32x96xf32> to vector<32x96xf32>
    %cst_21 = arith.constant dense<0.000000e+00> : vector<8x96xf32>
    %37 = tpu.matmul %34, %36, %cst_21 {dimension_numbers = #tpu.dot_dimension_numbers<[1], [0], [0], [1], [0, 0, 1, 1], [], []>} : vector<8x32xf32>, vector<32x96xf32>, vector<8x96xf32> -> vector<8x96xf32>
    %c0_22 = arith.constant 0 : index
    %c0_23 = arith.constant 0 : index
    %c0_24 = arith.constant 0 : index
    %38 = vector.load %arg6[%c0_22, %c0_23, %c0_24] : memref<2x1x96xf32, #tpu.memory_space<vmem>>, vector<1x1x96xf32>
    %39 = vector.shape_cast %38 : vector<1x1x96xf32> to vector<1x96xf32>
    %40 = vector.broadcast %39 : vector<1x96xf32> to vector<8x96xf32>
    %41 = arith.addf %37, %40 : vector<8x96xf32>
    %42 = vector.extract_strided_slice %41 {offsets = [0, 0], sizes = [8, 32], strides = [1, 1]} : vector<8x96xf32> to vector<8x32xf32>
    %43 = vector.extract_strided_slice %41 {offsets = [0, 32], sizes = [8, 32], strides = [1, 1]} : vector<8x96xf32> to vector<8x32xf32>
    %44 = tpu.transpose %43, [1, 0] : vector<8x32xf32> -> vector<32x8xf32>
    %45 = vector.extract_strided_slice %41 {offsets = [0, 64], sizes = [8, 32], strides = [1, 1]} : vector<8x96xf32> to vector<8x32xf32>
    %c0_25 = arith.constant 0 : index
    %c0_26 = arith.constant 0 : index
    %c0_27 = arith.constant 0 : index
    %46 = vector.load %arg7[%c0_25, %c0_26, %c0_27] : memref<2x32x32xf32, #tpu.memory_space<vmem>>, vector<1x32x32xf32>
    %47 = vector.shape_cast %46 : vector<1x32x32xf32> to vector<32x32xf32>
    %cst_28 = arith.constant 0.000000e+00 : f32
    %48 = vector.broadcast %cst_28 : f32 to vector<8x32xf32>
    %49 = vector.extract_strided_slice %42 {offsets = [0, 0], sizes = [8, 4], strides = [1, 1]} : vector<8x32xf32> to vector<8x4xf32>
    %50 = vector.extract_strided_slice %44 {offsets = [0, 0], sizes = [4, 8], strides = [1, 1]} : vector<32x8xf32> to vector<4x8xf32>
    %cst_29 = arith.constant dense<0.000000e+00> : vector<8x8xf32>
    %51 = tpu.matmul %49, %50, %cst_29 {dimension_numbers = #tpu.dot_dimension_numbers<[1], [0], [0], [1], [0, 0, 1, 1], [], []>} : vector<8x4xf32>, vector<4x8xf32>, vector<8x8xf32> -> vector<8x8xf32>
    %cst_30 = arith.constant 5.000000e-01 : f32
    %52 = vector.broadcast %cst_30 : f32 to vector<8x8xf32>
    %53 = arith.mulf %51, %52 : vector<8x8xf32>
    %54 = arith.addf %53, %8 : vector<8x8xf32>
    %cst_31 = arith.constant dense<0xFF800000> : vector<8xf32>
    %55 = vector.multi_reduction <maximumf>, %54, %cst_31 [1] : vector<8x8xf32> to vector<8xf32>
    %56 = vector.shape_cast %55 : vector<8xf32> to vector<8x1xf32>
    %57 = vector.broadcast %56 : vector<8x1xf32> to vector<8x8xf32>
    %58 = arith.subf %54, %57 : vector<8x8xf32>
    %59 = math.exp %58 : vector<8x8xf32>
    %cst_32 = arith.constant dense<0.000000e+00> : vector<8xf32>
    %60 = vector.multi_reduction <add>, %59, %cst_32 [1] : vector<8x8xf32> to vector<8xf32>
    %61 = vector.shape_cast %60 : vector<8xf32> to vector<8x1xf32>
    %62 = vector.broadcast %61 : vector<8x1xf32> to vector<8x8xf32>
    %63 = arith.divf %59, %62 : vector<8x8xf32>
    %64 = arith.mulf %63, %3 : vector<8x8xf32>
    %65 = vector.extract_strided_slice %45 {offsets = [0, 0], sizes = [8, 4], strides = [1, 1]} : vector<8x32xf32> to vector<8x4xf32>
    %cst_33 = arith.constant dense<0.000000e+00> : vector<8x4xf32>
    %66 = tpu.matmul %64, %65, %cst_33 {dimension_numbers = #tpu.dot_dimension_numbers<[1], [0], [0], [1], [0, 0, 1, 1], [], []>} : vector<8x8xf32>, vector<8x4xf32>, vector<8x4xf32> -> vector<8x4xf32>
    %67 = vector.extract_strided_slice %47 {offsets = [0, 0], sizes = [4, 32], strides = [1, 1]} : vector<32x32xf32> to vector<4x32xf32>
    %cst_34 = arith.constant dense<0.000000e+00> : vector<8x32xf32>
    %68 = tpu.matmul %66, %67, %cst_34 {dimension_numbers = #tpu.dot_dimension_numbers<[1], [0], [0], [1], [0, 0, 1, 1], [], []>} : vector<8x4xf32>, vector<4x32xf32>, vector<8x32xf32> -> vector<8x32xf32>
    %69 = arith.addf %48, %68 : vector<8x32xf32>
    %70 = vector.extract_strided_slice %42 {offsets = [0, 4], sizes = [8, 4], strides = [1, 1]} : vector<8x32xf32> to vector<8x4xf32>
    %71 = vector.extract_strided_slice %44 {offsets = [4, 0], sizes = [4, 8], strides = [1, 1]} : vector<32x8xf32> to vector<4x8xf32>
    %cst_35 = arith.constant dense<0.000000e+00> : vector<8x8xf32>
    %72 = tpu.matmul %70, %71, %cst_35 {dimension_numbers = #tpu.dot_dimension_numbers<[1], [0], [0], [1], [0, 0, 1, 1], [], []>} : vector<8x4xf32>, vector<4x8xf32>, vector<8x8xf32> -> vector<8x8xf32>
    %cst_36 = arith.constant 5.000000e-01 : f32
    %73 = vector.broadcast %cst_36 : f32 to vector<8x8xf32>
    %74 = arith.mulf %72, %73 : vector<8x8xf32>
    %75 = arith.addf %74, %8 : vector<8x8xf32>
    %cst_37 = arith.constant dense<0xFF800000> : vector<8xf32>
    %76 = vector.multi_reduction <maximumf>, %75, %cst_37 [1] : vector<8x8xf32> to vector<8xf32>
    %77 = vector.shape_cast %76 : vector<8xf32> to vector<8x1xf32>
    %78 = vector.broadcast %77 : vector<8x1xf32> to vector<8x8xf32>
    %79 = arith.subf %75, %78 : vector<8x8xf32>
    %80 = math.exp %79 : vector<8x8xf32>
    %cst_38 = arith.constant dense<0.000000e+00> : vector<8xf32>
    %81 = vector.multi_reduction <add>, %80, %cst_38 [1] : vector<8x8xf32> to vector<8xf32>
    %82 = vector.shape_cast %81 : vector<8xf32> to vector<8x1xf32>
    %83 = vector.broadcast %82 : vector<8x1xf32> to vector<8x8xf32>
    %84 = arith.divf %80, %83 : vector<8x8xf32>
    %85 = arith.mulf %84, %3 : vector<8x8xf32>
    %86 = vector.extract_strided_slice %45 {offsets = [0, 4], sizes = [8, 4], strides = [1, 1]} : vector<8x32xf32> to vector<8x4xf32>
    %cst_39 = arith.constant dense<0.000000e+00> : vector<8x4xf32>
    %87 = tpu.matmul %85, %86, %cst_39 {dimension_numbers = #tpu.dot_dimension_numbers<[1], [0], [0], [1], [0, 0, 1, 1], [], []>} : vector<8x8xf32>, vector<8x4xf32>, vector<8x4xf32> -> vector<8x4xf32>
    %88 = vector.extract_strided_slice %47 {offsets = [4, 0], sizes = [4, 32], strides = [1, 1]} : vector<32x32xf32> to vector<4x32xf32>
    %cst_40 = arith.constant dense<0.000000e+00> : vector<8x32xf32>
    %89 = tpu.matmul %87, %88, %cst_40 {dimension_numbers = #tpu.dot_dimension_numbers<[1], [0], [0], [1], [0, 0, 1, 1], [], []>} : vector<8x4xf32>, vector<4x32xf32>, vector<8x32xf32> -> vector<8x32xf32>
    %90 = arith.addf %69, %89 : vector<8x32xf32>
    %91 = vector.extract_strided_slice %42 {offsets = [0, 8], sizes = [8, 4], strides = [1, 1]} : vector<8x32xf32> to vector<8x4xf32>
    %92 = vector.extract_strided_slice %44 {offsets = [8, 0], sizes = [4, 8], strides = [1, 1]} : vector<32x8xf32> to vector<4x8xf32>
    %cst_41 = arith.constant dense<0.000000e+00> : vector<8x8xf32>
    %93 = tpu.matmul %91, %92, %cst_41 {dimension_numbers = #tpu.dot_dimension_numbers<[1], [0], [0], [1], [0, 0, 1, 1], [], []>} : vector<8x4xf32>, vector<4x8xf32>, vector<8x8xf32> -> vector<8x8xf32>
    %cst_42 = arith.constant 5.000000e-01 : f32
    %94 = vector.broadcast %cst_42 : f32 to vector<8x8xf32>
    %95 = arith.mulf %93, %94 : vector<8x8xf32>
    %96 = arith.addf %95, %8 : vector<8x8xf32>
    %cst_43 = arith.constant dense<0xFF800000> : vector<8xf32>
    %97 = vector.multi_reduction <maximumf>, %96, %cst_43 [1] : vector<8x8xf32> to vector<8xf32>
    %98 = vector.shape_cast %97 : vector<8xf32> to vector<8x1xf32>
    %99 = vector.broadcast %98 : vector<8x1xf32> to vector<8x8xf32>
    %100 = arith.subf %96, %99 : vector<8x8xf32>
    %101 = math.exp %100 : vector<8x8xf32>
    %cst_44 = arith.constant dense<0.000000e+00> : vector<8xf32>
    %102 = vector.multi_reduction <add>, %101, %cst_44 [1] : vector<8x8xf32> to vector<8xf32>
    %103 = vector.shape_cast %102 : vector<8xf32> to vector<8x1xf32>
    %104 = vector.broadcast %103 : vector<8x1xf32> to vector<8x8xf32>
    %105 = arith.divf %101, %104 : vector<8x8xf32>
    %106 = arith.mulf %105, %3 : vector<8x8xf32>
    %107 = vector.extract_strided_slice %45 {offsets = [0, 8], sizes = [8, 4], strides = [1, 1]} : vector<8x32xf32> to vector<8x4xf32>
    %cst_45 = arith.constant dense<0.000000e+00> : vector<8x4xf32>
    %108 = tpu.matmul %106, %107, %cst_45 {dimension_numbers = #tpu.dot_dimension_numbers<[1], [0], [0], [1], [0, 0, 1, 1], [], []>} : vector<8x8xf32>, vector<8x4xf32>, vector<8x4xf32> -> vector<8x4xf32>
    %109 = vector.extract_strided_slice %47 {offsets = [8, 0], sizes = [4, 32], strides = [1, 1]} : vector<32x32xf32> to vector<4x32xf32>
    %cst_46 = arith.constant dense<0.000000e+00> : vector<8x32xf32>
    %110 = tpu.matmul %108, %109, %cst_46 {dimension_numbers = #tpu.dot_dimension_numbers<[1], [0], [0], [1], [0, 0, 1, 1], [], []>} : vector<8x4xf32>, vector<4x32xf32>, vector<8x32xf32> -> vector<8x32xf32>
    %111 = arith.addf %90, %110 : vector<8x32xf32>
    %112 = vector.extract_strided_slice %42 {offsets = [0, 12], sizes = [8, 4], strides = [1, 1]} : vector<8x32xf32> to vector<8x4xf32>
    %113 = vector.extract_strided_slice %44 {offsets = [12, 0], sizes = [4, 8], strides = [1, 1]} : vector<32x8xf32> to vector<4x8xf32>
    %cst_47 = arith.constant dense<0.000000e+00> : vector<8x8xf32>
    %114 = tpu.matmul %112, %113, %cst_47 {dimension_numbers = #tpu.dot_dimension_numbers<[1], [0], [0], [1], [0, 0, 1, 1], [], []>} : vector<8x4xf32>, vector<4x8xf32>, vector<8x8xf32> -> vector<8x8xf32>
    %cst_48 = arith.constant 5.000000e-01 : f32
    %115 = vector.broadcast %cst_48 : f32 to vector<8x8xf32>
    %116 = arith.mulf %114, %115 : vector<8x8xf32>
    %117 = arith.addf %116, %8 : vector<8x8xf32>
    %cst_49 = arith.constant dense<0xFF800000> : vector<8xf32>
    %118 = vector.multi_reduction <maximumf>, %117, %cst_49 [1] : vector<8x8xf32> to vector<8xf32>
    %119 = vector.shape_cast %118 : vector<8xf32> to vector<8x1xf32>
    %120 = vector.broadcast %119 : vector<8x1xf32> to vector<8x8xf32>
    %121 = arith.subf %117, %120 : vector<8x8xf32>
    %122 = math.exp %121 : vector<8x8xf32>
    %cst_50 = arith.constant dense<0.000000e+00> : vector<8xf32>
    %123 = vector.multi_reduction <add>, %122, %cst_50 [1] : vector<8x8xf32> to vector<8xf32>
    %124 = vector.shape_cast %123 : vector<8xf32> to vector<8x1xf32>
    %125 = vector.broadcast %124 : vector<8x1xf32> to vector<8x8xf32>
    %126 = arith.divf %122, %125 : vector<8x8xf32>
    %127 = arith.mulf %126, %3 : vector<8x8xf32>
    %128 = vector.extract_strided_slice %45 {offsets = [0, 12], sizes = [8, 4], strides = [1, 1]} : vector<8x32xf32> to vector<8x4xf32>
    %cst_51 = arith.constant dense<0.000000e+00> : vector<8x4xf32>
    %129 = tpu.matmul %127, %128, %cst_51 {dimension_numbers = #tpu.dot_dimension_numbers<[1], [0], [0], [1], [0, 0, 1, 1], [], []>} : vector<8x8xf32>, vector<8x4xf32>, vector<8x4xf32> -> vector<8x4xf32>
    %130 = vector.extract_strided_slice %47 {offsets = [12, 0], sizes = [4, 32], strides = [1, 1]} : vector<32x32xf32> to vector<4x32xf32>
    %cst_52 = arith.constant dense<0.000000e+00> : vector<8x32xf32>
    %131 = tpu.matmul %129, %130, %cst_52 {dimension_numbers = #tpu.dot_dimension_numbers<[1], [0], [0], [1], [0, 0, 1, 1], [], []>} : vector<8x4xf32>, vector<4x32xf32>, vector<8x32xf32> -> vector<8x32xf32>
    %132 = arith.addf %111, %131 : vector<8x32xf32>
    %133 = vector.extract_strided_slice %42 {offsets = [0, 16], sizes = [8, 4], strides = [1, 1]} : vector<8x32xf32> to vector<8x4xf32>
    %134 = vector.extract_strided_slice %44 {offsets = [16, 0], sizes = [4, 8], strides = [1, 1]} : vector<32x8xf32> to vector<4x8xf32>
    %cst_53 = arith.constant dense<0.000000e+00> : vector<8x8xf32>
    %135 = tpu.matmul %133, %134, %cst_53 {dimension_numbers = #tpu.dot_dimension_numbers<[1], [0], [0], [1], [0, 0, 1, 1], [], []>} : vector<8x4xf32>, vector<4x8xf32>, vector<8x8xf32> -> vector<8x8xf32>
    %cst_54 = arith.constant 5.000000e-01 : f32
    %136 = vector.broadcast %cst_54 : f32 to vector<8x8xf32>
    %137 = arith.mulf %135, %136 : vector<8x8xf32>
    %138 = arith.addf %137, %8 : vector<8x8xf32>
    %cst_55 = arith.constant dense<0xFF800000> : vector<8xf32>
    %139 = vector.multi_reduction <maximumf>, %138, %cst_55 [1] : vector<8x8xf32> to vector<8xf32>
    %140 = vector.shape_cast %139 : vector<8xf32> to vector<8x1xf32>
    %141 = vector.broadcast %140 : vector<8x1xf32> to vector<8x8xf32>
    %142 = arith.subf %138, %141 : vector<8x8xf32>
    %143 = math.exp %142 : vector<8x8xf32>
    %cst_56 = arith.constant dense<0.000000e+00> : vector<8xf32>
    %144 = vector.multi_reduction <add>, %143, %cst_56 [1] : vector<8x8xf32> to vector<8xf32>
    %145 = vector.shape_cast %144 : vector<8xf32> to vector<8x1xf32>
    %146 = vector.broadcast %145 : vector<8x1xf32> to vector<8x8xf32>
    %147 = arith.divf %143, %146 : vector<8x8xf32>
    %148 = arith.mulf %147, %3 : vector<8x8xf32>
    %149 = vector.extract_strided_slice %45 {offsets = [0, 16], sizes = [8, 4], strides = [1, 1]} : vector<8x32xf32> to vector<8x4xf32>
    %cst_57 = arith.constant dense<0.000000e+00> : vector<8x4xf32>
    %150 = tpu.matmul %148, %149, %cst_57 {dimension_numbers = #tpu.dot_dimension_numbers<[1], [0], [0], [1], [0, 0, 1, 1], [], []>} : vector<8x8xf32>, vector<8x4xf32>, vector<8x4xf32> -> vector<8x4xf32>
    %151 = vector.extract_strided_slice %47 {offsets = [16, 0], sizes = [4, 32], strides = [1, 1]} : vector<32x32xf32> to vector<4x32xf32>
    %cst_58 = arith.constant dense<0.000000e+00> : vector<8x32xf32>
    %152 = tpu.matmul %150, %151, %cst_58 {dimension_numbers = #tpu.dot_dimension_numbers<[1], [0], [0], [1], [0, 0, 1, 1], [], []>} : vector<8x4xf32>, vector<4x32xf32>, vector<8x32xf32> -> vector<8x32xf32>
    %153 = arith.addf %132, %152 : vector<8x32xf32>
    %154 = vector.extract_strided_slice %42 {offsets = [0, 20], sizes = [8, 4], strides = [1, 1]} : vector<8x32xf32> to vector<8x4xf32>
    %155 = vector.extract_strided_slice %44 {offsets = [20, 0], sizes = [4, 8], strides = [1, 1]} : vector<32x8xf32> to vector<4x8xf32>
    %cst_59 = arith.constant dense<0.000000e+00> : vector<8x8xf32>
    %156 = tpu.matmul %154, %155, %cst_59 {dimension_numbers = #tpu.dot_dimension_numbers<[1], [0], [0], [1], [0, 0, 1, 1], [], []>} : vector<8x4xf32>, vector<4x8xf32>, vector<8x8xf32> -> vector<8x8xf32>
    %cst_60 = arith.constant 5.000000e-01 : f32
    %157 = vector.broadcast %cst_60 : f32 to vector<8x8xf32>
    %158 = arith.mulf %156, %157 : vector<8x8xf32>
    %159 = arith.addf %158, %8 : vector<8x8xf32>
    %cst_61 = arith.constant dense<0xFF800000> : vector<8xf32>
    %160 = vector.multi_reduction <maximumf>, %159, %cst_61 [1] : vector<8x8xf32> to vector<8xf32>
    %161 = vector.shape_cast %160 : vector<8xf32> to vector<8x1xf32>
    %162 = vector.broadcast %161 : vector<8x1xf32> to vector<8x8xf32>
    %163 = arith.subf %159, %162 : vector<8x8xf32>
    %164 = math.exp %163 : vector<8x8xf32>
    %cst_62 = arith.constant dense<0.000000e+00> : vector<8xf32>
    %165 = vector.multi_reduction <add>, %164, %cst_62 [1] : vector<8x8xf32> to vector<8xf32>
    %166 = vector.shape_cast %165 : vector<8xf32> to vector<8x1xf32>
    %167 = vector.broadcast %166 : vector<8x1xf32> to vector<8x8xf32>
    %168 = arith.divf %164, %167 : vector<8x8xf32>
    %169 = arith.mulf %168, %3 : vector<8x8xf32>
    %170 = vector.extract_strided_slice %45 {offsets = [0, 20], sizes = [8, 4], strides = [1, 1]} : vector<8x32xf32> to vector<8x4xf32>
    %cst_63 = arith.constant dense<0.000000e+00> : vector<8x4xf32>
    %171 = tpu.matmul %169, %170, %cst_63 {dimension_numbers = #tpu.dot_dimension_numbers<[1], [0], [0], [1], [0, 0, 1, 1], [], []>} : vector<8x8xf32>, vector<8x4xf32>, vector<8x4xf32> -> vector<8x4xf32>
    %172 = vector.extract_strided_slice %47 {offsets = [20, 0], sizes = [4, 32], strides = [1, 1]} : vector<32x32xf32> to vector<4x32xf32>
    %cst_64 = arith.constant dense<0.000000e+00> : vector<8x32xf32>
    %173 = tpu.matmul %171, %172, %cst_64 {dimension_numbers = #tpu.dot_dimension_numbers<[1], [0], [0], [1], [0, 0, 1, 1], [], []>} : vector<8x4xf32>, vector<4x32xf32>, vector<8x32xf32> -> vector<8x32xf32>
    %174 = arith.addf %153, %173 : vector<8x32xf32>
    %175 = vector.extract_strided_slice %42 {offsets = [0, 24], sizes = [8, 4], strides = [1, 1]} : vector<8x32xf32> to vector<8x4xf32>
    %176 = vector.extract_strided_slice %44 {offsets = [24, 0], sizes = [4, 8], strides = [1, 1]} : vector<32x8xf32> to vector<4x8xf32>
    %cst_65 = arith.constant dense<0.000000e+00> : vector<8x8xf32>
    %177 = tpu.matmul %175, %176, %cst_65 {dimension_numbers = #tpu.dot_dimension_numbers<[1], [0], [0], [1], [0, 0, 1, 1], [], []>} : vector<8x4xf32>, vector<4x8xf32>, vector<8x8xf32> -> vector<8x8xf32>
    %cst_66 = arith.constant 5.000000e-01 : f32
    %178 = vector.broadcast %cst_66 : f32 to vector<8x8xf32>
    %179 = arith.mulf %177, %178 : vector<8x8xf32>
    %180 = arith.addf %179, %8 : vector<8x8xf32>
    %cst_67 = arith.constant dense<0xFF800000> : vector<8xf32>
    %181 = vector.multi_reduction <maximumf>, %180, %cst_67 [1] : vector<8x8xf32> to vector<8xf32>
    %182 = vector.shape_cast %181 : vector<8xf32> to vector<8x1xf32>
    %183 = vector.broadcast %182 : vector<8x1xf32> to vector<8x8xf32>
    %184 = arith.subf %180, %183 : vector<8x8xf32>
    %185 = math.exp %184 : vector<8x8xf32>
    %cst_68 = arith.constant dense<0.000000e+00> : vector<8xf32>
    %186 = vector.multi_reduction <add>, %185, %cst_68 [1] : vector<8x8xf32> to vector<8xf32>
    %187 = vector.shape_cast %186 : vector<8xf32> to vector<8x1xf32>
    %188 = vector.broadcast %187 : vector<8x1xf32> to vector<8x8xf32>
    %189 = arith.divf %185, %188 : vector<8x8xf32>
    %190 = arith.mulf %189, %3 : vector<8x8xf32>
    %191 = vector.extract_strided_slice %45 {offsets = [0, 24], sizes = [8, 4], strides = [1, 1]} : vector<8x32xf32> to vector<8x4xf32>
    %cst_69 = arith.constant dense<0.000000e+00> : vector<8x4xf32>
    %192 = tpu.matmul %190, %191, %cst_69 {dimension_numbers = #tpu.dot_dimension_numbers<[1], [0], [0], [1], [0, 0, 1, 1], [], []>} : vector<8x8xf32>, vector<8x4xf32>, vector<8x4xf32> -> vector<8x4xf32>
    %193 = vector.extract_strided_slice %47 {offsets = [24, 0], sizes = [4, 32], strides = [1, 1]} : vector<32x32xf32> to vector<4x32xf32>
    %cst_70 = arith.constant dense<0.000000e+00> : vector<8x32xf32>
    %194 = tpu.matmul %192, %193, %cst_70 {dimension_numbers = #tpu.dot_dimension_numbers<[1], [0], [0], [1], [0, 0, 1, 1], [], []>} : vector<8x4xf32>, vector<4x32xf32>, vector<8x32xf32> -> vector<8x32xf32>
    %195 = arith.addf %174, %194 : vector<8x32xf32>
    %196 = vector.extract_strided_slice %42 {offsets = [0, 28], sizes = [8, 4], strides = [1, 1]} : vector<8x32xf32> to vector<8x4xf32>
    %197 = vector.extract_strided_slice %44 {offsets = [28, 0], sizes = [4, 8], strides = [1, 1]} : vector<32x8xf32> to vector<4x8xf32>
    %cst_71 = arith.constant dense<0.000000e+00> : vector<8x8xf32>
    %198 = tpu.matmul %196, %197, %cst_71 {dimension_numbers = #tpu.dot_dimension_numbers<[1], [0], [0], [1], [0, 0, 1, 1], [], []>} : vector<8x4xf32>, vector<4x8xf32>, vector<8x8xf32> -> vector<8x8xf32>
    %cst_72 = arith.constant 5.000000e-01 : f32
    %199 = vector.broadcast %cst_72 : f32 to vector<8x8xf32>
    %200 = arith.mulf %198, %199 : vector<8x8xf32>
    %201 = arith.addf %200, %8 : vector<8x8xf32>
    %cst_73 = arith.constant dense<0xFF800000> : vector<8xf32>
    %202 = vector.multi_reduction <maximumf>, %201, %cst_73 [1] : vector<8x8xf32> to vector<8xf32>
    %203 = vector.shape_cast %202 : vector<8xf32> to vector<8x1xf32>
    %204 = vector.broadcast %203 : vector<8x1xf32> to vector<8x8xf32>
    %205 = arith.subf %201, %204 : vector<8x8xf32>
    %206 = math.exp %205 : vector<8x8xf32>
    %cst_74 = arith.constant dense<0.000000e+00> : vector<8xf32>
    %207 = vector.multi_reduction <add>, %206, %cst_74 [1] : vector<8x8xf32> to vector<8xf32>
    %208 = vector.shape_cast %207 : vector<8xf32> to vector<8x1xf32>
    %209 = vector.broadcast %208 : vector<8x1xf32> to vector<8x8xf32>
    %210 = arith.divf %206, %209 : vector<8x8xf32>
    %211 = arith.mulf %210, %3 : vector<8x8xf32>
    %212 = vector.extract_strided_slice %45 {offsets = [0, 28], sizes = [8, 4], strides = [1, 1]} : vector<8x32xf32> to vector<8x4xf32>
    %cst_75 = arith.constant dense<0.000000e+00> : vector<8x4xf32>
    %213 = tpu.matmul %211, %212, %cst_75 {dimension_numbers = #tpu.dot_dimension_numbers<[1], [0], [0], [1], [0, 0, 1, 1], [], []>} : vector<8x8xf32>, vector<8x4xf32>, vector<8x4xf32> -> vector<8x4xf32>
    %214 = vector.extract_strided_slice %47 {offsets = [28, 0], sizes = [4, 32], strides = [1, 1]} : vector<32x32xf32> to vector<4x32xf32>
    %cst_76 = arith.constant dense<0.000000e+00> : vector<8x32xf32>
    %215 = tpu.matmul %213, %214, %cst_76 {dimension_numbers = #tpu.dot_dimension_numbers<[1], [0], [0], [1], [0, 0, 1, 1], [], []>} : vector<8x4xf32>, vector<4x32xf32>, vector<8x32xf32> -> vector<8x32xf32>
    %216 = arith.addf %195, %215 : vector<8x32xf32>
    %c0_77 = arith.constant 0 : index
    %c0_78 = arith.constant 0 : index
    %c0_79 = arith.constant 0 : index
    %217 = vector.load %arg8[%c0_77, %c0_78, %c0_79] : memref<2x1x32xf32, #tpu.memory_space<vmem>>, vector<1x1x32xf32>
    %218 = vector.shape_cast %217 : vector<1x1x32xf32> to vector<1x32xf32>
    %219 = vector.broadcast %218 : vector<1x32xf32> to vector<8x32xf32>
    %220 = arith.addf %216, %219 : vector<8x32xf32>
    %221 = arith.addf %220, %220 : vector<8x32xf32>
    %c0_80 = arith.constant 0 : index
    %c0_81 = arith.constant 0 : index
    %c0_82 = arith.constant 0 : index
    %222 = vector.load %arg9[%c0_80, %c0_81, %c0_82] : memref<2x1x32xf32, #tpu.memory_space<vmem>>, vector<1x1x32xf32>
    %223 = vector.shape_cast %222 : vector<1x1x32xf32> to vector<1x32xf32>
    %c0_83 = arith.constant 0 : index
    %c0_84 = arith.constant 0 : index
    %c0_85 = arith.constant 0 : index
    %224 = vector.load %arg10[%c0_83, %c0_84, %c0_85] : memref<2x1x32xf32, #tpu.memory_space<vmem>>, vector<1x1x32xf32>
    %225 = vector.shape_cast %224 : vector<1x1x32xf32> to vector<1x32xf32>
    %cst_86 = arith.constant dense<0.000000e+00> : vector<8xf32>
    %226 = vector.multi_reduction <add>, %221, %cst_86 [1] : vector<8x32xf32> to vector<8xf32>
    %227 = vector.shape_cast %226 : vector<8xf32> to vector<8x1xf32>
    %cst_87 = arith.constant 3.200000e+01 : f32
    %228 = vector.broadcast %cst_87 : f32 to vector<8x1xf32>
    %229 = arith.divf %227, %228 : vector<8x1xf32>
    %230 = vector.broadcast %229 : vector<8x1xf32> to vector<8x32xf32>
    %231 = arith.subf %221, %230 : vector<8x32xf32>
    %232 = arith.mulf %231, %231 : vector<8x32xf32>
    %cst_88 = arith.constant dense<0.000000e+00> : vector<8xf32>
    %233 = vector.multi_reduction <add>, %232, %cst_88 [1] : vector<8x32xf32> to vector<8xf32>
    %234 = vector.shape_cast %233 : vector<8xf32> to vector<8x1xf32>
    %cst_89 = arith.constant 3.200000e+01 : f32
    %235 = vector.broadcast %cst_89 : f32 to vector<8x1xf32>
    %236 = arith.divf %234, %235 : vector<8x1xf32>
    %237 = vector.broadcast %229 : vector<8x1xf32> to vector<8x32xf32>
    %238 = arith.subf %221, %237 : vector<8x32xf32>
    %cst_90 = arith.constant 9.99999974E-6 : f32
    %239 = vector.broadcast %cst_90 : f32 to vector<8x1xf32>
    %240 = arith.addf %236, %239 : vector<8x1xf32>
    %241 = math.rsqrt %240 : vector<8x1xf32>
    %242 = vector.broadcast %241 : vector<8x1xf32> to vector<8x32xf32>
    %243 = arith.mulf %238, %242 : vector<8x32xf32>
    %244 = vector.broadcast %223 : vector<1x32xf32> to vector<8x32xf32>
    %245 = arith.mulf %243, %244 : vector<8x32xf32>
    %246 = vector.broadcast %225 : vector<1x32xf32> to vector<8x32xf32>
    %247 = arith.addf %245, %246 : vector<8x32xf32>
    %c0_91 = arith.constant 0 : index
    %c0_92 = arith.constant 0 : index
    %c0_93 = arith.constant 0 : index
    %248 = vector.load %arg11[%c0_91, %c0_92, %c0_93] : memref<2x32x72xf32, #tpu.memory_space<vmem>>, vector<1x32x72xf32>
    %249 = vector.shape_cast %248 : vector<1x32x72xf32> to vector<32x72xf32>
    %cst_94 = arith.constant dense<0.000000e+00> : vector<8x72xf32>
    %250 = tpu.matmul %247, %249, %cst_94 {dimension_numbers = #tpu.dot_dimension_numbers<[1], [0], [0], [1], [0, 0, 1, 1], [], []>} : vector<8x32xf32>, vector<32x72xf32>, vector<8x72xf32> -> vector<8x72xf32>
    %c0_95 = arith.constant 0 : index
    %c0_96 = arith.constant 0 : index
    %c0_97 = arith.constant 0 : index
    %251 = vector.load %arg12[%c0_95, %c0_96, %c0_97] : memref<2x1x72xf32, #tpu.memory_space<vmem>>, vector<1x1x72xf32>
    %252 = vector.shape_cast %251 : vector<1x1x72xf32> to vector<1x72xf32>
    %253 = vector.broadcast %252 : vector<1x72xf32> to vector<8x72xf32>
    %254 = arith.addf %250, %253 : vector<8x72xf32>
    %255 = vector.extract_strided_slice %254 {offsets = [0, 0], sizes = [8, 64], strides = [1, 1]} : vector<8x72xf32> to vector<8x64xf32>
    %cst_98 = arith.constant 0.000000e+00 : f32
    %256 = vector.broadcast %cst_98 : f32 to vector<8x64xf32>
    %257 = arith.maximumf %255, %256 : vector<8x64xf32>
    %258 = vector.extract_strided_slice %254 {offsets = [0, 64], sizes = [8, 8], strides = [1, 1]} : vector<8x72xf32> to vector<8x8xf32>
    %cst_99 = arith.constant dense<0xFF800000> : vector<8xf32>
    %259 = vector.multi_reduction <maximumf>, %258, %cst_99 [1] : vector<8x8xf32> to vector<8xf32>
    %260 = vector.shape_cast %259 : vector<8xf32> to vector<8x1xf32>
    %261 = vector.broadcast %260 : vector<8x1xf32> to vector<8x8xf32>
    %262 = arith.subf %258, %261 : vector<8x8xf32>
    %263 = math.exp %262 : vector<8x8xf32>
    %cst_100 = arith.constant dense<0.000000e+00> : vector<8xf32>
    %264 = vector.multi_reduction <add>, %263, %cst_100 [1] : vector<8x8xf32> to vector<8xf32>
    %265 = vector.shape_cast %264 : vector<8xf32> to vector<8x1xf32>
    %266 = vector.broadcast %265 : vector<8x1xf32> to vector<8x8xf32>
    %267 = arith.divf %263, %266 : vector<8x8xf32>
    %cst_101 = arith.constant dense<0xFF800000> : vector<8xf32>
    %268 = vector.multi_reduction <maximumf>, %267, %cst_101 [1] : vector<8x8xf32> to vector<8xf32>
    %269 = vector.shape_cast %268 : vector<8xf32> to vector<8x1xf32>
    %270 = tpu.iota {dimensions = array<i32: 1>} : vector<8x8xi32>
    %271 = vector.broadcast %269 : vector<8x1xf32> to vector<8x8xf32>
    %272 = arith.cmpf oge, %267, %271 : vector<8x8xf32>
    %c8_i32 = arith.constant 8 : i32
    %273 = vector.broadcast %c8_i32 : i32 to vector<8x8xi32>
    %274 = arith.select %272, %270, %273 : vector<8x8xi1>, vector<8x8xi32>
    %cst_102 = arith.constant dense<2147483647> : vector<8xi32>
    %275 = vector.multi_reduction <minsi>, %274, %cst_102 [1] : vector<8x8xi32> to vector<8xi32>
    %276 = vector.shape_cast %275 : vector<8xi32> to vector<8x1xi32>
    %277 = vector.broadcast %276 : vector<8x1xi32> to vector<8x8xi32>
    %278 = arith.cmpi eq, %270, %277 : vector<8x8xi32>
    %279 = arith.extui %278 : vector<8x8xi1> to vector<8x8xi32>
    %280 = arith.sitofp %279 : vector<8x8xi32> to vector<8x8xf32>
    %cst_103 = arith.constant dense<0.000000e+00> : vector<8xf32>
    %281 = vector.multi_reduction <add>, %280, %cst_103 [0] : vector<8x8xf32> to vector<8xf32>
    %282 = vector.shape_cast %281 : vector<8xf32> to vector<1x8xf32>
    %cst_104 = arith.constant dense<0.000000e+00> : vector<8xf32>
    %283 = vector.multi_reduction <add>, %267, %cst_104 [0] : vector<8x8xf32> to vector<8xf32>
    %284 = vector.shape_cast %283 : vector<8xf32> to vector<1x8xf32>
    %c0_105 = arith.constant 0 : index
    %c0_106 = arith.constant 0 : index
    %285 = vector.load %arg13[%c0_105, %c0_106] : memref<64x32xf32, #tpu.memory_space<vmem>>, vector<64x32xf32>
    %cst_107 = arith.constant dense<0.000000e+00> : vector<8x32xf32>
    %286 = tpu.matmul %257, %285, %cst_107 {dimension_numbers = #tpu.dot_dimension_numbers<[1], [0], [0], [1], [0, 0, 1, 1], [], []>} : vector<8x64xf32>, vector<64x32xf32>, vector<8x32xf32> -> vector<8x32xf32>
    %c0_108 = arith.constant 0 : index
    %c0_109 = arith.constant 0 : index
    %287 = vector.load %arg14[%c0_108, %c0_109] : memref<1x32xf32, #tpu.memory_space<vmem>>, vector<1x32xf32>
    %288 = vector.broadcast %287 : vector<1x32xf32> to vector<8x32xf32>
    %289 = arith.addf %286, %288 : vector<8x32xf32>
    %cst_110 = arith.constant dense<0xFF800000> : vector<8xf32>
    %290 = vector.multi_reduction <maximumf>, %289, %cst_110 [1] : vector<8x32xf32> to vector<8xf32>
    %291 = vector.shape_cast %290 : vector<8xf32> to vector<8x1xf32>
    %292 = vector.broadcast %291 : vector<8x1xf32> to vector<8x32xf32>
    %293 = arith.subf %289, %292 : vector<8x32xf32>
    %294 = math.exp %293 : vector<8x32xf32>
    %cst_111 = arith.constant dense<0.000000e+00> : vector<8xf32>
    %295 = vector.multi_reduction <add>, %294, %cst_111 [1] : vector<8x32xf32> to vector<8xf32>
    %296 = vector.shape_cast %295 : vector<8xf32> to vector<8x1xf32>
    %297 = vector.broadcast %296 : vector<8x1xf32> to vector<8x32xf32>
    %298 = arith.divf %294, %297 : vector<8x32xf32>
    %299 = vector.broadcast %269 : vector<8x1xf32> to vector<8x32xf32>
    %300 = arith.mulf %298, %299 : vector<8x32xf32>
    %301 = arith.addf %247, %300 : vector<8x32xf32>
    %c1 = arith.constant 1 : index
    %c0_112 = arith.constant 0 : index
    %c0_113 = arith.constant 0 : index
    %302 = vector.load %arg3[%c1, %c0_112, %c0_113] : memref<2x1x32xf32, #tpu.memory_space<vmem>>, vector<1x1x32xf32>
    %303 = vector.shape_cast %302 : vector<1x1x32xf32> to vector<1x32xf32>
    %c1_114 = arith.constant 1 : index
    %c0_115 = arith.constant 0 : index
    %c0_116 = arith.constant 0 : index
    %304 = vector.load %arg4[%c1_114, %c0_115, %c0_116] : memref<2x1x32xf32, #tpu.memory_space<vmem>>, vector<1x1x32xf32>
    %305 = vector.shape_cast %304 : vector<1x1x32xf32> to vector<1x32xf32>
    %cst_117 = arith.constant dense<0.000000e+00> : vector<8xf32>
    %306 = vector.multi_reduction <add>, %301, %cst_117 [1] : vector<8x32xf32> to vector<8xf32>
    %307 = vector.shape_cast %306 : vector<8xf32> to vector<8x1xf32>
    %cst_118 = arith.constant 3.200000e+01 : f32
    %308 = vector.broadcast %cst_118 : f32 to vector<8x1xf32>
    %309 = arith.divf %307, %308 : vector<8x1xf32>
    %310 = vector.broadcast %309 : vector<8x1xf32> to vector<8x32xf32>
    %311 = arith.subf %301, %310 : vector<8x32xf32>
    %312 = arith.mulf %311, %311 : vector<8x32xf32>
    %cst_119 = arith.constant dense<0.000000e+00> : vector<8xf32>
    %313 = vector.multi_reduction <add>, %312, %cst_119 [1] : vector<8x32xf32> to vector<8xf32>
    %314 = vector.shape_cast %313 : vector<8xf32> to vector<8x1xf32>
    %cst_120 = arith.constant 3.200000e+01 : f32
    %315 = vector.broadcast %cst_120 : f32 to vector<8x1xf32>
    %316 = arith.divf %314, %315 : vector<8x1xf32>
    %317 = vector.broadcast %309 : vector<8x1xf32> to vector<8x32xf32>
    %318 = arith.subf %301, %317 : vector<8x32xf32>
    %cst_121 = arith.constant 9.99999974E-6 : f32
    %319 = vector.broadcast %cst_121 : f32 to vector<8x1xf32>
    %320 = arith.addf %316, %319 : vector<8x1xf32>
    %321 = math.rsqrt %320 : vector<8x1xf32>
    %322 = vector.broadcast %321 : vector<8x1xf32> to vector<8x32xf32>
    %323 = arith.mulf %318, %322 : vector<8x32xf32>
    %324 = vector.broadcast %303 : vector<1x32xf32> to vector<8x32xf32>
    %325 = arith.mulf %323, %324 : vector<8x32xf32>
    %326 = vector.broadcast %305 : vector<1x32xf32> to vector<8x32xf32>
    %327 = arith.addf %325, %326 : vector<8x32xf32>
    %c1_122 = arith.constant 1 : index
    %c0_123 = arith.constant 0 : index
    %c0_124 = arith.constant 0 : index
    %328 = vector.load %arg5[%c1_122, %c0_123, %c0_124] : memref<2x32x96xf32, #tpu.memory_space<vmem>>, vector<1x32x96xf32>
    %329 = vector.shape_cast %328 : vector<1x32x96xf32> to vector<32x96xf32>
    %cst_125 = arith.constant dense<0.000000e+00> : vector<8x96xf32>
    %330 = tpu.matmul %327, %329, %cst_125 {dimension_numbers = #tpu.dot_dimension_numbers<[1], [0], [0], [1], [0, 0, 1, 1], [], []>} : vector<8x32xf32>, vector<32x96xf32>, vector<8x96xf32> -> vector<8x96xf32>
    %c1_126 = arith.constant 1 : index
    %c0_127 = arith.constant 0 : index
    %c0_128 = arith.constant 0 : index
    %331 = vector.load %arg6[%c1_126, %c0_127, %c0_128] : memref<2x1x96xf32, #tpu.memory_space<vmem>>, vector<1x1x96xf32>
    %332 = vector.shape_cast %331 : vector<1x1x96xf32> to vector<1x96xf32>
    %333 = vector.broadcast %332 : vector<1x96xf32> to vector<8x96xf32>
    %334 = arith.addf %330, %333 : vector<8x96xf32>
    %335 = vector.extract_strided_slice %334 {offsets = [0, 0], sizes = [8, 32], strides = [1, 1]} : vector<8x96xf32> to vector<8x32xf32>
    %336 = vector.extract_strided_slice %334 {offsets = [0, 32], sizes = [8, 32], strides = [1, 1]} : vector<8x96xf32> to vector<8x32xf32>
    %337 = tpu.transpose %336, [1, 0] : vector<8x32xf32> -> vector<32x8xf32>
    %338 = vector.extract_strided_slice %334 {offsets = [0, 64], sizes = [8, 32], strides = [1, 1]} : vector<8x96xf32> to vector<8x32xf32>
    %c1_129 = arith.constant 1 : index
    %c0_130 = arith.constant 0 : index
    %c0_131 = arith.constant 0 : index
    %339 = vector.load %arg7[%c1_129, %c0_130, %c0_131] : memref<2x32x32xf32, #tpu.memory_space<vmem>>, vector<1x32x32xf32>
    %340 = vector.shape_cast %339 : vector<1x32x32xf32> to vector<32x32xf32>
    %cst_132 = arith.constant 0.000000e+00 : f32
    %341 = vector.broadcast %cst_132 : f32 to vector<8x32xf32>
    %342 = vector.extract_strided_slice %335 {offsets = [0, 0], sizes = [8, 4], strides = [1, 1]} : vector<8x32xf32> to vector<8x4xf32>
    %343 = vector.extract_strided_slice %337 {offsets = [0, 0], sizes = [4, 8], strides = [1, 1]} : vector<32x8xf32> to vector<4x8xf32>
    %cst_133 = arith.constant dense<0.000000e+00> : vector<8x8xf32>
    %344 = tpu.matmul %342, %343, %cst_133 {dimension_numbers = #tpu.dot_dimension_numbers<[1], [0], [0], [1], [0, 0, 1, 1], [], []>} : vector<8x4xf32>, vector<4x8xf32>, vector<8x8xf32> -> vector<8x8xf32>
    %cst_134 = arith.constant 5.000000e-01 : f32
    %345 = vector.broadcast %cst_134 : f32 to vector<8x8xf32>
    %346 = arith.mulf %344, %345 : vector<8x8xf32>
    %347 = arith.addf %346, %8 : vector<8x8xf32>
    %cst_135 = arith.constant dense<0xFF800000> : vector<8xf32>
    %348 = vector.multi_reduction <maximumf>, %347, %cst_135 [1] : vector<8x8xf32> to vector<8xf32>
    %349 = vector.shape_cast %348 : vector<8xf32> to vector<8x1xf32>
    %350 = vector.broadcast %349 : vector<8x1xf32> to vector<8x8xf32>
    %351 = arith.subf %347, %350 : vector<8x8xf32>
    %352 = math.exp %351 : vector<8x8xf32>
    %cst_136 = arith.constant dense<0.000000e+00> : vector<8xf32>
    %353 = vector.multi_reduction <add>, %352, %cst_136 [1] : vector<8x8xf32> to vector<8xf32>
    %354 = vector.shape_cast %353 : vector<8xf32> to vector<8x1xf32>
    %355 = vector.broadcast %354 : vector<8x1xf32> to vector<8x8xf32>
    %356 = arith.divf %352, %355 : vector<8x8xf32>
    %357 = arith.mulf %356, %3 : vector<8x8xf32>
    %358 = vector.extract_strided_slice %338 {offsets = [0, 0], sizes = [8, 4], strides = [1, 1]} : vector<8x32xf32> to vector<8x4xf32>
    %cst_137 = arith.constant dense<0.000000e+00> : vector<8x4xf32>
    %359 = tpu.matmul %357, %358, %cst_137 {dimension_numbers = #tpu.dot_dimension_numbers<[1], [0], [0], [1], [0, 0, 1, 1], [], []>} : vector<8x8xf32>, vector<8x4xf32>, vector<8x4xf32> -> vector<8x4xf32>
    %360 = vector.extract_strided_slice %340 {offsets = [0, 0], sizes = [4, 32], strides = [1, 1]} : vector<32x32xf32> to vector<4x32xf32>
    %cst_138 = arith.constant dense<0.000000e+00> : vector<8x32xf32>
    %361 = tpu.matmul %359, %360, %cst_138 {dimension_numbers = #tpu.dot_dimension_numbers<[1], [0], [0], [1], [0, 0, 1, 1], [], []>} : vector<8x4xf32>, vector<4x32xf32>, vector<8x32xf32> -> vector<8x32xf32>
    %362 = arith.addf %341, %361 : vector<8x32xf32>
    %363 = vector.extract_strided_slice %335 {offsets = [0, 4], sizes = [8, 4], strides = [1, 1]} : vector<8x32xf32> to vector<8x4xf32>
    %364 = vector.extract_strided_slice %337 {offsets = [4, 0], sizes = [4, 8], strides = [1, 1]} : vector<32x8xf32> to vector<4x8xf32>
    %cst_139 = arith.constant dense<0.000000e+00> : vector<8x8xf32>
    %365 = tpu.matmul %363, %364, %cst_139 {dimension_numbers = #tpu.dot_dimension_numbers<[1], [0], [0], [1], [0, 0, 1, 1], [], []>} : vector<8x4xf32>, vector<4x8xf32>, vector<8x8xf32> -> vector<8x8xf32>
    %cst_140 = arith.constant 5.000000e-01 : f32
    %366 = vector.broadcast %cst_140 : f32 to vector<8x8xf32>
    %367 = arith.mulf %365, %366 : vector<8x8xf32>
    %368 = arith.addf %367, %8 : vector<8x8xf32>
    %cst_141 = arith.constant dense<0xFF800000> : vector<8xf32>
    %369 = vector.multi_reduction <maximumf>, %368, %cst_141 [1] : vector<8x8xf32> to vector<8xf32>
    %370 = vector.shape_cast %369 : vector<8xf32> to vector<8x1xf32>
    %371 = vector.broadcast %370 : vector<8x1xf32> to vector<8x8xf32>
    %372 = arith.subf %368, %371 : vector<8x8xf32>
    %373 = math.exp %372 : vector<8x8xf32>
    %cst_142 = arith.constant dense<0.000000e+00> : vector<8xf32>
    %374 = vector.multi_reduction <add>, %373, %cst_142 [1] : vector<8x8xf32> to vector<8xf32>
    %375 = vector.shape_cast %374 : vector<8xf32> to vector<8x1xf32>
    %376 = vector.broadcast %375 : vector<8x1xf32> to vector<8x8xf32>
    %377 = arith.divf %373, %376 : vector<8x8xf32>
    %378 = arith.mulf %377, %3 : vector<8x8xf32>
    %379 = vector.extract_strided_slice %338 {offsets = [0, 4], sizes = [8, 4], strides = [1, 1]} : vector<8x32xf32> to vector<8x4xf32>
    %cst_143 = arith.constant dense<0.000000e+00> : vector<8x4xf32>
    %380 = tpu.matmul %378, %379, %cst_143 {dimension_numbers = #tpu.dot_dimension_numbers<[1], [0], [0], [1], [0, 0, 1, 1], [], []>} : vector<8x8xf32>, vector<8x4xf32>, vector<8x4xf32> -> vector<8x4xf32>
    %381 = vector.extract_strided_slice %340 {offsets = [4, 0], sizes = [4, 32], strides = [1, 1]} : vector<32x32xf32> to vector<4x32xf32>
    %cst_144 = arith.constant dense<0.000000e+00> : vector<8x32xf32>
    %382 = tpu.matmul %380, %381, %cst_144 {dimension_numbers = #tpu.dot_dimension_numbers<[1], [0], [0], [1], [0, 0, 1, 1], [], []>} : vector<8x4xf32>, vector<4x32xf32>, vector<8x32xf32> -> vector<8x32xf32>
    %383 = arith.addf %362, %382 : vector<8x32xf32>
    %384 = vector.extract_strided_slice %335 {offsets = [0, 8], sizes = [8, 4], strides = [1, 1]} : vector<8x32xf32> to vector<8x4xf32>
    %385 = vector.extract_strided_slice %337 {offsets = [8, 0], sizes = [4, 8], strides = [1, 1]} : vector<32x8xf32> to vector<4x8xf32>
    %cst_145 = arith.constant dense<0.000000e+00> : vector<8x8xf32>
    %386 = tpu.matmul %384, %385, %cst_145 {dimension_numbers = #tpu.dot_dimension_numbers<[1], [0], [0], [1], [0, 0, 1, 1], [], []>} : vector<8x4xf32>, vector<4x8xf32>, vector<8x8xf32> -> vector<8x8xf32>
    %cst_146 = arith.constant 5.000000e-01 : f32
    %387 = vector.broadcast %cst_146 : f32 to vector<8x8xf32>
    %388 = arith.mulf %386, %387 : vector<8x8xf32>
    %389 = arith.addf %388, %8 : vector<8x8xf32>
    %cst_147 = arith.constant dense<0xFF800000> : vector<8xf32>
    %390 = vector.multi_reduction <maximumf>, %389, %cst_147 [1] : vector<8x8xf32> to vector<8xf32>
    %391 = vector.shape_cast %390 : vector<8xf32> to vector<8x1xf32>
    %392 = vector.broadcast %391 : vector<8x1xf32> to vector<8x8xf32>
    %393 = arith.subf %389, %392 : vector<8x8xf32>
    %394 = math.exp %393 : vector<8x8xf32>
    %cst_148 = arith.constant dense<0.000000e+00> : vector<8xf32>
    %395 = vector.multi_reduction <add>, %394, %cst_148 [1] : vector<8x8xf32> to vector<8xf32>
    %396 = vector.shape_cast %395 : vector<8xf32> to vector<8x1xf32>
    %397 = vector.broadcast %396 : vector<8x1xf32> to vector<8x8xf32>
    %398 = arith.divf %394, %397 : vector<8x8xf32>
    %399 = arith.mulf %398, %3 : vector<8x8xf32>
    %400 = vector.extract_strided_slice %338 {offsets = [0, 8], sizes = [8, 4], strides = [1, 1]} : vector<8x32xf32> to vector<8x4xf32>
    %cst_149 = arith.constant dense<0.000000e+00> : vector<8x4xf32>
    %401 = tpu.matmul %399, %400, %cst_149 {dimension_numbers = #tpu.dot_dimension_numbers<[1], [0], [0], [1], [0, 0, 1, 1], [], []>} : vector<8x8xf32>, vector<8x4xf32>, vector<8x4xf32> -> vector<8x4xf32>
    %402 = vector.extract_strided_slice %340 {offsets = [8, 0], sizes = [4, 32], strides = [1, 1]} : vector<32x32xf32> to vector<4x32xf32>
    %cst_150 = arith.constant dense<0.000000e+00> : vector<8x32xf32>
    %403 = tpu.matmul %401, %402, %cst_150 {dimension_numbers = #tpu.dot_dimension_numbers<[1], [0], [0], [1], [0, 0, 1, 1], [], []>} : vector<8x4xf32>, vector<4x32xf32>, vector<8x32xf32> -> vector<8x32xf32>
    %404 = arith.addf %383, %403 : vector<8x32xf32>
    %405 = vector.extract_strided_slice %335 {offsets = [0, 12], sizes = [8, 4], strides = [1, 1]} : vector<8x32xf32> to vector<8x4xf32>
    %406 = vector.extract_strided_slice %337 {offsets = [12, 0], sizes = [4, 8], strides = [1, 1]} : vector<32x8xf32> to vector<4x8xf32>
    %cst_151 = arith.constant dense<0.000000e+00> : vector<8x8xf32>
    %407 = tpu.matmul %405, %406, %cst_151 {dimension_numbers = #tpu.dot_dimension_numbers<[1], [0], [0], [1], [0, 0, 1, 1], [], []>} : vector<8x4xf32>, vector<4x8xf32>, vector<8x8xf32> -> vector<8x8xf32>
    %cst_152 = arith.constant 5.000000e-01 : f32
    %408 = vector.broadcast %cst_152 : f32 to vector<8x8xf32>
    %409 = arith.mulf %407, %408 : vector<8x8xf32>
    %410 = arith.addf %409, %8 : vector<8x8xf32>
    %cst_153 = arith.constant dense<0xFF800000> : vector<8xf32>
    %411 = vector.multi_reduction <maximumf>, %410, %cst_153 [1] : vector<8x8xf32> to vector<8xf32>
    %412 = vector.shape_cast %411 : vector<8xf32> to vector<8x1xf32>
    %413 = vector.broadcast %412 : vector<8x1xf32> to vector<8x8xf32>
    %414 = arith.subf %410, %413 : vector<8x8xf32>
    %415 = math.exp %414 : vector<8x8xf32>
    %cst_154 = arith.constant dense<0.000000e+00> : vector<8xf32>
    %416 = vector.multi_reduction <add>, %415, %cst_154 [1] : vector<8x8xf32> to vector<8xf32>
    %417 = vector.shape_cast %416 : vector<8xf32> to vector<8x1xf32>
    %418 = vector.broadcast %417 : vector<8x1xf32> to vector<8x8xf32>
    %419 = arith.divf %415, %418 : vector<8x8xf32>
    %420 = arith.mulf %419, %3 : vector<8x8xf32>
    %421 = vector.extract_strided_slice %338 {offsets = [0, 12], sizes = [8, 4], strides = [1, 1]} : vector<8x32xf32> to vector<8x4xf32>
    %cst_155 = arith.constant dense<0.000000e+00> : vector<8x4xf32>
    %422 = tpu.matmul %420, %421, %cst_155 {dimension_numbers = #tpu.dot_dimension_numbers<[1], [0], [0], [1], [0, 0, 1, 1], [], []>} : vector<8x8xf32>, vector<8x4xf32>, vector<8x4xf32> -> vector<8x4xf32>
    %423 = vector.extract_strided_slice %340 {offsets = [12, 0], sizes = [4, 32], strides = [1, 1]} : vector<32x32xf32> to vector<4x32xf32>
    %cst_156 = arith.constant dense<0.000000e+00> : vector<8x32xf32>
    %424 = tpu.matmul %422, %423, %cst_156 {dimension_numbers = #tpu.dot_dimension_numbers<[1], [0], [0], [1], [0, 0, 1, 1], [], []>} : vector<8x4xf32>, vector<4x32xf32>, vector<8x32xf32> -> vector<8x32xf32>
    %425 = arith.addf %404, %424 : vector<8x32xf32>
    %426 = vector.extract_strided_slice %335 {offsets = [0, 16], sizes = [8, 4], strides = [1, 1]} : vector<8x32xf32> to vector<8x4xf32>
    %427 = vector.extract_strided_slice %337 {offsets = [16, 0], sizes = [4, 8], strides = [1, 1]} : vector<32x8xf32> to vector<4x8xf32>
    %cst_157 = arith.constant dense<0.000000e+00> : vector<8x8xf32>
    %428 = tpu.matmul %426, %427, %cst_157 {dimension_numbers = #tpu.dot_dimension_numbers<[1], [0], [0], [1], [0, 0, 1, 1], [], []>} : vector<8x4xf32>, vector<4x8xf32>, vector<8x8xf32> -> vector<8x8xf32>
    %cst_158 = arith.constant 5.000000e-01 : f32
    %429 = vector.broadcast %cst_158 : f32 to vector<8x8xf32>
    %430 = arith.mulf %428, %429 : vector<8x8xf32>
    %431 = arith.addf %430, %8 : vector<8x8xf32>
    %cst_159 = arith.constant dense<0xFF800000> : vector<8xf32>
    %432 = vector.multi_reduction <maximumf>, %431, %cst_159 [1] : vector<8x8xf32> to vector<8xf32>
    %433 = vector.shape_cast %432 : vector<8xf32> to vector<8x1xf32>
    %434 = vector.broadcast %433 : vector<8x1xf32> to vector<8x8xf32>
    %435 = arith.subf %431, %434 : vector<8x8xf32>
    %436 = math.exp %435 : vector<8x8xf32>
    %cst_160 = arith.constant dense<0.000000e+00> : vector<8xf32>
    %437 = vector.multi_reduction <add>, %436, %cst_160 [1] : vector<8x8xf32> to vector<8xf32>
    %438 = vector.shape_cast %437 : vector<8xf32> to vector<8x1xf32>
    %439 = vector.broadcast %438 : vector<8x1xf32> to vector<8x8xf32>
    %440 = arith.divf %436, %439 : vector<8x8xf32>
    %441 = arith.mulf %440, %3 : vector<8x8xf32>
    %442 = vector.extract_strided_slice %338 {offsets = [0, 16], sizes = [8, 4], strides = [1, 1]} : vector<8x32xf32> to vector<8x4xf32>
    %cst_161 = arith.constant dense<0.000000e+00> : vector<8x4xf32>
    %443 = tpu.matmul %441, %442, %cst_161 {dimension_numbers = #tpu.dot_dimension_numbers<[1], [0], [0], [1], [0, 0, 1, 1], [], []>} : vector<8x8xf32>, vector<8x4xf32>, vector<8x4xf32> -> vector<8x4xf32>
    %444 = vector.extract_strided_slice %340 {offsets = [16, 0], sizes = [4, 32], strides = [1, 1]} : vector<32x32xf32> to vector<4x32xf32>
    %cst_162 = arith.constant dense<0.000000e+00> : vector<8x32xf32>
    %445 = tpu.matmul %443, %444, %cst_162 {dimension_numbers = #tpu.dot_dimension_numbers<[1], [0], [0], [1], [0, 0, 1, 1], [], []>} : vector<8x4xf32>, vector<4x32xf32>, vector<8x32xf32> -> vector<8x32xf32>
    %446 = arith.addf %425, %445 : vector<8x32xf32>
    %447 = vector.extract_strided_slice %335 {offsets = [0, 20], sizes = [8, 4], strides = [1, 1]} : vector<8x32xf32> to vector<8x4xf32>
    %448 = vector.extract_strided_slice %337 {offsets = [20, 0], sizes = [4, 8], strides = [1, 1]} : vector<32x8xf32> to vector<4x8xf32>
    %cst_163 = arith.constant dense<0.000000e+00> : vector<8x8xf32>
    %449 = tpu.matmul %447, %448, %cst_163 {dimension_numbers = #tpu.dot_dimension_numbers<[1], [0], [0], [1], [0, 0, 1, 1], [], []>} : vector<8x4xf32>, vector<4x8xf32>, vector<8x8xf32> -> vector<8x8xf32>
    %cst_164 = arith.constant 5.000000e-01 : f32
    %450 = vector.broadcast %cst_164 : f32 to vector<8x8xf32>
    %451 = arith.mulf %449, %450 : vector<8x8xf32>
    %452 = arith.addf %451, %8 : vector<8x8xf32>
    %cst_165 = arith.constant dense<0xFF800000> : vector<8xf32>
    %453 = vector.multi_reduction <maximumf>, %452, %cst_165 [1] : vector<8x8xf32> to vector<8xf32>
    %454 = vector.shape_cast %453 : vector<8xf32> to vector<8x1xf32>
    %455 = vector.broadcast %454 : vector<8x1xf32> to vector<8x8xf32>
    %456 = arith.subf %452, %455 : vector<8x8xf32>
    %457 = math.exp %456 : vector<8x8xf32>
    %cst_166 = arith.constant dense<0.000000e+00> : vector<8xf32>
    %458 = vector.multi_reduction <add>, %457, %cst_166 [1] : vector<8x8xf32> to vector<8xf32>
    %459 = vector.shape_cast %458 : vector<8xf32> to vector<8x1xf32>
    %460 = vector.broadcast %459 : vector<8x1xf32> to vector<8x8xf32>
    %461 = arith.divf %457, %460 : vector<8x8xf32>
    %462 = arith.mulf %461, %3 : vector<8x8xf32>
    %463 = vector.extract_strided_slice %338 {offsets = [0, 20], sizes = [8, 4], strides = [1, 1]} : vector<8x32xf32> to vector<8x4xf32>
    %cst_167 = arith.constant dense<0.000000e+00> : vector<8x4xf32>
    %464 = tpu.matmul %462, %463, %cst_167 {dimension_numbers = #tpu.dot_dimension_numbers<[1], [0], [0], [1], [0, 0, 1, 1], [], []>} : vector<8x8xf32>, vector<8x4xf32>, vector<8x4xf32> -> vector<8x4xf32>
    %465 = vector.extract_strided_slice %340 {offsets = [20, 0], sizes = [4, 32], strides = [1, 1]} : vector<32x32xf32> to vector<4x32xf32>
    %cst_168 = arith.constant dense<0.000000e+00> : vector<8x32xf32>
    %466 = tpu.matmul %464, %465, %cst_168 {dimension_numbers = #tpu.dot_dimension_numbers<[1], [0], [0], [1], [0, 0, 1, 1], [], []>} : vector<8x4xf32>, vector<4x32xf32>, vector<8x32xf32> -> vector<8x32xf32>
    %467 = arith.addf %446, %466 : vector<8x32xf32>
    %468 = vector.extract_strided_slice %335 {offsets = [0, 24], sizes = [8, 4], strides = [1, 1]} : vector<8x32xf32> to vector<8x4xf32>
    %469 = vector.extract_strided_slice %337 {offsets = [24, 0], sizes = [4, 8], strides = [1, 1]} : vector<32x8xf32> to vector<4x8xf32>
    %cst_169 = arith.constant dense<0.000000e+00> : vector<8x8xf32>
    %470 = tpu.matmul %468, %469, %cst_169 {dimension_numbers = #tpu.dot_dimension_numbers<[1], [0], [0], [1], [0, 0, 1, 1], [], []>} : vector<8x4xf32>, vector<4x8xf32>, vector<8x8xf32> -> vector<8x8xf32>
    %cst_170 = arith.constant 5.000000e-01 : f32
    %471 = vector.broadcast %cst_170 : f32 to vector<8x8xf32>
    %472 = arith.mulf %470, %471 : vector<8x8xf32>
    %473 = arith.addf %472, %8 : vector<8x8xf32>
    %cst_171 = arith.constant dense<0xFF800000> : vector<8xf32>
    %474 = vector.multi_reduction <maximumf>, %473, %cst_171 [1] : vector<8x8xf32> to vector<8xf32>
    %475 = vector.shape_cast %474 : vector<8xf32> to vector<8x1xf32>
    %476 = vector.broadcast %475 : vector<8x1xf32> to vector<8x8xf32>
    %477 = arith.subf %473, %476 : vector<8x8xf32>
    %478 = math.exp %477 : vector<8x8xf32>
    %cst_172 = arith.constant dense<0.000000e+00> : vector<8xf32>
    %479 = vector.multi_reduction <add>, %478, %cst_172 [1] : vector<8x8xf32> to vector<8xf32>
    %480 = vector.shape_cast %479 : vector<8xf32> to vector<8x1xf32>
    %481 = vector.broadcast %480 : vector<8x1xf32> to vector<8x8xf32>
    %482 = arith.divf %478, %481 : vector<8x8xf32>
    %483 = arith.mulf %482, %3 : vector<8x8xf32>
    %484 = vector.extract_strided_slice %338 {offsets = [0, 24], sizes = [8, 4], strides = [1, 1]} : vector<8x32xf32> to vector<8x4xf32>
    %cst_173 = arith.constant dense<0.000000e+00> : vector<8x4xf32>
    %485 = tpu.matmul %483, %484, %cst_173 {dimension_numbers = #tpu.dot_dimension_numbers<[1], [0], [0], [1], [0, 0, 1, 1], [], []>} : vector<8x8xf32>, vector<8x4xf32>, vector<8x4xf32> -> vector<8x4xf32>
    %486 = vector.extract_strided_slice %340 {offsets = [24, 0], sizes = [4, 32], strides = [1, 1]} : vector<32x32xf32> to vector<4x32xf32>
    %cst_174 = arith.constant dense<0.000000e+00> : vector<8x32xf32>
    %487 = tpu.matmul %485, %486, %cst_174 {dimension_numbers = #tpu.dot_dimension_numbers<[1], [0], [0], [1], [0, 0, 1, 1], [], []>} : vector<8x4xf32>, vector<4x32xf32>, vector<8x32xf32> -> vector<8x32xf32>
    %488 = arith.addf %467, %487 : vector<8x32xf32>
    %489 = vector.extract_strided_slice %335 {offsets = [0, 28], sizes = [8, 4], strides = [1, 1]} : vector<8x32xf32> to vector<8x4xf32>
    %490 = vector.extract_strided_slice %337 {offsets = [28, 0], sizes = [4, 8], strides = [1, 1]} : vector<32x8xf32> to vector<4x8xf32>
    %cst_175 = arith.constant dense<0.000000e+00> : vector<8x8xf32>
    %491 = tpu.matmul %489, %490, %cst_175 {dimension_numbers = #tpu.dot_dimension_numbers<[1], [0], [0], [1], [0, 0, 1, 1], [], []>} : vector<8x4xf32>, vector<4x8xf32>, vector<8x8xf32> -> vector<8x8xf32>
    %cst_176 = arith.constant 5.000000e-01 : f32
    %492 = vector.broadcast %cst_176 : f32 to vector<8x8xf32>
    %493 = arith.mulf %491, %492 : vector<8x8xf32>
    %494 = arith.addf %493, %8 : vector<8x8xf32>
    %cst_177 = arith.constant dense<0xFF800000> : vector<8xf32>
    %495 = vector.multi_reduction <maximumf>, %494, %cst_177 [1] : vector<8x8xf32> to vector<8xf32>
    %496 = vector.shape_cast %495 : vector<8xf32> to vector<8x1xf32>
    %497 = vector.broadcast %496 : vector<8x1xf32> to vector<8x8xf32>
    %498 = arith.subf %494, %497 : vector<8x8xf32>
    %499 = math.exp %498 : vector<8x8xf32>
    %cst_178 = arith.constant dense<0.000000e+00> : vector<8xf32>
    %500 = vector.multi_reduction <add>, %499, %cst_178 [1] : vector<8x8xf32> to vector<8xf32>
    %501 = vector.shape_cast %500 : vector<8xf32> to vector<8x1xf32>
    %502 = vector.broadcast %501 : vector<8x1xf32> to vector<8x8xf32>
    %503 = arith.divf %499, %502 : vector<8x8xf32>
    %504 = arith.mulf %503, %3 : vector<8x8xf32>
    %505 = vector.extract_strided_slice %338 {offsets = [0, 28], sizes = [8, 4], strides = [1, 1]} : vector<8x32xf32> to vector<8x4xf32>
    %cst_179 = arith.constant dense<0.000000e+00> : vector<8x4xf32>
    %506 = tpu.matmul %504, %505, %cst_179 {dimension_numbers = #tpu.dot_dimension_numbers<[1], [0], [0], [1], [0, 0, 1, 1], [], []>} : vector<8x8xf32>, vector<8x4xf32>, vector<8x4xf32> -> vector<8x4xf32>
    %507 = vector.extract_strided_slice %340 {offsets = [28, 0], sizes = [4, 32], strides = [1, 1]} : vector<32x32xf32> to vector<4x32xf32>
    %cst_180 = arith.constant dense<0.000000e+00> : vector<8x32xf32>
    %508 = tpu.matmul %506, %507, %cst_180 {dimension_numbers = #tpu.dot_dimension_numbers<[1], [0], [0], [1], [0, 0, 1, 1], [], []>} : vector<8x4xf32>, vector<4x32xf32>, vector<8x32xf32> -> vector<8x32xf32>
    %509 = arith.addf %488, %508 : vector<8x32xf32>
    %c1_181 = arith.constant 1 : index
    %c0_182 = arith.constant 0 : index
    %c0_183 = arith.constant 0 : index
    %510 = vector.load %arg8[%c1_181, %c0_182, %c0_183] : memref<2x1x32xf32, #tpu.memory_space<vmem>>, vector<1x1x32xf32>
    %511 = vector.shape_cast %510 : vector<1x1x32xf32> to vector<1x32xf32>
    %512 = vector.broadcast %511 : vector<1x32xf32> to vector<8x32xf32>
    %513 = arith.addf %509, %512 : vector<8x32xf32>
    %514 = arith.addf %513, %513 : vector<8x32xf32>
    %c1_184 = arith.constant 1 : index
    %c0_185 = arith.constant 0 : index
    %c0_186 = arith.constant 0 : index
    %515 = vector.load %arg9[%c1_184, %c0_185, %c0_186] : memref<2x1x32xf32, #tpu.memory_space<vmem>>, vector<1x1x32xf32>
    %516 = vector.shape_cast %515 : vector<1x1x32xf32> to vector<1x32xf32>
    %c1_187 = arith.constant 1 : index
    %c0_188 = arith.constant 0 : index
    %c0_189 = arith.constant 0 : index
    %517 = vector.load %arg10[%c1_187, %c0_188, %c0_189] : memref<2x1x32xf32, #tpu.memory_space<vmem>>, vector<1x1x32xf32>
    %518 = vector.shape_cast %517 : vector<1x1x32xf32> to vector<1x32xf32>
    %cst_190 = arith.constant dense<0.000000e+00> : vector<8xf32>
    %519 = vector.multi_reduction <add>, %514, %cst_190 [1] : vector<8x32xf32> to vector<8xf32>
    %520 = vector.shape_cast %519 : vector<8xf32> to vector<8x1xf32>
    %cst_191 = arith.constant 3.200000e+01 : f32
    %521 = vector.broadcast %cst_191 : f32 to vector<8x1xf32>
    %522 = arith.divf %520, %521 : vector<8x1xf32>
    %523 = vector.broadcast %522 : vector<8x1xf32> to vector<8x32xf32>
    %524 = arith.subf %514, %523 : vector<8x32xf32>
    %525 = arith.mulf %524, %524 : vector<8x32xf32>
    %cst_192 = arith.constant dense<0.000000e+00> : vector<8xf32>
    %526 = vector.multi_reduction <add>, %525, %cst_192 [1] : vector<8x32xf32> to vector<8xf32>
    %527 = vector.shape_cast %526 : vector<8xf32> to vector<8x1xf32>
    %cst_193 = arith.constant 3.200000e+01 : f32
    %528 = vector.broadcast %cst_193 : f32 to vector<8x1xf32>
    %529 = arith.divf %527, %528 : vector<8x1xf32>
    %530 = vector.broadcast %522 : vector<8x1xf32> to vector<8x32xf32>
    %531 = arith.subf %514, %530 : vector<8x32xf32>
    %cst_194 = arith.constant 9.99999974E-6 : f32
    %532 = vector.broadcast %cst_194 : f32 to vector<8x1xf32>
    %533 = arith.addf %529, %532 : vector<8x1xf32>
    %534 = math.rsqrt %533 : vector<8x1xf32>
    %535 = vector.broadcast %534 : vector<8x1xf32> to vector<8x32xf32>
    %536 = arith.mulf %531, %535 : vector<8x32xf32>
    %537 = vector.broadcast %516 : vector<1x32xf32> to vector<8x32xf32>
    %538 = arith.mulf %536, %537 : vector<8x32xf32>
    %539 = vector.broadcast %518 : vector<1x32xf32> to vector<8x32xf32>
    %540 = arith.addf %538, %539 : vector<8x32xf32>
    %c1_195 = arith.constant 1 : index
    %c0_196 = arith.constant 0 : index
    %c0_197 = arith.constant 0 : index
    %541 = vector.load %arg11[%c1_195, %c0_196, %c0_197] : memref<2x32x72xf32, #tpu.memory_space<vmem>>, vector<1x32x72xf32>
    %542 = vector.shape_cast %541 : vector<1x32x72xf32> to vector<32x72xf32>
    %cst_198 = arith.constant dense<0.000000e+00> : vector<8x72xf32>
    %543 = tpu.matmul %540, %542, %cst_198 {dimension_numbers = #tpu.dot_dimension_numbers<[1], [0], [0], [1], [0, 0, 1, 1], [], []>} : vector<8x32xf32>, vector<32x72xf32>, vector<8x72xf32> -> vector<8x72xf32>
    %c1_199 = arith.constant 1 : index
    %c0_200 = arith.constant 0 : index
    %c0_201 = arith.constant 0 : index
    %544 = vector.load %arg12[%c1_199, %c0_200, %c0_201] : memref<2x1x72xf32, #tpu.memory_space<vmem>>, vector<1x1x72xf32>
    %545 = vector.shape_cast %544 : vector<1x1x72xf32> to vector<1x72xf32>
    %546 = vector.broadcast %545 : vector<1x72xf32> to vector<8x72xf32>
    %547 = arith.addf %543, %546 : vector<8x72xf32>
    %548 = vector.extract_strided_slice %547 {offsets = [0, 0], sizes = [8, 64], strides = [1, 1]} : vector<8x72xf32> to vector<8x64xf32>
    %cst_202 = arith.constant 0.000000e+00 : f32
    %549 = vector.broadcast %cst_202 : f32 to vector<8x64xf32>
    %550 = arith.maximumf %548, %549 : vector<8x64xf32>
    %551 = vector.extract_strided_slice %547 {offsets = [0, 64], sizes = [8, 8], strides = [1, 1]} : vector<8x72xf32> to vector<8x8xf32>
    %cst_203 = arith.constant dense<0xFF800000> : vector<8xf32>
    %552 = vector.multi_reduction <maximumf>, %551, %cst_203 [1] : vector<8x8xf32> to vector<8xf32>
    %553 = vector.shape_cast %552 : vector<8xf32> to vector<8x1xf32>
    %554 = vector.broadcast %553 : vector<8x1xf32> to vector<8x8xf32>
    %555 = arith.subf %551, %554 : vector<8x8xf32>
    %556 = math.exp %555 : vector<8x8xf32>
    %cst_204 = arith.constant dense<0.000000e+00> : vector<8xf32>
    %557 = vector.multi_reduction <add>, %556, %cst_204 [1] : vector<8x8xf32> to vector<8xf32>
    %558 = vector.shape_cast %557 : vector<8xf32> to vector<8x1xf32>
    %559 = vector.broadcast %558 : vector<8x1xf32> to vector<8x8xf32>
    %560 = arith.divf %556, %559 : vector<8x8xf32>
    %cst_205 = arith.constant dense<0xFF800000> : vector<8xf32>
    %561 = vector.multi_reduction <maximumf>, %560, %cst_205 [1] : vector<8x8xf32> to vector<8xf32>
    %562 = vector.shape_cast %561 : vector<8xf32> to vector<8x1xf32>
    %563 = tpu.iota {dimensions = array<i32: 1>} : vector<8x8xi32>
    %564 = vector.broadcast %562 : vector<8x1xf32> to vector<8x8xf32>
    %565 = arith.cmpf oge, %560, %564 : vector<8x8xf32>
    %c8_i32_206 = arith.constant 8 : i32
    %566 = vector.broadcast %c8_i32_206 : i32 to vector<8x8xi32>
    %567 = arith.select %565, %563, %566 : vector<8x8xi1>, vector<8x8xi32>
    %cst_207 = arith.constant dense<2147483647> : vector<8xi32>
    %568 = vector.multi_reduction <minsi>, %567, %cst_207 [1] : vector<8x8xi32> to vector<8xi32>
    %569 = vector.shape_cast %568 : vector<8xi32> to vector<8x1xi32>
    %570 = vector.broadcast %569 : vector<8x1xi32> to vector<8x8xi32>
    %571 = arith.cmpi eq, %563, %570 : vector<8x8xi32>
    %572 = arith.extui %571 : vector<8x8xi1> to vector<8x8xi32>
    %573 = arith.sitofp %572 : vector<8x8xi32> to vector<8x8xf32>
    %cst_208 = arith.constant dense<0.000000e+00> : vector<8xf32>
    %574 = vector.multi_reduction <add>, %573, %cst_208 [0] : vector<8x8xf32> to vector<8xf32>
    %575 = vector.shape_cast %574 : vector<8xf32> to vector<1x8xf32>
    %cst_209 = arith.constant dense<0.000000e+00> : vector<8xf32>
    %576 = vector.multi_reduction <add>, %560, %cst_209 [0] : vector<8x8xf32> to vector<8xf32>
    %577 = vector.shape_cast %576 : vector<8xf32> to vector<1x8xf32>
    %c0_210 = arith.constant 0 : index
    %c0_211 = arith.constant 0 : index
    %578 = vector.load %arg13[%c0_210, %c0_211] : memref<64x32xf32, #tpu.memory_space<vmem>>, vector<64x32xf32>
    %cst_212 = arith.constant dense<0.000000e+00> : vector<8x32xf32>
    %579 = tpu.matmul %550, %578, %cst_212 {dimension_numbers = #tpu.dot_dimension_numbers<[1], [0], [0], [1], [0, 0, 1, 1], [], []>} : vector<8x64xf32>, vector<64x32xf32>, vector<8x32xf32> -> vector<8x32xf32>
    %c0_213 = arith.constant 0 : index
    %c0_214 = arith.constant 0 : index
    %580 = vector.load %arg14[%c0_213, %c0_214] : memref<1x32xf32, #tpu.memory_space<vmem>>, vector<1x32xf32>
    %581 = vector.broadcast %580 : vector<1x32xf32> to vector<8x32xf32>
    %582 = arith.addf %579, %581 : vector<8x32xf32>
    %cst_215 = arith.constant dense<0xFF800000> : vector<8xf32>
    %583 = vector.multi_reduction <maximumf>, %582, %cst_215 [1] : vector<8x32xf32> to vector<8xf32>
    %584 = vector.shape_cast %583 : vector<8xf32> to vector<8x1xf32>
    %585 = vector.broadcast %584 : vector<8x1xf32> to vector<8x32xf32>
    %586 = arith.subf %582, %585 : vector<8x32xf32>
    %587 = math.exp %586 : vector<8x32xf32>
    %cst_216 = arith.constant dense<0.000000e+00> : vector<8xf32>
    %588 = vector.multi_reduction <add>, %587, %cst_216 [1] : vector<8x32xf32> to vector<8xf32>
    %589 = vector.shape_cast %588 : vector<8xf32> to vector<8x1xf32>
    %590 = vector.broadcast %589 : vector<8x1xf32> to vector<8x32xf32>
    %591 = arith.divf %587, %590 : vector<8x32xf32>
    %592 = vector.broadcast %562 : vector<8x1xf32> to vector<8x32xf32>
    %593 = arith.mulf %591, %592 : vector<8x32xf32>
    %594 = arith.addf %540, %593 : vector<8x32xf32>
    %595 = tpu.concatenate %282, %575 in 0 : vector<1x8xf32>, vector<1x8xf32> -> vector<2x8xf32>
    %c0_217 = arith.constant 0 : index
    %c0_218 = arith.constant 0 : index
    %c0_219 = arith.constant 0 : index
    %596 = vector.load %arg18[%c0_217, %c0_218, %c0_219] : memref<1x2x8xf32, #tpu.memory_space<vmem>>, vector<1x2x8xf32>
    %597 = vector.shape_cast %596 : vector<1x2x8xf32> to vector<2x8xf32>
    %598 = vector.shape_cast %595 : vector<2x8xf32> to vector<1x2x8xf32>
    tpu.vector_store %arg18[%c0_217, %c0_218, %c0_219], %598 {strides = array<i32>} : memref<1x2x8xf32, #tpu.memory_space<vmem>>, vector<1x2x8xf32>,
    %599 = tpu.concatenate %284, %577 in 0 : vector<1x8xf32>, vector<1x8xf32> -> vector<2x8xf32>
    %c0_220 = arith.constant 0 : index
    %c0_221 = arith.constant 0 : index
    %c0_222 = arith.constant 0 : index
    %600 = vector.load %arg19[%c0_220, %c0_221, %c0_222] : memref<1x2x8xf32, #tpu.memory_space<vmem>>, vector<1x2x8xf32>
    %601 = vector.shape_cast %600 : vector<1x2x8xf32> to vector<2x8xf32>
    %602 = vector.shape_cast %599 : vector<2x8xf32> to vector<1x2x8xf32>
    tpu.vector_store %arg19[%c0_220, %c0_221, %c0_222], %602 {strides = array<i32>} : memref<1x2x8xf32, #tpu.memory_space<vmem>>, vector<1x2x8xf32>,
    %603 = tpu.concatenate %269, %562 in 1 : vector<8x1xf32>, vector<8x1xf32> -> vector<8x2xf32>
    %604 = tpu.transpose %603, [1, 0] : vector<8x2xf32> -> vector<2x8xf32>
    %c0_223 = arith.constant 0 : index
    %c0_224 = arith.constant 0 : index
    %c0_225 = arith.constant 0 : index
    %605 = vector.load %arg20[%c0_223, %c0_224, %c0_225] : memref<1x2x8xf32, #tpu.memory_space<vmem>>, vector<1x2x8xf32>
    %606 = vector.shape_cast %605 : vector<1x2x8xf32> to vector<2x8xf32>
    %607 = vector.shape_cast %604 : vector<2x8xf32> to vector<1x2x8xf32>
    tpu.vector_store %arg20[%c0_223, %c0_224, %c0_225], %607 {strides = array<i32>} : memref<1x2x8xf32, #tpu.memory_space<vmem>>, vector<1x2x8xf32>,
    %c0_226 = arith.constant 0 : index
    %c0_227 = arith.constant 0 : index
    %608 = vector.load %arg15[%c0_226, %c0_227] : memref<1x32xf32, #tpu.memory_space<vmem>>, vector<1x32xf32>
    %c0_228 = arith.constant 0 : index
    %c0_229 = arith.constant 0 : index
    %609 = vector.load %arg16[%c0_228, %c0_229] : memref<1x32xf32, #tpu.memory_space<vmem>>, vector<1x32xf32>
    %cst_230 = arith.constant dense<0.000000e+00> : vector<8xf32>
    %610 = vector.multi_reduction <add>, %594, %cst_230 [1] : vector<8x32xf32> to vector<8xf32>
    %611 = vector.shape_cast %610 : vector<8xf32> to vector<8x1xf32>
    %cst_231 = arith.constant 3.200000e+01 : f32
    %612 = vector.broadcast %cst_231 : f32 to vector<8x1xf32>
    %613 = arith.divf %611, %612 : vector<8x1xf32>
    %614 = vector.broadcast %613 : vector<8x1xf32> to vector<8x32xf32>
    %615 = arith.subf %594, %614 : vector<8x32xf32>
    %616 = arith.mulf %615, %615 : vector<8x32xf32>
    %cst_232 = arith.constant dense<0.000000e+00> : vector<8xf32>
    %617 = vector.multi_reduction <add>, %616, %cst_232 [1] : vector<8x32xf32> to vector<8xf32>
    %618 = vector.shape_cast %617 : vector<8xf32> to vector<8x1xf32>
    %cst_233 = arith.constant 3.200000e+01 : f32
    %619 = vector.broadcast %cst_233 : f32 to vector<8x1xf32>
    %620 = arith.divf %618, %619 : vector<8x1xf32>
    %621 = vector.broadcast %613 : vector<8x1xf32> to vector<8x32xf32>
    %622 = arith.subf %594, %621 : vector<8x32xf32>
    %cst_234 = arith.constant 9.99999974E-6 : f32
    %623 = vector.broadcast %cst_234 : f32 to vector<8x1xf32>
    %624 = arith.addf %620, %623 : vector<8x1xf32>
    %625 = math.rsqrt %624 : vector<8x1xf32>
    %626 = vector.broadcast %625 : vector<8x1xf32> to vector<8x32xf32>
    %627 = arith.mulf %622, %626 : vector<8x32xf32>
    %628 = vector.broadcast %608 : vector<1x32xf32> to vector<8x32xf32>
    %629 = arith.mulf %627, %628 : vector<8x32xf32>
    %630 = vector.broadcast %609 : vector<1x32xf32> to vector<8x32xf32>
    %631 = arith.addf %629, %630 : vector<8x32xf32>
    %c0_235 = arith.constant 0 : index
    %c0_236 = arith.constant 0 : index
    %c0_237 = arith.constant 0 : index
    %632 = vector.load %arg17[%c0_235, %c0_236, %c0_237] : memref<1x8x32xf32, #tpu.memory_space<vmem>>, vector<1x8x32xf32>
    %633 = vector.shape_cast %632 : vector<1x8x32xf32> to vector<8x32xf32>
    %634 = vector.shape_cast %631 : vector<8x32xf32> to vector<1x8x32xf32>
    tpu.vector_store %arg17[%c0_235, %c0_236, %c0_237], %634 {strides = array<i32>} : memref<1x8x32xf32, #tpu.memory_space<vmem>>, vector<1x8x32xf32>,
    return
  }
  func.func @transform_0(%arg0: i32) -> (i32, i32, i32) {
    %c0_i32 = arith.constant 0 : i32
    %c0_i32_0 = arith.constant 0 : i32
    %c0_i32_1 = arith.constant 0 : i32
    return %arg0, %c0_i32, %c0_i32_0 : i32, i32, i32
  }
  func.func @transform_1(%arg0: i32) -> (i32, i32, i32) {
    %c0_i32 = arith.constant 0 : i32
    %c0_i32_0 = arith.constant 0 : i32
    %c0_i32_1 = arith.constant 0 : i32
    return %arg0, %c0_i32, %c0_i32_0 : i32, i32, i32
  }
  func.func @transform_2(%arg0: i32) -> (i32, i32, i32) {
    %c0_i32 = arith.constant 0 : i32
    %c0_i32_0 = arith.constant 0 : i32
    %c0_i32_1 = arith.constant 0 : i32
    %c0_i32_2 = arith.constant 0 : i32
    return %c0_i32, %c0_i32_0, %c0_i32_1 : i32, i32, i32
  }
  func.func @transform_3(%arg0: i32) -> (i32, i32, i32) {
    %c0_i32 = arith.constant 0 : i32
    %c0_i32_0 = arith.constant 0 : i32
    %c0_i32_1 = arith.constant 0 : i32
    %c0_i32_2 = arith.constant 0 : i32
    return %c0_i32, %c0_i32_0, %c0_i32_1 : i32, i32, i32
  }
  func.func @transform_4(%arg0: i32) -> (i32, i32, i32) {
    %c0_i32 = arith.constant 0 : i32
    %c0_i32_0 = arith.constant 0 : i32
    %c0_i32_1 = arith.constant 0 : i32
    %c0_i32_2 = arith.constant 0 : i32
    return %c0_i32, %c0_i32_0, %c0_i32_1 : i32, i32, i32
  }
  func.func @transform_5(%arg0: i32) -> (i32, i32, i32) {
    %c0_i32 = arith.constant 0 : i32
    %c0_i32_0 = arith.constant 0 : i32
    %c0_i32_1 = arith.constant 0 : i32
    %c0_i32_2 = arith.constant 0 : i32
    return %c0_i32, %c0_i32_0, %c0_i32_1 : i32, i32, i32
  }
  func.func @transform_6(%arg0: i32) -> (i32, i32, i32) {
    %c0_i32 = arith.constant 0 : i32
    %c0_i32_0 = arith.constant 0 : i32
    %c0_i32_1 = arith.constant 0 : i32
    %c0_i32_2 = arith.constant 0 : i32
    return %c0_i32, %c0_i32_0, %c0_i32_1 : i32, i32, i32
  }
  func.func @transform_7(%arg0: i32) -> (i32, i32, i32) {
    %c0_i32 = arith.constant 0 : i32
    %c0_i32_0 = arith.constant 0 : i32
    %c0_i32_1 = arith.constant 0 : i32
    %c0_i32_2 = arith.constant 0 : i32
    return %c0_i32, %c0_i32_0, %c0_i32_1 : i32, i32, i32
  }
  func.func @transform_8(%arg0: i32) -> (i32, i32, i32) {
    %c0_i32 = arith.constant 0 : i32
    %c0_i32_0 = arith.constant 0 : i32
    %c0_i32_1 = arith.constant 0 : i32
    %c0_i32_2 = arith.constant 0 : i32
    return %c0_i32, %c0_i32_0, %c0_i32_1 : i32, i32, i32
  }
  func.func @transform_9(%arg0: i32) -> (i32, i32, i32) {
    %c0_i32 = arith.constant 0 : i32
    %c0_i32_0 = arith.constant 0 : i32
    %c0_i32_1 = arith.constant 0 : i32
    %c0_i32_2 = arith.constant 0 : i32
    return %c0_i32, %c0_i32_0, %c0_i32_1 : i32, i32, i32
  }
  func.func @transform_10(%arg0: i32) -> (i32, i32, i32) {
    %c0_i32 = arith.constant 0 : i32
    %c0_i32_0 = arith.constant 0 : i32
    %c0_i32_1 = arith.constant 0 : i32
    %c0_i32_2 = arith.constant 0 : i32
    return %c0_i32, %c0_i32_0, %c0_i32_1 : i32, i32, i32
  }
  func.func @transform_11(%arg0: i32) -> (i32, i32, i32) {
    %c0_i32 = arith.constant 0 : i32
    %c0_i32_0 = arith.constant 0 : i32
    %c0_i32_1 = arith.constant 0 : i32
    %c0_i32_2 = arith.constant 0 : i32
    return %c0_i32, %c0_i32_0, %c0_i32_1 : i32, i32, i32
  }
  func.func @transform_12(%arg0: i32) -> (i32, i32) {
    %c0_i32 = arith.constant 0 : i32
    %c0_i32_0 = arith.constant 0 : i32
    %c0_i32_1 = arith.constant 0 : i32
    return %c0_i32, %c0_i32_0 : i32, i32
  }
  func.func @transform_13(%arg0: i32) -> (i32, i32) {
    %c0_i32 = arith.constant 0 : i32
    %c0_i32_0 = arith.constant 0 : i32
    %c0_i32_1 = arith.constant 0 : i32
    return %c0_i32, %c0_i32_0 : i32, i32
  }
  func.func @transform_14(%arg0: i32) -> (i32, i32) {
    %c0_i32 = arith.constant 0 : i32
    %c0_i32_0 = arith.constant 0 : i32
    %c0_i32_1 = arith.constant 0 : i32
    return %c0_i32, %c0_i32_0 : i32, i32
  }
  func.func @transform_15(%arg0: i32) -> (i32, i32) {
    %c0_i32 = arith.constant 0 : i32
    %c0_i32_0 = arith.constant 0 : i32
    %c0_i32_1 = arith.constant 0 : i32
    return %c0_i32, %c0_i32_0 : i32, i32
  }
  func.func @transform_16(%arg0: i32) -> (i32, i32, i32) {
    %c0_i32 = arith.constant 0 : i32
    %c0_i32_0 = arith.constant 0 : i32
    %c0_i32_1 = arith.constant 0 : i32
    return %arg0, %c0_i32, %c0_i32_0 : i32, i32, i32
  }
  func.func @transform_17(%arg0: i32) -> (i32, i32, i32) {
    %c0_i32 = arith.constant 0 : i32
    %c0_i32_0 = arith.constant 0 : i32
    %c0_i32_1 = arith.constant 0 : i32
    return %arg0, %c0_i32, %c0_i32_0 : i32, i32, i32
  }
  func.func @transform_18(%arg0: i32) -> (i32, i32, i32) {
    %c0_i32 = arith.constant 0 : i32
    %c0_i32_0 = arith.constant 0 : i32
    %c0_i32_1 = arith.constant 0 : i32
    return %arg0, %c0_i32, %c0_i32_0 : i32, i32, i32
  }
  func.func @transform_19(%arg0: i32) -> (i32, i32, i32) {
    %c0_i32 = arith.constant 0 : i32
    %c0_i32_0 = arith.constant 0 : i32
    %c0_i32_1 = arith.constant 0 : i32
    return %arg0, %c0_i32, %c0_i32_0 : i32, i32, i32
  }
}

</mosaic_0001>

<llo_original>
// kernel: _forward_jit.1
$region0: #{_forward_jit.1}
  #allocation0 [shape = 'u32[]', space=smem, size = 0x4, offset = 0x4, fixed_abs, tag = 'smem constant byte address 0x4 - core index']
  #allocation1 [shape = 'u32[72,128]{1,0:T(1,128)}', space=vmem, size = 0x9000, scoped, tag = 'internal scratch']
  %s0 = inlined_call_operand.vmem [shape: f32[2,8,32], index: 0, kind: input, shape index: {}]
  %s1 = inlined_call_operand.vmem [shape: f32[2,8,8], index: 1, kind: input, shape index: {}]
  %s2 = inlined_call_operand.vmem [shape: f32[2,1,32], index: 2, kind: input, shape index: {}]
  %s3 = inlined_call_operand.vmem [shape: f32[2,1,32], index: 3, kind: input, shape index: {}]
  %s4 = inlined_call_operand.vmem [shape: f32[2,32,96], index: 4, kind: input, shape index: {}]
  %s5 = inlined_call_operand.vmem [shape: f32[2,1,96], index: 5, kind: input, shape index: {}]
  %s6 = inlined_call_operand.vmem [shape: f32[2,32,32], index: 6, kind: input, shape index: {}]
  %s7 = inlined_call_operand.vmem [shape: f32[2,1,32], index: 7, kind: input, shape index: {}]
  %s8 = inlined_call_operand.vmem [shape: f32[2,1,32], index: 8, kind: input, shape index: {}]
  %s9 = inlined_call_operand.vmem [shape: f32[2,1,32], index: 9, kind: input, shape index: {}]
  %s10 = inlined_call_operand.vmem [shape: f32[2,32,72], index: 10, kind: input, shape index: {}]
  %s11 = inlined_call_operand.vmem [shape: f32[2,1,72], index: 11, kind: input, shape index: {}]
  %s12 = inlined_call_operand.vmem [shape: f32[64,32], index: 12, kind: input, shape index: {}]
  %s13 = inlined_call_operand.vmem [shape: f32[1,32], index: 13, kind: input, shape index: {}]
  %s14 = inlined_call_operand.vmem [shape: f32[1,32], index: 14, kind: input, shape index: {}]
  %s15 = inlined_call_operand.vmem [shape: f32[1,32], index: 15, kind: input, shape index: {}]
  %s16 = inlined_call_operand.hbm [shape: f32[2,8,32], index: 16, kind: output, shape index: {0}]
  %s17 = inlined_call_operand.vmem [shape: f32[2,2,8], index: 17, kind: output, shape index: {1}]
  %s18 = inlined_call_operand.vmem [shape: f32[2,2,8], index: 18, kind: output, shape index: {2}]
  %s19 = inlined_call_operand.vmem [shape: f32[2,2,8], index: 19, kind: output, shape index: {3}]
  %20 = xla_tuple %s16, %s17, %s18, %s19
  %s21 = sld [smem:[#allocation0]]
  $region121: #{_forward_jit.1} parent=0
    _
  %s23 = ssub.s32 1, %s21
  %s24 = scalar_select 0, %s23, %s21
  $region1: #{_forward_jit.1} parent=0
    #allocation2 [shape = 'u8[8192]{0}', space=vmem, size = 0x2000, scoped, tag = 'output window, operand 0']
    #allocation3 [shape = 's32[2]{0}', space=sflag, size = 0x8, scoped, tag = 'scoped memory for _forward_jit.1']
    %25 = vsyncpa [#allocation3], 0
    %s26 = scalar_lea.sflag [#allocation3], 1
    %27 = vsyncpa %s26, 0
    loop: start=0, step=1, limit=4
    $region2: #{_forward_jit.1} parent=1 // loop_pre_header
      _
    $region3: #{_forward_jit.1} parent=1 // loop_header
      %s29 = sphi 0, %s33
      %p30 = scmp.ge.s32.totalorder %s29, 4
      %s39 = sphi 0, %s41
      %s42 = sphi 0, %s39
      %s43 = sphi 0, %s42
      %s59 = sphi 0, %s43
      %s65 = sphi 0, %s67
      %s68 = sphi 0, %s65
      %s69 = sphi 0, %s68
      %s85 = sphi 0, %s69
      %s89 = sphi 0, %s89
      %s91 = sphi 0, %s89
      %s92 = sphi 0, %s91
      %s106 = sphi 0, %s92
      %s110 = sphi 0, %s110
      %s112 = sphi 0, %s110
      %s113 = sphi 0, %s112
      %s127 = sphi 0, %s113
      %s131 = sphi 0, %s131
      %s133 = sphi 0, %s131
      %s134 = sphi 0, %s133
      %s148 = sphi 0, %s134
      %s152 = sphi 0, %s152
      %s154 = sphi 0, %s152
      %s155 = sphi 0, %s154
      %s169 = sphi 0, %s155
      %s173 = sphi 0, %s173
      %s175 = sphi 0, %s173
      %s176 = sphi 0, %s175
      %s190 = sphi 0, %s176
      %s194 = sphi 0, %s194
      %s196 = sphi 0, %s194
      %s197 = sphi 0, %s196
      %s211 = sphi 0, %s197
      %s215 = sphi 0, %s215
      %s217 = sphi 0, %s215
      %s218 = sphi 0, %s217
      %s232 = sphi 0, %s218
      %s236 = sphi 0, %s236
      %s238 = sphi 0, %s236
      %s239 = sphi 0, %s238
      %s253 = sphi 0, %s239
      %s257 = sphi 0, %s257
      %s259 = sphi 0, %s257
      %s260 = sphi 0, %s259
      %s274 = sphi 0, %s260
      %s278 = sphi 0, %s278
      %s280 = sphi 0, %s278
      %s281 = sphi 0, %s280
      %s295 = sphi 0, %s281
      %s299 = sphi 0, %s299
      %s301 = sphi 0, %s299
      %s302 = sphi 0, %s301
      %s316 = sphi 0, %s302
      %s320 = sphi 0, %s320
      %s322 = sphi 0, %s320
      %s323 = sphi 0, %s322
      %s337 = sphi 0, %s323
      %s341 = sphi 0, %s341
      %s343 = sphi 0, %s341
      %s344 = sphi 0, %s343
      %s358 = sphi 0, %s344
      %s362 = sphi 0, %s362
      %s364 = sphi 0, %s362
      %s365 = sphi 0, %s364
      %s379 = sphi 0, %s365
      %s385 = sphi 0, %s387
      %s388 = sphi 0, %s385
      %s389 = sphi 0, %s388
      %s405 = sphi 0, %s389
      %s411 = sphi 0, %s413
      %s414 = sphi 0, %s411
      %s415 = sphi 0, %s414
      %s431 = sphi 0, %s415
      %s437 = sphi 0, %s439
      %s440 = sphi 0, %s437
      %s441 = sphi 0, %s440
      %s457 = sphi 0, %s441
      %s463 = sphi 0, %s465
      %s466 = sphi 0, %s463
      %s467 = sphi 0, %s466
      %s483 = sphi 0, %s467
    $region4: #{_forward_jit.1} parent=1 // loop_header_branch
      %32 = sbr.rel (%p30) target = $region8
    $region5: #{_forward_jit.1} parent=1 // loop_body
      %s34 = ssub.s32 %s29, 1
      %s35 = ssub.s32 %s29, 2
      %s36 = sadd.s32 %s29, 1
      %s37 = ssub.s32 %s29, %s36
      %p38 = scmp.eq.s32.totalorder %s37, 0
      %s40 = sadd.s32 %s39, 1
      %s41 = scalar_select %p38, %s39, %s40
      %p44 = pneg %p38
      %p45 = scmp.eq.s32.totalorder %s29, 1
      %p46 = por %p44, %p45
      %p47 = scmp.ne.s32.totalorder %s39, %s42
      %p48 = scmp.eq.s32.totalorder %s29, 0
      %p49 = por %p47, %p48
      %p50 = scmp.ne.s32.totalorder %s39, %s42
      %p51 = scmp.eq.s32.totalorder %s34, 1
      %p52 = por %p50, %p51
      %p53 = scmp.ne.s32.totalorder %s42, %s43
      %p54 = scmp.eq.s32.totalorder %s34, 0
      %p55 = por %p53, %p54
      %p56 = scmp.ne.s32.totalorder %s42, %s43
      %p57 = scmp.eq.s32.totalorder %s35, 1
      %p58 = por %p56, %p57
      %p60 = scmp.ne.s32.totalorder %s43, %s59
      %p61 = scmp.eq.s32.totalorder %s35, 0
      %p62 = por %p60, %p61
      %s63 = ssub.s32 %s29, %s36
      %p64 = scmp.eq.s32.totalorder %s63, 0
      %s66 = sadd.s32 %s65, 1
      %s67 = scalar_select %p64, %s65, %s66
      %p70 = pneg %p64
      %p71 = scmp.eq.s32.totalorder %s29, 1
      %p72 = por %p70, %p71
      %p73 = scmp.ne.s32.totalorder %s65, %s68
      %p74 = scmp.eq.s32.totalorder %s29, 0
      %p75 = por %p73, %p74
      %p76 = scmp.ne.s32.totalorder %s65, %s68
      %p77 = scmp.eq.s32.totalorder %s34, 1
      %p78 = por %p76, %p77
      %p79 = scmp.ne.s32.totalorder %s68, %s69
      %p80 = scmp.eq.s32.totalorder %s34, 0
      %p81 = por %p79, %p80
      %p82 = scmp.ne.s32.totalorder %s68, %s69
      %p83 = scmp.eq.s32.totalorder %s35, 1
      %p84 = por %p82, %p83
      %p86 = scmp.ne.s32.totalorder %s69, %s85
      %p87 = scmp.eq.s32.totalorder %s35, 0
      %p88 = por %p86, %p87
      %s90 = sadd.s32 %s89, 1
      %p93 = scmp.eq.s32.totalorder %s29, 1
      %p94 = scmp.ne.s32.totalorder %s89, %s91
      %p95 = scmp.eq.s32.totalorder %s29, 0
      %p96 = por %p94, %p95
      %p97 = scmp.ne.s32.totalorder %s89, %s91
      %p98 = scmp.eq.s32.totalorder %s34, 1
      %p99 = por %p97, %p98
      %p100 = scmp.ne.s32.totalorder %s91, %s92
      %p101 = scmp.eq.s32.totalorder %s34, 0
      %p102 = por %p100, %p101
      %p103 = scmp.ne.s32.totalorder %s91, %s92
      %p104 = scmp.eq.s32.totalorder %s35, 1
      %p105 = por %p103, %p104
      %p107 = scmp.ne.s32.totalorder %s92, %s106
      %p108 = scmp.eq.s32.totalorder %s35, 0
      %p109 = por %p107, %p108
      %s111 = sadd.s32 %s110, 1
      %p114 = scmp.eq.s32.totalorder %s29, 1
      %p115 = scmp.ne.s32.totalorder %s110, %s112
      %p116 = scmp.eq.s32.totalorder %s29, 0
      %p117 = por %p115, %p116
      %p118 = scmp.ne.s32.totalorder %s110, %s112
      %p119 = scmp.eq.s32.totalorder %s34, 1
      %p120 = por %p118, %p119
      %p121 = scmp.ne.s32.totalorder %s112, %s113
      %p122 = scmp.eq.s32.totalorder %s34, 0
      %p123 = por %p121, %p122
      %p124 = scmp.ne.s32.totalorder %s112, %s113
      %p125 = scmp.eq.s32.totalorder %s35, 1
      %p126 = por %p124, %p125
      %p128 = scmp.ne.s32.totalorder %s113, %s127
      %p129 = scmp.eq.s32.totalorder %s35, 0
      %p130 = por %p128, %p129
      %s132 = sadd.s32 %s131, 1
      %p135 = scmp.eq.s32.totalorder %s29, 1
      %p136 = scmp.ne.s32.totalorder %s131, %s133
      %p137 = scmp.eq.s32.totalorder %s29, 0
      %p138 = por %p136, %p137
      %p139 = scmp.ne.s32.totalorder %s131, %s133
      %p140 = scmp.eq.s32.totalorder %s34, 1
      %p141 = por %p139, %p140
      %p142 = scmp.ne.s32.totalorder %s133, %s134
      %p143 = scmp.eq.s32.totalorder %s34, 0
      %p144 = por %p142, %p143
      %p145 = scmp.ne.s32.totalorder %s133, %s134
      %p146 = scmp.eq.s32.totalorder %s35, 1
      %p147 = por %p145, %p146
      %p149 = scmp.ne.s32.totalorder %s134, %s148
      %p150 = scmp.eq.s32.totalorder %s35, 0
      %p151 = por %p149, %p150
      %s153 = sadd.s32 %s152, 1
      %p156 = scmp.eq.s32.totalorder %s29, 1
      %p157 = scmp.ne.s32.totalorder %s152, %s154
      %p158 = scmp.eq.s32.totalorder %s29, 0
      %p159 = por %p157, %p158
      %p160 = scmp.ne.s32.totalorder %s152, %s154
      %p161 = scmp.eq.s32.totalorder %s34, 1
      %p162 = por %p160, %p161
      %p163 = scmp.ne.s32.totalorder %s154, %s155
      %p164 = scmp.eq.s32.totalorder %s34, 0
      %p165 = por %p163, %p164
      %p166 = scmp.ne.s32.totalorder %s154, %s155
      %p167 = scmp.eq.s32.totalorder %s35, 1
      %p168 = por %p166, %p167
      %p170 = scmp.ne.s32.totalorder %s155, %s169
      %p171 = scmp.eq.s32.totalorder %s35, 0
      %p172 = por %p170, %p171
      %s174 = sadd.s32 %s173, 1
      %p177 = scmp.eq.s32.totalorder %s29, 1
      %p178 = scmp.ne.s32.totalorder %s173, %s175
      %p179 = scmp.eq.s32.totalorder %s29, 0
      %p180 = por %p178, %p179
      %p181 = scmp.ne.s32.totalorder %s173, %s175
      %p182 = scmp.eq.s32.totalorder %s34, 1
      %p183 = por %p181, %p182
      %p184 = scmp.ne.s32.totalorder %s175, %s176
      %p185 = scmp.eq.s32.totalorder %s34, 0
      %p186 = por %p184, %p185
      %p187 = scmp.ne.s32.totalorder %s175, %s176
      %p188 = scmp.eq.s32.totalorder %s35, 1
      %p189 = por %p187, %p188
      %p191 = scmp.ne.s32.totalorder %s176, %s190
      %p192 = scmp.eq.s32.totalorder %s35, 0
      %p193 = por %p191, %p192
      %s195 = sadd.s32 %s194, 1
      %p198 = scmp.eq.s32.totalorder %s29, 1
      %p199 = scmp.ne.s32.totalorder %s194, %s196
      %p200 = scmp.eq.s32.totalorder %s29, 0
      %p201 = por %p199, %p200
      %p202 = scmp.ne.s32.totalorder %s194, %s196
      %p203 = scmp.eq.s32.totalorder %s34, 1
      %p204 = por %p202, %p203
      %p205 = scmp.ne.s32.totalorder %s196, %s197
      %p206 = scmp.eq.s32.totalorder %s34, 0
      %p207 = por %p205, %p206
      %p208 = scmp.ne.s32.totalorder %s196, %s197
      %p209 = scmp.eq.s32.totalorder %s35, 1
      %p210 = por %p208, %p209
      %p212 = scmp.ne.s32.totalorder %s197, %s211
      %p213 = scmp.eq.s32.totalorder %s35, 0
      %p214 = por %p212, %p213
      %s216 = sadd.s32 %s215, 1
      %p219 = scmp.eq.s32.totalorder %s29, 1
      %p220 = scmp.ne.s32.totalorder %s215, %s217
      %p221 = scmp.eq.s32.totalorder %s29, 0
      %p222 = por %p220, %p221
      %p223 = scmp.ne.s32.totalorder %s215, %s217
      %p224 = scmp.eq.s32.totalorder %s34, 1
      %p225 = por %p223, %p224
      %p226 = scmp.ne.s32.totalorder %s217, %s218
      %p227 = scmp.eq.s32.totalorder %s34, 0
      %p228 = por %p226, %p227
      %p229 = scmp.ne.s32.totalorder %s217, %s218
      %p230 = scmp.eq.s32.totalorder %s35, 1
      %p231 = por %p229, %p230
      %p233 = scmp.ne.s32.totalorder %s218, %s232
      %p234 = scmp.eq.s32.totalorder %s35, 0
      %p235 = por %p233, %p234
      %s237 = sadd.s32 %s236, 1
      %p240 = scmp.eq.s32.totalorder %s29, 1
      %p241 = scmp.ne.s32.totalorder %s236, %s238
      %p242 = scmp.eq.s32.totalorder %s29, 0
      %p243 = por %p241, %p242
      %p244 = scmp.ne.s32.totalorder %s236, %s238
      %p245 = scmp.eq.s32.totalorder %s34, 1
      %p246 = por %p244, %p245
      %p247 = scmp.ne.s32.totalorder %s238, %s239
      %p248 = scmp.eq.s32.totalorder %s34, 0
      %p249 = por %p247, %p248
      %p250 = scmp.ne.s32.totalorder %s238, %s239
      %p251 = scmp.eq.s32.totalorder %s35, 1
      %p252 = por %p250, %p251
      %p254 = scmp.ne.s32.totalorder %s239, %s253
      %p255 = scmp.eq.s32.totalorder %s35, 0
      %p256 = por %p254, %p255
      %s258 = sadd.s32 %s257, 1
      %p261 = scmp.eq.s32.totalorder %s29, 1
      %p262 = scmp.ne.s32.totalorder %s257, %s259
      %p263 = scmp.eq.s32.totalorder %s29, 0
      %p264 = por %p262, %p263
      %p265 = scmp.ne.s32.totalorder %s257, %s259
      %p266 = scmp.eq.s32.totalorder %s34, 1
      %p267 = por %p265, %p266
      %p268 = scmp.ne.s32.totalorder %s259, %s260
      %p269 = scmp.eq.s32.totalorder %s34, 0
      %p270 = por %p268, %p269
      %p271 = scmp.ne.s32.totalorder %s259, %s260
      %p272 = scmp.eq.s32.totalorder %s35, 1
      %p273 = por %p271, %p272
      %p275 = scmp.ne.s32.totalorder %s260, %s274
      %p276 = scmp.eq.s32.totalorder %s35, 0
      %p277 = por %p275, %p276
      %s279 = sadd.s32 %s278, 1
      %p282 = scmp.eq.s32.totalorder %s29, 1
      %p283 = scmp.ne.s32.totalorder %s278, %s280
      %p284 = scmp.eq.s32.totalorder %s29, 0
      %p285 = por %p283, %p284
      %p286 = scmp.ne.s32.totalorder %s278, %s280
      %p287 = scmp.eq.s32.totalorder %s34, 1
      %p288 = por %p286, %p287
      %p289 = scmp.ne.s32.totalorder %s280, %s281
      %p290 = scmp.eq.s32.totalorder %s34, 0
      %p291 = por %p289, %p290
      %p292 = scmp.ne.s32.totalorder %s280, %s281
      %p293 = scmp.eq.s32.totalorder %s35, 1
      %p294 = por %p292, %p293
      %p296 = scmp.ne.s32.totalorder %s281, %s295
      %p297 = scmp.eq.s32.totalorder %s35, 0
      %p298 = por %p296, %p297
      %s300 = sadd.s32 %s299, 1
      %p303 = scmp.eq.s32.totalorder %s29, 1
      %p304 = scmp.ne.s32.totalorder %s299, %s301
      %p305 = scmp.eq.s32.totalorder %s29, 0
      %p306 = por %p304, %p305
      %p307 = scmp.ne.s32.totalorder %s299, %s301
      %p308 = scmp.eq.s32.totalorder %s34, 1
      %p309 = por %p307, %p308
      %p310 = scmp.ne.s32.totalorder %s301, %s302
      %p311 = scmp.eq.s32.totalorder %s34, 0
      %p312 = por %p310, %p311
      %p313 = scmp.ne.s32.totalorder %s301, %s302
      %p314 = scmp.eq.s32.totalorder %s35, 1
      %p315 = por %p313, %p314
      %p317 = scmp.ne.s32.totalorder %s302, %s316
      %p318 = scmp.eq.s32.totalorder %s35, 0
      %p319 = por %p317, %p318
      %s321 = sadd.s32 %s320, 1
      %p324 = scmp.eq.s32.totalorder %s29, 1
      %p325 = scmp.ne.s32.totalorder %s320, %s322
      %p326 = scmp.eq.s32.totalorder %s29, 0
      %p327 = por %p325, %p326
      %p328 = scmp.ne.s32.totalorder %s320, %s322
      %p329 = scmp.eq.s32.totalorder %s34, 1
      %p330 = por %p328, %p329
      %p331 = scmp.ne.s32.totalorder %s322, %s323
      %p332 = scmp.eq.s32.totalorder %s34, 0
      %p333 = por %p331, %p332
      %p334 = scmp.ne.s32.totalorder %s322, %s323
      %p335 = scmp.eq.s32.totalorder %s35, 1
      %p336 = por %p334, %p335
      %p338 = scmp.ne.s32.totalorder %s323, %s337
      %p339 = scmp.eq.s32.totalorder %s35, 0
      %p340 = por %p338, %p339
      %s342 = sadd.s32 %s341, 1
      %p345 = scmp.eq.s32.totalorder %s29, 1
      %p346 = scmp.ne.s32.totalorder %s341, %s343
      %p347 = scmp.eq.s32.totalorder %s29, 0
      %p348 = por %p346, %p347
      %p349 = scmp.ne.s32.totalorder %s341, %s343
      %p350 = scmp.eq.s32.totalorder %s34, 1
      %p351 = por %p349, %p350
      %p352 = scmp.ne.s32.totalorder %s343, %s344
      %p353 = scmp.eq.s32.totalorder %s34, 0
      %p354 = por %p352, %p353
      %p355 = scmp.ne.s32.totalorder %s343, %s344
      %p356 = scmp.eq.s32.totalorder %s35, 1
      %p357 = por %p355, %p356
      %p359 = scmp.ne.s32.totalorder %s344, %s358
      %p360 = scmp.eq.s32.totalorder %s35, 0
      %p361 = por %p359, %p360
      %s363 = sadd.s32 %s362, 1
      %p366 = scmp.eq.s32.totalorder %s29, 1
      %p367 = scmp.ne.s32.totalorder %s362, %s364
      %p368 = scmp.eq.s32.totalorder %s29, 0
      %p369 = por %p367, %p368
      %p370 = scmp.ne.s32.totalorder %s362, %s364
      %p371 = scmp.eq.s32.totalorder %s34, 1
      %p372 = por %p370, %p371
      %p373 = scmp.ne.s32.totalorder %s364, %s365
      %p374 = scmp.eq.s32.totalorder %s34, 0
      %p375 = por %p373, %p374
      %p376 = scmp.ne.s32.totalorder %s364, %s365
      %p377 = scmp.eq.s32.totalorder %s35, 1
      %p378 = por %p376, %p377
      %p380 = scmp.ne.s32.totalorder %s365, %s379
      %p381 = scmp.eq.s32.totalorder %s35, 0
      %p382 = por %p380, %p381
      %s383 = ssub.s32 %s29, %s36
      %p384 = scmp.eq.s32.totalorder %s383, 0
      %s386 = sadd.s32 %s385, 1
      %s387 = scalar_select %p384, %s385, %s386
      %p390 = pneg %p384
      %p391 = scmp.eq.s32.totalorder %s29, 1
      %p392 = por %p390, %p391
      %p393 = scmp.ne.s32.totalorder %s385, %s388
      %p394 = scmp.eq.s32.totalorder %s29, 0
      %p395 = por %p393, %p394
      %p396 = scmp.ne.s32.totalorder %s385, %s388
      %p397 = scmp.eq.s32.totalorder %s34, 1
      %p398 = por %p396, %p397
      %p399 = scmp.ne.s32.totalorder %s388, %s389
      %p400 = scmp.eq.s32.totalorder %s34, 0
      %p401 = por %p399, %p400
      %p402 = scmp.ne.s32.totalorder %s388, %s389
      %p403 = scmp.eq.s32.totalorder %s35, 1
      %p404 = por %p402, %p403
      %p406 = scmp.ne.s32.totalorder %s389, %s405
      %p407 = scmp.eq.s32.totalorder %s35, 0
      %p408 = por %p406, %p407
      %s409 = ssub.s32 %s29, %s36
      %p410 = scmp.eq.s32.totalorder %s409, 0
      %s412 = sadd.s32 %s411, 1
      %s413 = scalar_select %p410, %s411, %s412
      %p416 = pneg %p410
      %p417 = scmp.eq.s32.totalorder %s29, 1
      %p418 = por %p416, %p417
      %p419 = scmp.ne.s32.totalorder %s411, %s414
      %p420 = scmp.eq.s32.totalorder %s29, 0
      %p421 = por %p419, %p420
      %p422 = scmp.ne.s32.totalorder %s411, %s414
      %p423 = scmp.eq.s32.totalorder %s34, 1
      %p424 = por %p422, %p423
      %p425 = scmp.ne.s32.totalorder %s414, %s415
      %p426 = scmp.eq.s32.totalorder %s34, 0
      %p427 = por %p425, %p426
      %p428 = scmp.ne.s32.totalorder %s414, %s415
      %p429 = scmp.eq.s32.totalorder %s35, 1
      %p430 = por %p428, %p429
      %p432 = scmp.ne.s32.totalorder %s415, %s431
      %p433 = scmp.eq.s32.totalorder %s35, 0
      %p434 = por %p432, %p433
      %s435 = ssub.s32 %s29, %s36
      %p436 = scmp.eq.s32.totalorder %s435, 0
      %s438 = sadd.s32 %s437, 1
      %s439 = scalar_select %p436, %s437, %s438
      %p442 = pneg %p436
      %p443 = scmp.eq.s32.totalorder %s29, 1
      %p444 = por %p442, %p443
      %p445 = scmp.ne.s32.totalorder %s437, %s440
      %p446 = scmp.eq.s32.totalorder %s29, 0
      %p447 = por %p445, %p446
      %p448 = scmp.ne.s32.totalorder %s437, %s440
      %p449 = scmp.eq.s32.totalorder %s34, 1
      %p450 = por %p448, %p449
      %p451 = scmp.ne.s32.totalorder %s440, %s441
      %p452 = scmp.eq.s32.totalorder %s34, 0
      %p453 = por %p451, %p452
      %p454 = scmp.ne.s32.totalorder %s440, %s441
      %p455 = scmp.eq.s32.totalorder %s35, 1
      %p456 = por %p454, %p455
      %p458 = scmp.ne.s32.totalorder %s441, %s457
      %p459 = scmp.eq.s32.totalorder %s35, 0
      %p460 = por %p458, %p459
      %s461 = ssub.s32 %s29, %s36
      %p462 = scmp.eq.s32.totalorder %s461, 0
      %s464 = sadd.s32 %s463, 1
      %s465 = scalar_select %p462, %s463, %s464
      %p468 = pneg %p462
      %p469 = scmp.eq.s32.totalorder %s29, 1
      %p470 = por %p468, %p469
      %p471 = scmp.ne.s32.totalorder %s463, %s466
      %p472 = scmp.eq.s32.totalorder %s29, 0
      %p473 = por %p471, %p472
      %p474 = scmp.ne.s32.totalorder %s463, %s466
      %p475 = scmp.eq.s32.totalorder %s34, 1
      %p476 = por %p474, %p475
      %p477 = scmp.ne.s32.totalorder %s466, %s467
      %p478 = scmp.eq.s32.totalorder %s34, 0
      %p479 = por %p477, %p478
      %p480 = scmp.ne.s32.totalorder %s466, %s467
      %p481 = scmp.eq.s32.totalorder %s35, 1
      %p482 = por %p480, %p481
      %p484 = scmp.ne.s32.totalorder %s467, %s483
      %p485 = scmp.eq.s32.totalorder %s35, 0
      %p486 = por %p484, %p485
      %p487 = scmp.le.s32.totalorder 1, %s29
      %p488 = scmp.lt.s32.totalorder %s29, 3
      %p489 = pnand %p487, %p488
      %p490 = pneg %p489
      // Predicated region
      $region9: #{_forward_jit.1} parent=5 // pred_check
        _
      $region10: #{_forward_jit.1} parent=5 // pred_check_branch
        %492 = sbr.rel (%p489) target = $region12
      $region11: #{_forward_jit.1} parent=5 // pred_region
        %s493 = ssub.s32 %s29, 1
        // Predicated region
        $region13: #{_forward_jit.1} parent=11 // pred_check
          %p494 = pneg %p102
        $region14: #{_forward_jit.1} parent=11 // pred_check_branch
          %496 = sbr.rel (%p494) target = $region16
        $region15: #{_forward_jit.1} parent=11 // pred_region
          _
        $region16: #{_forward_jit.1} parent=11 // pred_fallthru
          _
        // Predicated region
        $region17: #{_forward_jit.1} parent=11 // pred_check
          %p497 = pneg %p123
        $region18: #{_forward_jit.1} parent=11 // pred_check_branch
          %499 = sbr.rel (%p497) target = $region20
        $region19: #{_forward_jit.1} parent=11 // pred_region
          _
        $region20: #{_forward_jit.1} parent=11 // pred_fallthru
          _
        // Predicated region
        $region21: #{_forward_jit.1} parent=11 // pred_check
          %p500 = pneg %p144
        $region22: #{_forward_jit.1} parent=11 // pred_check_branch
          %502 = sbr.rel (%p500) target = $region24
        $region23: #{_forward_jit.1} parent=11 // pred_region
          _
        $region24: #{_forward_jit.1} parent=11 // pred_fallthru
          _
        // Predicated region
        $region25: #{_forward_jit.1} parent=11 // pred_check
          %p503 = pneg %p165
        $region26: #{_forward_jit.1} parent=11 // pred_check_branch
          %505 = sbr.rel (%p503) target = $region28
        $region27: #{_forward_jit.1} parent=11 // pred_region
          _
        $region28: #{_forward_jit.1} parent=11 // pred_fallthru
          _
        // Predicated region
        $region29: #{_forward_jit.1} parent=11 // pred_check
          %p506 = pneg %p186
        $region30: #{_forward_jit.1} parent=11 // pred_check_branch
          %508 = sbr.rel (%p506) target = $region32
        $region31: #{_forward_jit.1} parent=11 // pred_region
          _
        $region32: #{_forward_jit.1} parent=11 // pred_fallthru
          _
        // Predicated region
        $region33: #{_forward_jit.1} parent=11 // pred_check
          %p509 = pneg %p207
        $region34: #{_forward_jit.1} parent=11 // pred_check_branch
          %511 = sbr.rel (%p509) target = $region36
        $region35: #{_forward_jit.1} parent=11 // pred_region
          _
        $region36: #{_forward_jit.1} parent=11 // pred_fallthru
          _
        // Predicated region
        $region37: #{_forward_jit.1} parent=11 // pred_check
          %p512 = pneg %p228
        $region38: #{_forward_jit.1} parent=11 // pred_check_branch
          %514 = sbr.rel (%p512) target = $region40
        $region39: #{_forward_jit.1} parent=11 // pred_region
          _
        $region40: #{_forward_jit.1} parent=11 // pred_fallthru
          _
        // Predicated region
        $region41: #{_forward_jit.1} parent=11 // pred_check
          %p515 = pneg %p249
        $region42: #{_forward_jit.1} parent=11 // pred_check_branch
          %517 = sbr.rel (%p515) target = $region44
        $region43: #{_forward_jit.1} parent=11 // pred_region
          _
        $region44: #{_forward_jit.1} parent=11 // pred_fallthru
          _
        // Predicated region
        $region45: #{_forward_jit.1} parent=11 // pred_check
          %p518 = pneg %p270
        $region46: #{_forward_jit.1} parent=11 // pred_check_branch
          %520 = sbr.rel (%p518) target = $region48
        $region47: #{_forward_jit.1} parent=11 // pred_region
          _
        $region48: #{_forward_jit.1} parent=11 // pred_fallthru
          _
        // Predicated region
        $region49: #{_forward_jit.1} parent=11 // pred_check
          %p521 = pneg %p291
        $region50: #{_forward_jit.1} parent=11 // pred_check_branch
          %523 = sbr.rel (%p521) target = $region52
        $region51: #{_forward_jit.1} parent=11 // pred_region
          _
        $region52: #{_forward_jit.1} parent=11 // pred_fallthru
          _
        // Predicated region
        $region53: #{_forward_jit.1} parent=11 // pred_check
          %p524 = pneg %p312
        $region54: #{_forward_jit.1} parent=11 // pred_check_branch
          %526 = sbr.rel (%p524) target = $region56
        $region55: #{_forward_jit.1} parent=11 // pred_region
          _
        $region56: #{_forward_jit.1} parent=11 // pred_fallthru
          _
        // Predicated region
        $region57: #{_forward_jit.1} parent=11 // pred_check
          %p527 = pneg %p333
        $region58: #{_forward_jit.1} parent=11 // pred_check_branch
          %529 = sbr.rel (%p527) target = $region60
        $region59: #{_forward_jit.1} parent=11 // pred_region
          _
        $region60: #{_forward_jit.1} parent=11 // pred_fallthru
          _
        // Predicated region
        $region61: #{_forward_jit.1} parent=11 // pred_check
          %p530 = pneg %p354
        $region62: #{_forward_jit.1} parent=11 // pred_check_branch
          %532 = sbr.rel (%p530) target = $region64
        $region63: #{_forward_jit.1} parent=11 // pred_region
          _
        $region64: #{_forward_jit.1} parent=11 // pred_fallthru
          _
        // Predicated region
        $region65: #{_forward_jit.1} parent=11 // pred_check
          %p533 = pneg %p375
        $region66: #{_forward_jit.1} parent=11 // pred_check_branch
          %535 = sbr.rel (%p533) target = $region68
        $region67: #{_forward_jit.1} parent=11 // pred_region
          _
        $region68: #{_forward_jit.1} parent=11 // pred_fallthru
          _
      $region12: #{_forward_jit.1} parent=5 // pred_fallthru
        _
      %p536 = scmp.lt.s32.totalorder %s29, 2
      // Predicated region
      $region69: #{_forward_jit.1} parent=5 // pred_check
        %p537 = pneg %p536
      $region70: #{_forward_jit.1} parent=5 // pred_check_branch
        %539 = sbr.rel (%p537) target = $region72
      $region71: #{_forward_jit.1} parent=5 // pred_region
        // Predicated region
        $region73: #{_forward_jit.1} parent=71 // pred_check
          %p540 = pneg %p49
        $region74: #{_forward_jit.1} parent=71 // pred_check_branch
          %542 = sbr.rel (%p540) target = $region76
        $region75: #{_forward_jit.1} parent=71 // pred_region
          %p543 = scmp.lt.s32.totalorder %s29, 1
          %s544 = scalar_select %p543, %s29, 1
          %s545 = smul.addr %s544, 8
          %s546 = scalar_lea.vmem %s0, %s545
        $region76: #{_forward_jit.1} parent=71 // pred_fallthru
          _
        // Predicated region
        $region77: #{_forward_jit.1} parent=71 // pred_check
          %p547 = pneg %p75
        $region78: #{_forward_jit.1} parent=71 // pred_check_branch
          %549 = sbr.rel (%p547) target = $region80
        $region79: #{_forward_jit.1} parent=71 // pred_region
          %p550 = scmp.lt.s32.totalorder %s29, 1
          %s551 = scalar_select %p550, %s29, 1
          %s552 = smul.addr %s551, 8
          %s553 = scalar_lea.vmem %s1, %s552
        $region80: #{_forward_jit.1} parent=71 // pred_fallthru
          _
      $region72: #{_forward_jit.1} parent=5 // pred_fallthru
        _
      %p554 = scmp.le.s32.totalorder 1, %s29
      %p555 = scmp.lt.s32.totalorder %s29, 3
      %p556 = pnand %p554, %p555
      %p557 = pneg %p556
      // Predicated region
      $region81: #{_forward_jit.1} parent=5 // pred_check
        _
      $region82: #{_forward_jit.1} parent=5 // pred_check_branch
        %559 = sbr.rel (%p556) target = $region84
      $region83: #{_forward_jit.1} parent=5 // pred_region
        %s560 = ssub.s32 %s29, 1
        %p561 = scmp.lt.s32.totalorder %s34, 1
        %s562 = scalar_select %p561, %s34, 1
        %s563 = smul.addr %s562, 8
        %s564 = scalar_lea.vmem %s0, %s563
        %p565 = pneg %p55
        %p566 = pneg %p52
        %p567 = scmp.lt.s32.totalorder %s34, 1
        %s568 = scalar_select %p567, %s34, 1
        %s569 = smul.addr %s568, 8
        %s570 = scalar_lea.vmem %s1, %s569
        %p571 = pneg %p81
        %p572 = pneg %p78
        %p573 = pneg %p102
        %p574 = pneg %p99
        %p575 = pneg %p123
        %p576 = pneg %p120
        %p577 = pneg %p144
        %p578 = pneg %p141
        %p579 = pneg %p165
        %p580 = pneg %p162
        %p581 = pneg %p186
        %p582 = pneg %p183
        %p583 = pneg %p207
        %p584 = pneg %p204
        %p585 = pneg %p228
        %p586 = pneg %p225
        %p587 = pneg %p249
        %p588 = pneg %p246
        %p589 = pneg %p270
        %p590 = pneg %p267
        %p591 = pneg %p291
        %p592 = pneg %p288
        %p593 = pneg %p312
        %p594 = pneg %p309
        %p595 = pneg %p333
        %p596 = pneg %p330
        %p597 = pneg %p354
        %p598 = pneg %p351
        %p599 = pneg %p375
        %p600 = pneg %p372
        %p601 = pneg %p401
        %p602 = pneg %p398
        %s603 = sand.u32 %s388, 1
        %s604 = scalar_lea.sflag [#allocation3], %s603
        %s605 = sand.u32 %s388, 1
        %s606 = smul.addr %s605, 8
        %s607 = scalar_lea.vmem [#allocation2], %s606
        %p608 = pneg %p427
        %p609 = pneg %p424
        %p610 = scmp.lt.s32.totalorder %s34, 1
        %s611 = scalar_select %p610, %s34, 1
        %s612 = smul.addr %s611, 2
        %s613 = scalar_lea.vmem %s17, %s612
        %p614 = pneg %p453
        %p615 = pneg %p450
        %p616 = scmp.lt.s32.totalorder %s34, 1
        %s617 = scalar_select %p616, %s34, 1
        %s618 = smul.addr %s617, 2
        %s619 = scalar_lea.vmem %s18, %s618
        %p620 = pneg %p479
        %p621 = pneg %p476
        %p622 = scmp.lt.s32.totalorder %s34, 1
        %s623 = scalar_select %p622, %s34, 1
        %s624 = smul.addr %s623, 2
        %s625 = scalar_lea.vmem %s19, %s624
        %p626 = scmp.lt.s32.totalorder %s34, 1
        %s627 = scalar_select %p626, %s34, 1
        %s628 = smul.addr %s627, 8
        %s629 = scalar_lea.vmem %s0, %s628
        %p630 = scmp.lt.s32.totalorder %s34, 1
        %s631 = scalar_select %p630, %s34, 1
        %s632 = smul.addr %s631, 8
        %s633 = scalar_lea.vmem %s1, %s632
        %p634 = scmp.lt.s32.totalorder %s34, 1
        %s635 = scalar_select %p634, %s34, 1
        %s636 = smul.addr %s635, 2
        %s637 = scalar_lea.vmem %s17, %s636
        %p638 = scmp.lt.s32.totalorder %s34, 1
        %s639 = scalar_select %p638, %s34, 1
        %s640 = smul.addr %s639, 2
        %s641 = scalar_lea.vmem %s18, %s640
        %p642 = scmp.lt.s32.totalorder %s34, 1
        %s643 = scalar_select %p642, %s34, 1
        %s644 = smul.addr %s643, 2
        %s645 = scalar_lea.vmem %s19, %s644
        %v646 = vld [vmem:[%s629] sm:$0xff]
        %v647 = vld [vmem:[%s633] sm:$0xff]
        %vm648 = vcmp.gt.f32.partialorder %v647, 0.0
        %v649 = vsel %vm648, 0.0, -3.4028235e+38
        %v650 = vld [vmem:[%s2] sm:$0x1]
        %v651 = vld [vmem:[%s3] sm:$0x1]
        %vm652 = vcmask 261120
        %v653 = vsel %vm652, %v646, 0.0
        %654 = vadd.xlane.f32.xlu0 %v653
        %v655 = vpop.xlane.xlu0 %654
        %v656 = vrcp.pop 32.0
        %v657 = vmul.f32 32.0, %v656
        %v658 = vsub.f32 1.0, %v657
        %v659 = vmul.f32 %v656, %v658
        %v660 = vadd.f32 %v656, %v659
        %vm661 = vweird.f32 %v656
        %v662 = vsel %vm661, %v656, %v660
        %v663 = vmul.f32 %v655, %v662
        %v664 = vsub.f32 %v646, %v663
        %v665 = vmul.f32 %v664, %v664
        %v666 = vsel %vm652, %v665, 0.0
        %667 = vadd.xlane.f32.xlu0 %v666
        %v668 = vpop.xlane.xlu0 %667
        %v669 = vmul.f32 %v668, %v662
        %v670 = vadd.f32 %v669, 1e-05
        %v671 = vrsqrt.pop %v670
        %v672 = vmul.f32 %v671, %v670
        %v673 = vmul.f32 %v672, %v671
        %v674 = vmul.f32 0.5, %v673
        %v675 = vsub.f32 1.5, %v674
        %v676 = vmul.f32 %v671, %v675
        %vm677 = vweird.f32 %v670
        %vm678 = vweird.f32 %v671
        %vm679 = vmor %vm677, %vm678
        %v680 = vsel %vm679, %v671, %v676
        %v681 = vmul.f32 %v664, %v680
        %v683 = vperm.slane %v650, 0
        %v685 = vmul.f32 %v681, %v683
        %v687 = vperm.slane %v651, 0
        %v689 = vadd.f32 %v685, %v687
        %v690 = vld [vmem:[%s4] sm:$0xff]
        %v691 = vld [vmem:[%s4 + $0x8] sm:$0xff]
        %v692 = vld [vmem:[%s4 + $0x10] sm:$0xff]
        %v693 = vld [vmem:[%s4 + $0x18] sm:$0xff]
        %v694 = vld [vmem:[%s5] sm:$0x1]
        %v696 = vperm.slane %v694, 0
        %v699 = vsel %vm652, %v689, 0
        %701 = vmatpush.msra.mxu0 0.0
        %702 = vmatpush.msra.mxu0 0.0
        %703 = vmatpush.msra.mxu0 0.0
        %704 = vmatpush.msra.mxu0 0.0
        %705 = vmatpush.msra.mxu0 0.0
        %706 = vmatpush.msra.mxu0 0.0
        %707 = vmatpush.msra.mxu0 0.0
        %708 = vmatpush.msra.mxu0 0.0
        %709 = vmatpush.msra.mxu0 0.0
        %710 = vmatpush.msra.mxu0 0.0
        %711 = vmatpush.msra.mxu0 0.0
        %712 = vmatpush.msra.mxu0 0.0
        %713 = vmatpush.msra.mxu0 %v693
        %714 = vmatpush.msra.mxu0 %v692
        %715 = vmatpush.msra.mxu0 %v691
        %716 = vmatpush.msra.mxu0 %v690
        %717 = vmatmul.f32.gmra.mxu0 %v699
        %v718 = vpop.f32.mrf.mxu0
        %v719 = vadd.f32 %v696, %v718
        %720 = vdwg.mxu0
        %v721 = vld [vmem:[%s6] sm:$0xff]
        %v722 = vld [vmem:[%s6 + $0x8] sm:$0xff]
        %v723 = vld [vmem:[%s6 + $0x10] sm:$0xff]
        %v724 = vld [vmem:[%s6 + $0x18] sm:$0xff]
        %726 = vrot.lane.b32.xlu0 %v719, 96
        %v727 = vpop.permute.xlu0 %726
        %vm728 = vcmask 31744
        %v729 = vsel %vm728, %v719, 0
        %v731 = vsel %vm728, %v727, 0
        %733 = vmatpush.xpose.msra.mxu0 0.0
        %734 = vmatpush.xpose.msra.mxu0 0.0
        %735 = vmatpush.xpose.msra.mxu0 0.0
        %736 = vmatpush.xpose.msra.mxu0 0.0
        %737 = vmatpush.xpose.msra.mxu0 0.0
        %738 = vmatpush.xpose.msra.mxu0 0.0
        %739 = vmatpush.xpose.msra.mxu0 0.0
        %740 = vmatpush.xpose.msra.mxu0 0.0
        %741 = vmatpush.xpose.msra.mxu0 0.0
        %742 = vmatpush.xpose.msra.mxu0 0.0
        %743 = vmatpush.xpose.msra.mxu0 0.0
        %744 = vmatpush.xpose.msra.mxu0 0.0
        %745 = vmatpush.xpose.msra.mxu0 0.0
        %746 = vmatpush.xpose.msra.mxu0 0.0
        %747 = vmatpush.xpose.msra.mxu0 0.0
        %748 = vmatpush.xpose.msra.mxu0 %v731
        %749 = vmatmul.f32.gmra.mxu0 %v729
        %v750 = vpop.f32.mrf.mxu0
        %v751 = vadd.f32 0.0, %v750
        %752 = vdwg.mxu0
        %v753 = vmul.f32 %v751, 0.5
        %v754 = vadd.f32 %v753, %v649
        %vm755 = vcmask 64512
        %v756 = vsel %vm755, %v754, -inf
        %757 = vmax.xlane.f32.xlu0 %v756
        %v758 = vpop.xlane.xlu0 %757
        %v759 = vsub.f32 %v754, %v758
        %v760 = vmul.f32 %v759, 1.442695
        %v761 = vpow.pop %v760
        %v762 = vsel %vm755, %v761, 0.0
        %763 = vadd.xlane.f32.xlu0 %v762
        %v764 = vpop.xlane.xlu0 %763
        %v765 = vrcp.pop %v764
        %v766 = vmul.f32 %v764, %v765
        %v767 = vsub.f32 1.0, %v766
        %v768 = vmul.f32 %v765, %v767
        %v769 = vadd.f32 %v765, %v768
        %vm770 = vweird.f32 %v764
        %vm771 = vweird.f32 %v765
        %vm772 = vmor %vm770, %vm771
        %v773 = vsel %vm772, %v765, %v769
        %v774 = vand.u32 2147483647, %v764
        %vm775 = vcmp.eq.f32.partialorder %v774, 8.507059e+37
        %v776 = vand.u32 %v764, 2147483648
        %v777 = vor.u32 1.1754944e-38, %v776
        %v778 = vsel %vm775, %v777, %v773
        %v779 = vmul.f32 %v761, %v778
        %v780 = vmul.f32 %v779, %v647
        %781 = vrot.lane.b32.xlu0 %v719, 64
        %v782 = vpop.permute.xlu0 %781
        %v785 = vsel %vm755, %v780, 0
        %787 = vmatpush.msra.mxu0 0.0
        %788 = vmatpush.msra.mxu0 0.0
        %789 = vmatpush.msra.mxu0 0.0
        %790 = vmatpush.msra.mxu0 0.0
        %791 = vmatpush.msra.mxu0 0.0
        %792 = vmatpush.msra.mxu0 0.0
        %793 = vmatpush.msra.mxu0 0.0
        %794 = vmatpush.msra.mxu0 0.0
        %795 = vmatpush.msra.mxu0 0.0
        %796 = vmatpush.msra.mxu0 0.0
        %797 = vmatpush.msra.mxu0 0.0
        %798 = vmatpush.msra.mxu0 0.0
        %799 = vmatpush.msra.mxu0 0.0
        %800 = vmatpush.msra.mxu0 0.0
        %801 = vmatpush.msra.mxu0 0.0
        %802 = vmatpush.msra.mxu0 %v782
        %803 = vmatmul.f32.gmra.mxu0 %v785
        %v804 = vpop.f32.mrf.mxu0
        %v805 = vadd.f32 0.0, %v804
        %806 = vdwg.mxu0
        %807 = vrot.lane.b32.xlu0 %v719, 124
        %v808 = vpop.permute.xlu0 %807
        %809 = vrot.lane.b32.xlu0 %v719, 92
        %v810 = vpop.permute.xlu0 %809
        %v811 = vsel %vm728, %v808, 0
        %v813 = vsel %vm728, %v810, 0
        %815 = vmatpush.xpose.msra.mxu0 0.0
        %816 = vmatpush.xpose.msra.mxu0 0.0
        %817 = vmatpush.xpose.msra.mxu0 0.0
        %818 = vmatpush.xpose.msra.mxu0 0.0
        %819 = vmatpush.xpose.msra.mxu0 0.0
        %820 = vmatpush.xpose.msra.mxu0 0.0
        %821 = vmatpush.xpose.msra.mxu0 0.0
        %822 = vmatpush.xpose.msra.mxu0 0.0
        %823 = vmatpush.xpose.msra.mxu0 0.0
        %824 = vmatpush.xpose.msra.mxu0 0.0
        %825 = vmatpush.xpose.msra.mxu0 0.0
        %826 = vmatpush.xpose.msra.mxu0 0.0
        %827 = vmatpush.xpose.msra.mxu0 0.0
        %828 = vmatpush.xpose.msra.mxu0 0.0
        %829 = vmatpush.xpose.msra.mxu0 0.0
        %830 = vmatpush.xpose.msra.mxu0 %v813
        %831 = vmatmul.f32.gmra.mxu0 %v811
        %v832 = vpop.f32.mrf.mxu0
        %v833 = vadd.f32 0.0, %v832
        %834 = vdwg.mxu0
        %v835 = vmul.f32 %v833, 0.5
        %v836 = vadd.f32 %v835, %v649
        %v837 = vsel %vm755, %v836, -inf
        %838 = vmax.xlane.f32.xlu0 %v837
        %v839 = vpop.xlane.xlu0 %838
        %v840 = vsub.f32 %v836, %v839
        %v841 = vmul.f32 %v840, 1.442695
        %v842 = vpow.pop %v841
        %v843 = vsel %vm755, %v842, 0.0
        %844 = vadd.xlane.f32.xlu0 %v843
        %v845 = vpop.xlane.xlu0 %844
        %v846 = vrcp.pop %v845
        %v847 = vmul.f32 %v845, %v846
        %v848 = vsub.f32 1.0, %v847
        %v849 = vmul.f32 %v846, %v848
        %v850 = vadd.f32 %v846, %v849
        %vm851 = vweird.f32 %v845
        %vm852 = vweird.f32 %v846
        %vm853 = vmor %vm851, %vm852
        %v854 = vsel %vm853, %v846, %v850
        %v855 = vand.u32 2147483647, %v845
        %vm856 = vcmp.eq.f32.partialorder %v855, 8.507059e+37
        %v857 = vand.u32 %v845, 2147483648
        %v858 = vor.u32 1.1754944e-38, %v857
        %v859 = vsel %vm856, %v858, %v854
        %v860 = vmul.f32 %v842, %v859
        %v861 = vmul.f32 %v860, %v647
        %862 = vrot.lane.b32.xlu0 %v719, 60
        %v863 = vpop.permute.xlu0 %862
        %v866 = vsel %vm755, %v861, 0
        %868 = vmatpush.msra.mxu0 0.0
        %869 = vmatpush.msra.mxu0 0.0
        %870 = vmatpush.msra.mxu0 0.0
        %871 = vmatpush.msra.mxu0 0.0
        %872 = vmatpush.msra.mxu0 0.0
        %873 = vmatpush.msra.mxu0 0.0
        %874 = vmatpush.msra.mxu0 0.0
        %875 = vmatpush.msra.mxu0 0.0
        %876 = vmatpush.msra.mxu0 0.0
        %877 = vmatpush.msra.mxu0 0.0
        %878 = vmatpush.msra.mxu0 0.0
        %879 = vmatpush.msra.mxu0 0.0
        %880 = vmatpush.msra.mxu0 0.0
        %881 = vmatpush.msra.mxu0 0.0
        %882 = vmatpush.msra.mxu0 0.0
        %883 = vmatpush.msra.mxu0 %v863
        %884 = vmatmul.f32.gmra.mxu0 %v866
        %v885 = vpop.f32.mrf.mxu0
        %v886 = vadd.f32 0.0, %v885
        %887 = vdwg.mxu0
        %v889 = vrot.slane %v721, 4
        %v891 = vsel %vm728, %v886, 0
        %vm893 = vcmask 1043456
        %v894 = vsel %vm893, %v889, 0
        %896 = vmatpush.msra.mxu0 0.0
        %897 = vmatpush.msra.mxu0 0.0
        %898 = vmatpush.msra.mxu0 0.0
        %899 = vmatpush.msra.mxu0 0.0
        %900 = vmatpush.msra.mxu0 0.0
        %901 = vmatpush.msra.mxu0 0.0
        %902 = vmatpush.msra.mxu0 0.0
        %903 = vmatpush.msra.mxu0 0.0
        %904 = vmatpush.msra.mxu0 0.0
        %905 = vmatpush.msra.mxu0 0.0
        %906 = vmatpush.msra.mxu0 0.0
        %907 = vmatpush.msra.mxu0 0.0
        %908 = vmatpush.msra.mxu0 0.0
        %909 = vmatpush.msra.mxu0 0.0
        %910 = vmatpush.msra.mxu0 0.0
        %911 = vmatpush.msra.mxu0 %v894
        %912 = vmatmul.f32.gmra.mxu0 %v891
        %v913 = vpop.f32.mrf.mxu0
        %v914 = vadd.f32 0.0, %v913
        %915 = vdwg.mxu0
        %v917 = vsel %vm728, %v805, 0
        %v919 = vsel %vm893, %v721, 0
        %921 = vmatpush.msra.mxu0 0.0
        %922 = vmatpush.msra.mxu0 0.0
        %923 = vmatpush.msra.mxu0 0.0
        %924 = vmatpush.msra.mxu0 0.0
        %925 = vmatpush.msra.mxu0 0.0
        %926 = vmatpush.msra.mxu0 0.0
        %927 = vmatpush.msra.mxu0 0.0
        %928 = vmatpush.msra.mxu0 0.0
        %929 = vmatpush.msra.mxu0 0.0
        %930 = vmatpush.msra.mxu0 0.0
        %931 = vmatpush.msra.mxu0 0.0
        %932 = vmatpush.msra.mxu0 0.0
        %933 = vmatpush.msra.mxu0 0.0
        %934 = vmatpush.msra.mxu0 0.0
        %935 = vmatpush.msra.mxu0 0.0
        %936 = vmatpush.msra.mxu0 %v919
        %937 = vmatmul.f32.gmra.mxu0 %v917
        %v938 = vpop.f32.mrf.mxu0
        %v939 = vadd.f32 %v914, %v938
        %940 = vdwg.mxu0
        %941 = vrot.lane.b32.xlu0 %v719, 120
        %v942 = vpop.permute.xlu0 %941
        %943 = vrot.lane.b32.xlu0 %v719, 88
        %v944 = vpop.permute.xlu0 %943
        %v945 = vsel %vm728, %v942, 0
        %v947 = vsel %vm728, %v944, 0
        %949 = vmatpush.xpose.msra.mxu0 0.0
        %950 = vmatpush.xpose.msra.mxu0 0.0
        %951 = vmatpush.xpose.msra.mxu0 0.0
        %952 = vmatpush.xpose.msra.mxu0 0.0
        %953 = vmatpush.xpose.msra.mxu0 0.0
        %954 = vmatpush.xpose.msra.mxu0 0.0
        %955 = vmatpush.xpose.msra.mxu0 0.0
        %956 = vmatpush.xpose.msra.mxu0 0.0
        %957 = vmatpush.xpose.msra.mxu0 0.0
        %958 = vmatpush.xpose.msra.mxu0 0.0
        %959 = vmatpush.xpose.msra.mxu0 0.0
        %960 = vmatpush.xpose.msra.mxu0 0.0
        %961 = vmatpush.xpose.msra.mxu0 0.0
        %962 = vmatpush.xpose.msra.mxu0 0.0
        %963 = vmatpush.xpose.msra.mxu0 0.0
        %964 = vmatpush.xpose.msra.mxu0 %v947
        %965 = vmatmul.f32.gmra.mxu0 %v945
        %v966 = vpop.f32.mrf.mxu0
        %v967 = vadd.f32 0.0, %v966
        %968 = vdwg.mxu0
        %v969 = vmul.f32 %v967, 0.5
        %v970 = vadd.f32 %v969, %v649
        %v971 = vsel %vm755, %v970, -inf
        %972 = vmax.xlane.f32.xlu0 %v971
        %v973 = vpop.xlane.xlu0 %972
        %v974 = vsub.f32 %v970, %v973
        %v975 = vmul.f32 %v974, 1.442695
        %v976 = vpow.pop %v975
        %v977 = vsel %vm755, %v976, 0.0
        %978 = vadd.xlane.f32.xlu0 %v977
        %v979 = vpop.xlane.xlu0 %978
        %v980 = vrcp.pop %v979
        %v981 = vmul.f32 %v979, %v980
        %v982 = vsub.f32 1.0, %v981
        %v983 = vmul.f32 %v980, %v982
        %v984 = vadd.f32 %v980, %v983
        %vm985 = vweird.f32 %v979
        %vm986 = vweird.f32 %v980
        %vm987 = vmor %vm985, %vm986
        %v988 = vsel %vm987, %v980, %v984
        %v989 = vand.u32 2147483647, %v979
        %vm990 = vcmp.eq.f32.partialorder %v989, 8.507059e+37
        %v991 = vand.u32 %v979, 2147483648
        %v992 = vor.u32 1.1754944e-38, %v991
        %v993 = vsel %vm990, %v992, %v988
        %v994 = vmul.f32 %v976, %v993
        %v995 = vmul.f32 %v994, %v647
        %996 = vrot.lane.b32.xlu0 %v719, 56
        %v997 = vpop.permute.xlu0 %996
        %v1000 = vsel %vm755, %v995, 0
        %1002 = vmatpush.msra.mxu0 0.0
        %1003 = vmatpush.msra.mxu0 0.0
        %1004 = vmatpush.msra.mxu0 0.0
        %1005 = vmatpush.msra.mxu0 0.0
        %1006 = vmatpush.msra.mxu0 0.0
        %1007 = vmatpush.msra.mxu0 0.0
        %1008 = vmatpush.msra.mxu0 0.0
        %1009 = vmatpush.msra.mxu0 0.0
        %1010 = vmatpush.msra.mxu0 0.0
        %1011 = vmatpush.msra.mxu0 0.0
        %1012 = vmatpush.msra.mxu0 0.0
        %1013 = vmatpush.msra.mxu0 0.0
        %1014 = vmatpush.msra.mxu0 0.0
        %1015 = vmatpush.msra.mxu0 0.0
        %1016 = vmatpush.msra.mxu0 0.0
        %1017 = vmatpush.msra.mxu0 %v997
        %1018 = vmatmul.f32.gmra.mxu0 %v1000
        %v1019 = vpop.f32.mrf.mxu0
        %v1020 = vadd.f32 0.0, %v1019
        %1021 = vdwg.mxu0
        %v1023 = vsel %vm728, %v1020, 0
        %v1026 = vsel %vm893, %v722, 0
        %1028 = vmatpush.msra.mxu0 0.0
        %1029 = vmatpush.msra.mxu0 0.0
        %1030 = vmatpush.msra.mxu0 0.0
        %1031 = vmatpush.msra.mxu0 0.0
        %1032 = vmatpush.msra.mxu0 0.0
        %1033 = vmatpush.msra.mxu0 0.0
        %1034 = vmatpush.msra.mxu0 0.0
        %1035 = vmatpush.msra.mxu0 0.0
        %1036 = vmatpush.msra.mxu0 0.0
        %1037 = vmatpush.msra.mxu0 0.0
        %1038 = vmatpush.msra.mxu0 0.0
        %1039 = vmatpush.msra.mxu0 0.0
        %1040 = vmatpush.msra.mxu0 0.0
        %1041 = vmatpush.msra.mxu0 0.0
        %1042 = vmatpush.msra.mxu0 0.0
        %1043 = vmatpush.msra.mxu0 %v1026
        %1044 = vmatmul.f32.gmra.mxu0 %v1023
        %v1045 = vpop.f32.mrf.mxu0
        %v1046 = vadd.f32 0.0, %v1045
        %1047 = vdwg.mxu0
        %v1048 = vadd.f32 %v939, %v1046
        %1049 = vrot.lane.b32.xlu0 %v719, 116
        %v1050 = vpop.permute.xlu0 %1049
        %1051 = vrot.lane.b32.xlu0 %v719, 84
        %v1052 = vpop.permute.xlu0 %1051
        %v1053 = vsel %vm728, %v1050, 0
        %v1055 = vsel %vm728, %v1052, 0
        %1057 = vmatpush.xpose.msra.mxu0 0.0
        %1058 = vmatpush.xpose.msra.mxu0 0.0
        %1059 = vmatpush.xpose.msra.mxu0 0.0
        %1060 = vmatpush.xpose.msra.mxu0 0.0
        %1061 = vmatpush.xpose.msra.mxu0 0.0
        %1062 = vmatpush.xpose.msra.mxu0 0.0
        %1063 = vmatpush.xpose.msra.mxu0 0.0
        %1064 = vmatpush.xpose.msra.mxu0 0.0
        %1065 = vmatpush.xpose.msra.mxu0 0.0
        %1066 = vmatpush.xpose.msra.mxu0 0.0
        %1067 = vmatpush.xpose.msra.mxu0 0.0
        %1068 = vmatpush.xpose.msra.mxu0 0.0
        %1069 = vmatpush.xpose.msra.mxu0 0.0
        %1070 = vmatpush.xpose.msra.mxu0 0.0
        %1071 = vmatpush.xpose.msra.mxu0 0.0
        %1072 = vmatpush.xpose.msra.mxu0 %v1055
        %1073 = vmatmul.f32.gmra.mxu0 %v1053
        %v1074 = vpop.f32.mrf.mxu0
        %v1075 = vadd.f32 0.0, %v1074
        %1076 = vdwg.mxu0
        %v1077 = vmul.f32 %v1075, 0.5
        %v1078 = vadd.f32 %v1077, %v649
        %v1079 = vsel %vm755, %v1078, -inf
        %1080 = vmax.xlane.f32.xlu0 %v1079
        %v1081 = vpop.xlane.xlu0 %1080
        %v1082 = vsub.f32 %v1078, %v1081
        %v1083 = vmul.f32 %v1082, 1.442695
        %v1084 = vpow.pop %v1083
        %v1085 = vsel %vm755, %v1084, 0.0
        %1086 = vadd.xlane.f32.xlu0 %v1085
        %v1087 = vpop.xlane.xlu0 %1086
        %v1088 = vrcp.pop %v1087
        %v1089 = vmul.f32 %v1087, %v1088
        %v1090 = vsub.f32 1.0, %v1089
        %v1091 = vmul.f32 %v1088, %v1090
        %v1092 = vadd.f32 %v1088, %v1091
        %vm1093 = vweird.f32 %v1087
        %vm1094 = vweird.f32 %v1088
        %vm1095 = vmor %vm1093, %vm1094
        %v1096 = vsel %vm1095, %v1088, %v1092
        %v1097 = vand.u32 2147483647, %v1087
        %vm1098 = vcmp.eq.f32.partialorder %v1097, 8.507059e+37
        %v1099 = vand.u32 %v1087, 2147483648
        %v1100 = vor.u32 1.1754944e-38, %v1099
        %v1101 = vsel %vm1098, %v1100, %v1096
        %v1102 = vmul.f32 %v1084, %v1101
        %v1103 = vmul.f32 %v1102, %v647
        %1104 = vrot.lane.b32.xlu0 %v719, 52
        %v1105 = vpop.permute.xlu0 %1104
        %v1108 = vsel %vm755, %v1103, 0
        %1110 = vmatpush.msra.mxu0 0.0
        %1111 = vmatpush.msra.mxu0 0.0
        %1112 = vmatpush.msra.mxu0 0.0
        %1113 = vmatpush.msra.mxu0 0.0
        %1114 = vmatpush.msra.mxu0 0.0
        %1115 = vmatpush.msra.mxu0 0.0
        %1116 = vmatpush.msra.mxu0 0.0
        %1117 = vmatpush.msra.mxu0 0.0
        %1118 = vmatpush.msra.mxu0 0.0
        %1119 = vmatpush.msra.mxu0 0.0
        %1120 = vmatpush.msra.mxu0 0.0
        %1121 = vmatpush.msra.mxu0 0.0
        %1122 = vmatpush.msra.mxu0 0.0
        %1123 = vmatpush.msra.mxu0 0.0
        %1124 = vmatpush.msra.mxu0 0.0
        %1125 = vmatpush.msra.mxu0 %v1105
        %1126 = vmatmul.f32.gmra.mxu0 %v1108
        %v1127 = vpop.f32.mrf.mxu0
        %v1128 = vadd.f32 0.0, %v1127
        %1129 = vdwg.mxu0
        %v1130 = vrot.slane %v722, 4
        %v1132 = vsel %vm728, %v1128, 0
        %v1134 = vsel %vm893, %v1130, 0
        %1136 = vmatpush.msra.mxu0 0.0
        %1137 = vmatpush.msra.mxu0 0.0
        %1138 = vmatpush.msra.mxu0 0.0
        %1139 = vmatpush.msra.mxu0 0.0
        %1140 = vmatpush.msra.mxu0 0.0
        %1141 = vmatpush.msra.mxu0 0.0
        %1142 = vmatpush.msra.mxu0 0.0
        %1143 = vmatpush.msra.mxu0 0.0
        %1144 = vmatpush.msra.mxu0 0.0
        %1145 = vmatpush.msra.mxu0 0.0
        %1146 = vmatpush.msra.mxu0 0.0
        %1147 = vmatpush.msra.mxu0 0.0
        %1148 = vmatpush.msra.mxu0 0.0
        %1149 = vmatpush.msra.mxu0 0.0
        %1150 = vmatpush.msra.mxu0 0.0
        %1151 = vmatpush.msra.mxu0 %v1134
        %1152 = vmatmul.f32.gmra.mxu0 %v1132
        %v1153 = vpop.f32.mrf.mxu0
        %v1154 = vadd.f32 0.0, %v1153
        %1155 = vdwg.mxu0
        %v1156 = vadd.f32 %v1048, %v1154
        %1157 = vrot.lane.b32.xlu0 %v719, 112
        %v1158 = vpop.permute.xlu0 %1157
        %1159 = vrot.lane.b32.xlu0 %v719, 80
        %v1160 = vpop.permute.xlu0 %1159
        %v1161 = vsel %vm728, %v1158, 0
        %v1163 = vsel %vm728, %v1160, 0
        %1165 = vmatpush.xpose.msra.mxu0 0.0
        %1166 = vmatpush.xpose.msra.mxu0 0.0
        %1167 = vmatpush.xpose.msra.mxu0 0.0
        %1168 = vmatpush.xpose.msra.mxu0 0.0
        %1169 = vmatpush.xpose.msra.mxu0 0.0
        %1170 = vmatpush.xpose.msra.mxu0 0.0
        %1171 = vmatpush.xpose.msra.mxu0 0.0
        %1172 = vmatpush.xpose.msra.mxu0 0.0
        %1173 = vmatpush.xpose.msra.mxu0 0.0
        %1174 = vmatpush.xpose.msra.mxu0 0.0
        %1175 = vmatpush.xpose.msra.mxu0 0.0
        %1176 = vmatpush.xpose.msra.mxu0 0.0
        %1177 = vmatpush.xpose.msra.mxu0 0.0
        %1178 = vmatpush.xpose.msra.mxu0 0.0
        %1179 = vmatpush.xpose.msra.mxu0 0.0
        %1180 = vmatpush.xpose.msra.mxu0 %v1163
        %1181 = vmatmul.f32.gmra.mxu0 %v1161
        %v1182 = vpop.f32.mrf.mxu0
        %v1183 = vadd.f32 0.0, %v1182
        %1184 = vdwg.mxu0
        %v1185 = vmul.f32 %v1183, 0.5
        %v1186 = vadd.f32 %v1185, %v649
        %v1187 = vsel %vm755, %v1186, -inf
        %1188 = vmax.xlane.f32.xlu0 %v1187
        %v1189 = vpop.xlane.xlu0 %1188
        %v1190 = vsub.f32 %v1186, %v1189
        %v1191 = vmul.f32 %v1190, 1.442695
        %v1192 = vpow.pop %v1191
        %v1193 = vsel %vm755, %v1192, 0.0
        %1194 = vadd.xlane.f32.xlu0 %v1193
        %v1195 = vpop.xlane.xlu0 %1194
        %v1196 = vrcp.pop %v1195
        %v1197 = vmul.f32 %v1195, %v1196
        %v1198 = vsub.f32 1.0, %v1197
        %v1199 = vmul.f32 %v1196, %v1198
        %v1200 = vadd.f32 %v1196, %v1199
        %vm1201 = vweird.f32 %v1195
        %vm1202 = vweird.f32 %v1196
        %vm1203 = vmor %vm1201, %vm1202
        %v1204 = vsel %vm1203, %v1196, %v1200
        %v1205 = vand.u32 2147483647, %v1195
        %vm1206 = vcmp.eq.f32.partialorder %v1205, 8.507059e+37
        %v1207 = vand.u32 %v1195, 2147483648
        %v1208 = vor.u32 1.1754944e-38, %v1207
        %v1209 = vsel %vm1206, %v1208, %v1204
        %v1210 = vmul.f32 %v1192, %v1209
        %v1211 = vmul.f32 %v1210, %v647
        %1212 = vrot.lane.b32.xlu0 %v719, 48
        %v1213 = vpop.permute.xlu0 %1212
        %v1216 = vsel %vm755, %v1211, 0
        %1218 = vmatpush.msra.mxu0 0.0
        %1219 = vmatpush.msra.mxu0 0.0
        %1220 = vmatpush.msra.mxu0 0.0
        %1221 = vmatpush.msra.mxu0 0.0
        %1222 = vmatpush.msra.mxu0 0.0
        %1223 = vmatpush.msra.mxu0 0.0
        %1224 = vmatpush.msra.mxu0 0.0
        %1225 = vmatpush.msra.mxu0 0.0
        %1226 = vmatpush.msra.mxu0 0.0
        %1227 = vmatpush.msra.mxu0 0.0
        %1228 = vmatpush.msra.mxu0 0.0
        %1229 = vmatpush.msra.mxu0 0.0
        %1230 = vmatpush.msra.mxu0 0.0
        %1231 = vmatpush.msra.mxu0 0.0
        %1232 = vmatpush.msra.mxu0 0.0
        %1233 = vmatpush.msra.mxu0 %v1213
        %1234 = vmatmul.f32.gmra.mxu0 %v1216
        %v1235 = vpop.f32.mrf.mxu0
        %v1236 = vadd.f32 0.0, %v1235
        %1237 = vdwg.mxu0
        %v1239 = vsel %vm728, %v1236, 0
        %v1242 = vsel %vm893, %v723, 0
        %1244 = vmatpush.msra.mxu0 0.0
        %1245 = vmatpush.msra.mxu0 0.0
        %1246 = vmatpush.msra.mxu0 0.0
        %1247 = vmatpush.msra.mxu0 0.0
        %1248 = vmatpush.msra.mxu0 0.0
        %1249 = vmatpush.msra.mxu0 0.0
        %1250 = vmatpush.msra.mxu0 0.0
        %1251 = vmatpush.msra.mxu0 0.0
        %1252 = vmatpush.msra.mxu0 0.0
        %1253 = vmatpush.msra.mxu0 0.0
        %1254 = vmatpush.msra.mxu0 0.0
        %1255 = vmatpush.msra.mxu0 0.0
        %1256 = vmatpush.msra.mxu0 0.0
        %1257 = vmatpush.msra.mxu0 0.0
        %1258 = vmatpush.msra.mxu0 0.0
        %1259 = vmatpush.msra.mxu0 %v1242
        %1260 = vmatmul.f32.gmra.mxu0 %v1239
        %v1261 = vpop.f32.mrf.mxu0
        %v1262 = vadd.f32 0.0, %v1261
        %1263 = vdwg.mxu0
        %v1264 = vadd.f32 %v1156, %v1262
        %1265 = vrot.lane.b32.xlu0 %v719, 108
        %v1266 = vpop.permute.xlu0 %1265
        %1267 = vrot.lane.b32.xlu0 %v719, 76
        %v1268 = vpop.permute.xlu0 %1267
        %v1269 = vsel %vm728, %v1266, 0
        %v1271 = vsel %vm728, %v1268, 0
        %1273 = vmatpush.xpose.msra.mxu0 0.0
        %1274 = vmatpush.xpose.msra.mxu0 0.0
        %1275 = vmatpush.xpose.msra.mxu0 0.0
        %1276 = vmatpush.xpose.msra.mxu0 0.0
        %1277 = vmatpush.xpose.msra.mxu0 0.0
        %1278 = vmatpush.xpose.msra.mxu0 0.0
        %1279 = vmatpush.xpose.msra.mxu0 0.0
        %1280 = vmatpush.xpose.msra.mxu0 0.0
        %1281 = vmatpush.xpose.msra.mxu0 0.0
        %1282 = vmatpush.xpose.msra.mxu0 0.0
        %1283 = vmatpush.xpose.msra.mxu0 0.0
        %1284 = vmatpush.xpose.msra.mxu0 0.0
        %1285 = vmatpush.xpose.msra.mxu0 0.0
        %1286 = vmatpush.xpose.msra.mxu0 0.0
        %1287 = vmatpush.xpose.msra.mxu0 0.0
        %1288 = vmatpush.xpose.msra.mxu0 %v1271
        %1289 = vmatmul.f32.gmra.mxu0 %v1269
        %v1290 = vpop.f32.mrf.mxu0
        %v1291 = vadd.f32 0.0, %v1290
        %1292 = vdwg.mxu0
        %v1293 = vmul.f32 %v1291, 0.5
        %v1294 = vadd.f32 %v1293, %v649
        %v1295 = vsel %vm755, %v1294, -inf
        %1296 = vmax.xlane.f32.xlu0 %v1295
        %v1297 = vpop.xlane.xlu0 %1296
        %v1298 = vsub.f32 %v1294, %v1297
        %v1299 = vmul.f32 %v1298, 1.442695
        %v1300 = vpow.pop %v1299
        %v1301 = vsel %vm755, %v1300, 0.0
        %1302 = vadd.xlane.f32.xlu0 %v1301
        %v1303 = vpop.xlane.xlu0 %1302
        %v1304 = vrcp.pop %v1303
        %v1305 = vmul.f32 %v1303, %v1304
        %v1306 = vsub.f32 1.0, %v1305
        %v1307 = vmul.f32 %v1304, %v1306
        %v1308 = vadd.f32 %v1304, %v1307
        %vm1309 = vweird.f32 %v1303
        %vm1310 = vweird.f32 %v1304
        %vm1311 = vmor %vm1309, %vm1310
        %v1312 = vsel %vm1311, %v1304, %v1308
        %v1313 = vand.u32 2147483647, %v1303
        %vm1314 = vcmp.eq.f32.partialorder %v1313, 8.507059e+37
        %v1315 = vand.u32 %v1303, 2147483648
        %v1316 = vor.u32 1.1754944e-38, %v1315
        %v1317 = vsel %vm1314, %v1316, %v1312
        %v1318 = vmul.f32 %v1300, %v1317
        %v1319 = vmul.f32 %v1318, %v647
        %1320 = vrot.lane.b32.xlu0 %v719, 44
        %v1321 = vpop.permute.xlu0 %1320
        %v1324 = vsel %vm755, %v1319, 0
        %1326 = vmatpush.msra.mxu0 0.0
        %1327 = vmatpush.msra.mxu0 0.0
        %1328 = vmatpush.msra.mxu0 0.0
        %1329 = vmatpush.msra.mxu0 0.0
        %1330 = vmatpush.msra.mxu0 0.0
        %1331 = vmatpush.msra.mxu0 0.0
        %1332 = vmatpush.msra.mxu0 0.0
        %1333 = vmatpush.msra.mxu0 0.0
        %1334 = vmatpush.msra.mxu0 0.0
        %1335 = vmatpush.msra.mxu0 0.0
        %1336 = vmatpush.msra.mxu0 0.0
        %1337 = vmatpush.msra.mxu0 0.0
        %1338 = vmatpush.msra.mxu0 0.0
        %1339 = vmatpush.msra.mxu0 0.0
        %1340 = vmatpush.msra.mxu0 0.0
        %1341 = vmatpush.msra.mxu0 %v1321
        %1342 = vmatmul.f32.gmra.mxu0 %v1324
        %v1343 = vpop.f32.mrf.mxu0
        %v1344 = vadd.f32 0.0, %v1343
        %1345 = vdwg.mxu0
        %v1346 = vrot.slane %v723, 4
        %v1348 = vsel %vm728, %v1344, 0
        %v1350 = vsel %vm893, %v1346, 0
        %1352 = vmatpush.msra.mxu0 0.0
        %1353 = vmatpush.msra.mxu0 0.0
        %1354 = vmatpush.msra.mxu0 0.0
        %1355 = vmatpush.msra.mxu0 0.0
        %1356 = vmatpush.msra.mxu0 0.0
        %1357 = vmatpush.msra.mxu0 0.0
        %1358 = vmatpush.msra.mxu0 0.0
        %1359 = vmatpush.msra.mxu0 0.0
        %1360 = vmatpush.msra.mxu0 0.0
        %1361 = vmatpush.msra.mxu0 0.0
        %1362 = vmatpush.msra.mxu0 0.0
        %1363 = vmatpush.msra.mxu0 0.0
        %1364 = vmatpush.msra.mxu0 0.0
        %1365 = vmatpush.msra.mxu0 0.0
        %1366 = vmatpush.msra.mxu0 0.0
        %1367 = vmatpush.msra.mxu0 %v1350
        %1368 = vmatmul.f32.gmra.mxu0 %v1348
        %v1369 = vpop.f32.mrf.mxu0
        %v1370 = vadd.f32 0.0, %v1369
        %1371 = vdwg.mxu0
        %v1372 = vadd.f32 %v1264, %v1370
        %1373 = vrot.lane.b32.xlu0 %v719, 104
        %v1374 = vpop.permute.xlu0 %1373
        %1375 = vrot.lane.b32.xlu0 %v719, 72
        %v1376 = vpop.permute.xlu0 %1375
        %v1377 = vsel %vm728, %v1374, 0
        %v1379 = vsel %vm728, %v1376, 0
        %1381 = vmatpush.xpose.msra.mxu0 0.0
        %1382 = vmatpush.xpose.msra.mxu0 0.0
        %1383 = vmatpush.xpose.msra.mxu0 0.0
        %1384 = vmatpush.xpose.msra.mxu0 0.0
        %1385 = vmatpush.xpose.msra.mxu0 0.0
        %1386 = vmatpush.xpose.msra.mxu0 0.0
        %1387 = vmatpush.xpose.msra.mxu0 0.0
        %1388 = vmatpush.xpose.msra.mxu0 0.0
        %1389 = vmatpush.xpose.msra.mxu0 0.0
        %1390 = vmatpush.xpose.msra.mxu0 0.0
        %1391 = vmatpush.xpose.msra.mxu0 0.0
        %1392 = vmatpush.xpose.msra.mxu0 0.0
        %1393 = vmatpush.xpose.msra.mxu0 0.0
        %1394 = vmatpush.xpose.msra.mxu0 0.0
        %1395 = vmatpush.xpose.msra.mxu0 0.0
        %1396 = vmatpush.xpose.msra.mxu0 %v1379
        %1397 = vmatmul.f32.gmra.mxu0 %v1377
        %v1398 = vpop.f32.mrf.mxu0
        %v1399 = vadd.f32 0.0, %v1398
        %1400 = vdwg.mxu0
        %v1401 = vmul.f32 %v1399, 0.5
        %v1402 = vadd.f32 %v1401, %v649
        %v1403 = vsel %vm755, %v1402, -inf
        %1404 = vmax.xlane.f32.xlu0 %v1403
        %v1405 = vpop.xlane.xlu0 %1404
        %v1406 = vsub.f32 %v1402, %v1405
        %v1407 = vmul.f32 %v1406, 1.442695
        %v1408 = vpow.pop %v1407
        %v1409 = vsel %vm755, %v1408, 0.0
        %1410 = vadd.xlane.f32.xlu0 %v1409
        %v1411 = vpop.xlane.xlu0 %1410
        %v1412 = vrcp.pop %v1411
        %v1413 = vmul.f32 %v1411, %v1412
        %v1414 = vsub.f32 1.0, %v1413
        %v1415 = vmul.f32 %v1412, %v1414
        %v1416 = vadd.f32 %v1412, %v1415
        %vm1417 = vweird.f32 %v1411
        %vm1418 = vweird.f32 %v1412
        %vm1419 = vmor %vm1417, %vm1418
        %v1420 = vsel %vm1419, %v1412, %v1416
        %v1421 = vand.u32 2147483647, %v1411
        %vm1422 = vcmp.eq.f32.partialorder %v1421, 8.507059e+37
        %v1423 = vand.u32 %v1411, 2147483648
        %v1424 = vor.u32 1.1754944e-38, %v1423
        %v1425 = vsel %vm1422, %v1424, %v1420
        %v1426 = vmul.f32 %v1408, %v1425
        %v1427 = vmul.f32 %v1426, %v647
        %1428 = vrot.lane.b32.xlu0 %v719, 40
        %v1429 = vpop.permute.xlu0 %1428
        %v1432 = vsel %vm755, %v1427, 0
        %1434 = vmatpush.msra.mxu0 0.0
        %1435 = vmatpush.msra.mxu0 0.0
        %1436 = vmatpush.msra.mxu0 0.0
        %1437 = vmatpush.msra.mxu0 0.0
        %1438 = vmatpush.msra.mxu0 0.0
        %1439 = vmatpush.msra.mxu0 0.0
        %1440 = vmatpush.msra.mxu0 0.0
        %1441 = vmatpush.msra.mxu0 0.0
        %1442 = vmatpush.msra.mxu0 0.0
        %1443 = vmatpush.msra.mxu0 0.0
        %1444 = vmatpush.msra.mxu0 0.0
        %1445 = vmatpush.msra.mxu0 0.0
        %1446 = vmatpush.msra.mxu0 0.0
        %1447 = vmatpush.msra.mxu0 0.0
        %1448 = vmatpush.msra.mxu0 0.0
        %1449 = vmatpush.msra.mxu0 %v1429
        %1450 = vmatmul.f32.gmra.mxu0 %v1432
        %v1451 = vpop.f32.mrf.mxu0
        %v1452 = vadd.f32 0.0, %v1451
        %1453 = vdwg.mxu0
        %v1455 = vsel %vm728, %v1452, 0
        %v1458 = vsel %vm893, %v724, 0
        %1460 = vmatpush.msra.mxu0 0.0
        %1461 = vmatpush.msra.mxu0 0.0
        %1462 = vmatpush.msra.mxu0 0.0
        %1463 = vmatpush.msra.mxu0 0.0
        %1464 = vmatpush.msra.mxu0 0.0
        %1465 = vmatpush.msra.mxu0 0.0
        %1466 = vmatpush.msra.mxu0 0.0
        %1467 = vmatpush.msra.mxu0 0.0
        %1468 = vmatpush.msra.mxu0 0.0
        %1469 = vmatpush.msra.mxu0 0.0
        %1470 = vmatpush.msra.mxu0 0.0
        %1471 = vmatpush.msra.mxu0 0.0
        %1472 = vmatpush.msra.mxu0 0.0
        %1473 = vmatpush.msra.mxu0 0.0
        %1474 = vmatpush.msra.mxu0 0.0
        %1475 = vmatpush.msra.mxu0 %v1458
        %1476 = vmatmul.f32.gmra.mxu0 %v1455
        %v1477 = vpop.f32.mrf.mxu0
        %v1478 = vadd.f32 0.0, %v1477
        %1479 = vdwg.mxu0
        %v1480 = vadd.f32 %v1372, %v1478
        %1481 = vrot.lane.b32.xlu0 %v719, 100
        %v1482 = vpop.permute.xlu0 %1481
        %1483 = vrot.lane.b32.xlu0 %v719, 68
        %v1484 = vpop.permute.xlu0 %1483
        %v1485 = vsel %vm728, %v1482, 0
        %v1487 = vsel %vm728, %v1484, 0
        %1489 = vmatpush.xpose.msra.mxu0 0.0
        %1490 = vmatpush.xpose.msra.mxu0 0.0
        %1491 = vmatpush.xpose.msra.mxu0 0.0
        %1492 = vmatpush.xpose.msra.mxu0 0.0
        %1493 = vmatpush.xpose.msra.mxu0 0.0
        %1494 = vmatpush.xpose.msra.mxu0 0.0
        %1495 = vmatpush.xpose.msra.mxu0 0.0
        %1496 = vmatpush.xpose.msra.mxu0 0.0
        %1497 = vmatpush.xpose.msra.mxu0 0.0
        %1498 = vmatpush.xpose.msra.mxu0 0.0
        %1499 = vmatpush.xpose.msra.mxu0 0.0
        %1500 = vmatpush.xpose.msra.mxu0 0.0
        %1501 = vmatpush.xpose.msra.mxu0 0.0
        %1502 = vmatpush.xpose.msra.mxu0 0.0
        %1503 = vmatpush.xpose.msra.mxu0 0.0
        %1504 = vmatpush.xpose.msra.mxu0 %v1487
        %1505 = vmatmul.f32.gmra.mxu0 %v1485
        %v1506 = vpop.f32.mrf.mxu0
        %v1507 = vadd.f32 0.0, %v1506
        %1508 = vdwg.mxu0
        %v1509 = vmul.f32 %v1507, 0.5
        %v1510 = vadd.f32 %v1509, %v649
        %v1511 = vsel %vm755, %v1510, -inf
        %1512 = vmax.xlane.f32.xlu0 %v1511
        %v1513 = vpop.xlane.xlu0 %1512
        %v1514 = vsub.f32 %v1510, %v1513
        %v1515 = vmul.f32 %v1514, 1.442695
        %v1516 = vpow.pop %v1515
        %v1517 = vsel %vm755, %v1516, 0.0
        %1518 = vadd.xlane.f32.xlu0 %v1517
        %v1519 = vpop.xlane.xlu0 %1518
        %v1520 = vrcp.pop %v1519
        %v1521 = vmul.f32 %v1519, %v1520
        %v1522 = vsub.f32 1.0, %v1521
        %v1523 = vmul.f32 %v1520, %v1522
        %v1524 = vadd.f32 %v1520, %v1523
        %vm1525 = vweird.f32 %v1519
        %vm1526 = vweird.f32 %v1520
        %vm1527 = vmor %vm1525, %vm1526
        %v1528 = vsel %vm1527, %v1520, %v1524
        %v1529 = vand.u32 2147483647, %v1519
        %vm1530 = vcmp.eq.f32.partialorder %v1529, 8.507059e+37
        %v1531 = vand.u32 %v1519, 2147483648
        %v1532 = vor.u32 1.1754944e-38, %v1531
        %v1533 = vsel %vm1530, %v1532, %v1528
        %v1534 = vmul.f32 %v1516, %v1533
        %v1535 = vmul.f32 %v1534, %v647
        %1536 = vrot.lane.b32.xlu0 %v719, 36
        %v1537 = vpop.permute.xlu0 %1536
        %v1540 = vsel %vm755, %v1535, 0
        %1542 = vmatpush.msra.mxu0 0.0
        %1543 = vmatpush.msra.mxu0 0.0
        %1544 = vmatpush.msra.mxu0 0.0
        %1545 = vmatpush.msra.mxu0 0.0
        %1546 = vmatpush.msra.mxu0 0.0
        %1547 = vmatpush.msra.mxu0 0.0
        %1548 = vmatpush.msra.mxu0 0.0
        %1549 = vmatpush.msra.mxu0 0.0
        %1550 = vmatpush.msra.mxu0 0.0
        %1551 = vmatpush.msra.mxu0 0.0
        %1552 = vmatpush.msra.mxu0 0.0
        %1553 = vmatpush.msra.mxu0 0.0
        %1554 = vmatpush.msra.mxu0 0.0
        %1555 = vmatpush.msra.mxu0 0.0
        %1556 = vmatpush.msra.mxu0 0.0
        %1557 = vmatpush.msra.mxu0 %v1537
        %1558 = vmatmul.f32.gmra.mxu0 %v1540
        %v1559 = vpop.f32.mrf.mxu0
        %v1560 = vadd.f32 0.0, %v1559
        %1561 = vdwg.mxu0
        %v1562 = vrot.slane %v724, 4
        %v1564 = vsel %vm728, %v1560, 0
        %v1566 = vsel %vm893, %v1562, 0
        %1568 = vmatpush.msra.mxu0 0.0
        %1569 = vmatpush.msra.mxu0 0.0
        %1570 = vmatpush.msra.mxu0 0.0
        %1571 = vmatpush.msra.mxu0 0.0
        %1572 = vmatpush.msra.mxu0 0.0
        %1573 = vmatpush.msra.mxu0 0.0
        %1574 = vmatpush.msra.mxu0 0.0
        %1575 = vmatpush.msra.mxu0 0.0
        %1576 = vmatpush.msra.mxu0 0.0
        %1577 = vmatpush.msra.mxu0 0.0
        %1578 = vmatpush.msra.mxu0 0.0
        %1579 = vmatpush.msra.mxu0 0.0
        %1580 = vmatpush.msra.mxu0 0.0
        %1581 = vmatpush.msra.mxu0 0.0
        %1582 = vmatpush.msra.mxu0 0.0
        %1583 = vmatpush.msra.mxu0 %v1566
        %1584 = vmatmul.f32.gmra.mxu0 %v1564
        %v1585 = vpop.f32.mrf.mxu0
        %v1586 = vadd.f32 0.0, %v1585
        %1587 = vdwg.mxu0
        %v1588 = vadd.f32 %v1480, %v1586
        %v1589 = vld [vmem:[%s7] sm:$0x1]
        %v1591 = vperm.slane %v1589, 0
        %v1593 = vadd.f32 %v1588, %v1591
        %v1594 = vadd.f32 %v1593, %v1593
        %v1595 = vld [vmem:[%s8] sm:$0x1]
        %v1596 = vld [vmem:[%s9] sm:$0x1]
        %v1597 = vsel %vm652, %v1594, 0.0
        %1598 = vadd.xlane.f32.xlu0 %v1597
        %v1599 = vpop.xlane.xlu0 %1598
        %v1600 = vmul.f32 %v1599, %v662
        %v1601 = vsub.f32 %v1594, %v1600
        %v1602 = vmul.f32 %v1601, %v1601
        %v1603 = vsel %vm652, %v1602, 0.0
        %1604 = vadd.xlane.f32.xlu0 %v1603
        %v1605 = vpop.xlane.xlu0 %1604
        %v1606 = vmul.f32 %v1605, %v662
        %v1607 = vadd.f32 %v1606, 1e-05
        %v1608 = vrsqrt.pop %v1607
        %v1609 = vmul.f32 %v1608, %v1607
        %v1610 = vmul.f32 %v1609, %v1608
        %v1611 = vmul.f32 0.5, %v1610
        %v1612 = vsub.f32 1.5, %v1611
        %v1613 = vmul.f32 %v1608, %v1612
        %vm1614 = vweird.f32 %v1607
        %vm1615 = vweird.f32 %v1608
        %vm1616 = vmor %vm1614, %vm1615
        %v1617 = vsel %vm1616, %v1608, %v1613
        %v1618 = vmul.f32 %v1601, %v1617
        %v1620 = vperm.slane %v1595, 0
        %v1622 = vmul.f32 %v1618, %v1620
        %v1624 = vperm.slane %v1596, 0
        %v1626 = vadd.f32 %v1622, %v1624
        %v1627 = vld [vmem:[%s10] sm:$0xff]
        %v1628 = vld [vmem:[%s10 + $0x8] sm:$0xff]
        %v1629 = vld [vmem:[%s10 + $0x10] sm:$0xff]
        %v1630 = vld [vmem:[%s10 + $0x18] sm:$0xff]
        %v1631 = vld [vmem:[%s11] sm:$0x1]
        %v1633 = vperm.slane %v1631, 0
        %v1636 = vsel %vm652, %v1626, 0
        %1638 = vmatpush.msra.mxu0 0.0
        %1639 = vmatpush.msra.mxu0 0.0
        %1640 = vmatpush.msra.mxu0 0.0
        %1641 = vmatpush.msra.mxu0 0.0
        %1642 = vmatpush.msra.mxu0 0.0
        %1643 = vmatpush.msra.mxu0 0.0
        %1644 = vmatpush.msra.mxu0 0.0
        %1645 = vmatpush.msra.mxu0 0.0
        %1646 = vmatpush.msra.mxu0 0.0
        %1647 = vmatpush.msra.mxu0 0.0
        %1648 = vmatpush.msra.mxu0 0.0
        %1649 = vmatpush.msra.mxu0 0.0
        %1650 = vmatpush.msra.mxu0 %v1630
        %1651 = vmatpush.msra.mxu0 %v1629
        %1652 = vmatpush.msra.mxu0 %v1628
        %1653 = vmatpush.msra.mxu0 %v1627
        %1654 = vmatmul.f32.gmra.mxu0 %v1636
        %v1655 = vpop.f32.mrf.mxu0
        %v1656 = vadd.f32 %v1633, %v1655
        %1657 = vdwg.mxu0
        %v1658 = vmax.f32 %v1656, 0.0
        %vm1659 = vcmask 589312
        %v1660 = vsel %vm1659, %v1656, -inf
        %1661 = vmax.xlane.f32.xlu0 %v1660
        %v1662 = vpop.xlane.xlu0 %1661
        %v1663 = vsub.f32 %v1656, %v1662
        %v1664 = vmul.f32 %v1663, 1.442695
        %v1665 = vpow.pop %v1664
        %1667 = vrot.lane.b32.xlu0 %v1665, 64
        %v1668 = vpop.permute.xlu0 %1667
        %v1670 = vsel %vm755, %v1668, 0.0
        %1671 = vadd.xlane.f32.xlu0 %v1670
        %v1672 = vpop.xlane.xlu0 %1671
        %v1673 = vrcp.pop %v1672
        %v1674 = vmul.f32 %v1672, %v1673
        %v1675 = vsub.f32 1.0, %v1674
        %v1676 = vmul.f32 %v1673, %v1675
        %v1677 = vadd.f32 %v1673, %v1676
        %vm1678 = vweird.f32 %v1672
        %vm1679 = vweird.f32 %v1673
        %vm1680 = vmor %vm1678, %vm1679
        %v1681 = vsel %vm1680, %v1673, %v1677
        %v1682 = vand.u32 2147483647, %v1672
        %vm1683 = vcmp.eq.f32.partialorder %v1682, 8.507059e+37
        %v1684 = vand.u32 %v1672, 2147483648
        %v1685 = vor.u32 1.1754944e-38, %v1684
        %v1686 = vsel %vm1683, %v1685, %v1681
        %v1687 = vmul.f32 %v1665, %v1686
        %v1688 = vsel %vm1659, %v1687, -inf
        %1689 = vmax.xlane.f32.xlu0 %v1688
        %v1690 = vpop.xlane.xlu0 %1689
        %v1691 = vlaneseq
        %v1692 = vand.u32 %v1691, 127
        %vm1693 = vcmp.ge.f32.partialorder %v1687, %v1690
        %1694 = vrot.lane.b32.xlu0 %v1692, 64
        %v1695 = vpop.permute.xlu0 %1694
        %v1696 = vsel %vm1693, %v1695, 8
        %v1697 = vsel %vm1659, %v1696, 2147483647
        %v1698 = vand.u32 %v1697, 65535
        %v1699 = vshra.s32 %v1697, 16
        %v1700 = vcvt.s32.f32 %v1698
        %v1701 = vcvt.s32.f32 %v1699
        %1702 = vmin.xlane.f32.xlu0 %v1701
        %v1703 = vpop.xlane.xlu0 %1702
        %vm1704 = vcmp.eq.f32.partialorder %v1701, %v1703
        %v1705 = vsel %vm1704, %v1700, inf
        %1706 = vmin.xlane.f32.xlu0 %v1705
        %v1707 = vpop.xlane.xlu0 %1706
        %v1708 = vcvt.f32.s32 %v1707
        %v1709 = vcvt.f32.s32 %v1703
        %v1710 = vshll.u32 %v1709, 16
        %v1711 = vadd.s32 %v1710, %v1708
        %vm1712 = vcmp.eq.s32.totalorder %v1692, %v1711
        %v1713 = vsel %vm1712, 1, 0
        %v1714 = vcvt.s32.f32 %v1713
        %v1715 = vsel %vm755, %v1714, 0.0
        %v1716 = vrot.slane %v1715, 4
        %v1717 = vadd.f32 %v1715, %v1716
        %v1718 = vrot.slane %v1717, 2
        %v1719 = vadd.f32 %v1717, %v1718
        %v1720 = vrot.slane %v1719, 1
        %v1721 = vadd.f32 %v1719, %v1720
        %v1722 = vsel %vm1659, %v1687, 0.0
        %v1723 = vrot.slane %v1722, 4
        %v1724 = vadd.f32 %v1722, %v1723
        %v1725 = vrot.slane %v1724, 2
        %v1726 = vadd.f32 %v1724, %v1725
        %v1727 = vrot.slane %v1726, 1
        %v1728 = vadd.f32 %v1726, %v1727
        %v1729 = vld [vmem:[%s12] sm:$0xff]
        %v1730 = vld [vmem:[%s12 + $0x8] sm:$0xff]
        %v1731 = vld [vmem:[%s12 + $0x10] sm:$0xff]
        %v1732 = vld [vmem:[%s12 + $0x18] sm:$0xff]
        %v1733 = vld [vmem:[%s12 + $0x20] sm:$0xff]
        %v1734 = vld [vmem:[%s12 + $0x28] sm:$0xff]
        %v1735 = vld [vmem:[%s12 + $0x30] sm:$0xff]
        %v1736 = vld [vmem:[%s12 + $0x38] sm:$0xff]
        %v1737 = vld [vmem:[%s13] sm:$0x1]
        %v1739 = vperm.slane %v1737, 0
        %vm1741 = vcmask 523264
        %v1743 = vsel %vm1741, %v1658, 0
        %1745 = vmatpush.msra.mxu0 0.0
        %1746 = vmatpush.msra.mxu0 0.0
        %1747 = vmatpush.msra.mxu0 0.0
        %1748 = vmatpush.msra.mxu0 0.0
        %1749 = vmatpush.msra.mxu0 0.0
        %1750 = vmatpush.msra.mxu0 0.0
        %1751 = vmatpush.msra.mxu0 0.0
        %1752 = vmatpush.msra.mxu0 0.0
        %1753 = vmatpush.msra.mxu0 %v1736
        %1754 = vmatpush.msra.mxu0 %v1735
        %1755 = vmatpush.msra.mxu0 %v1734
        %1756 = vmatpush.msra.mxu0 %v1733
        %1757 = vmatpush.msra.mxu0 %v1732
        %1758 = vmatpush.msra.mxu0 %v1731
        %1759 = vmatpush.msra.mxu0 %v1730
        %1760 = vmatpush.msra.mxu0 %v1729
        %1761 = vmatmul.f32.gmra.mxu0 %v1743
        %v1762 = vpop.f32.mrf.mxu0
        %v1763 = vadd.f32 %v1739, %v1762
        %1764 = vdwg.mxu0
        %v1765 = vsel %vm652, %v1763, -inf
        %1766 = vmax.xlane.f32.xlu0 %v1765
        %v1767 = vpop.xlane.xlu0 %1766
        %v1768 = vsub.f32 %v1763, %v1767
        %v1769 = vmul.f32 %v1768, 1.442695
        %v1770 = vpow.pop %v1769
        %v1771 = vsel %vm652, %v1770, 0.0
        %1772 = vadd.xlane.f32.xlu0 %v1771
        %v1773 = vpop.xlane.xlu0 %1772
        %v1774 = vrcp.pop %v1773
        %v1775 = vmul.f32 %v1773, %v1774
        %v1776 = vsub.f32 1.0, %v1775
        %v1777 = vmul.f32 %v1774, %v1776
        %v1778 = vadd.f32 %v1774, %v1777
        %vm1779 = vweird.f32 %v1773
        %vm1780 = vweird.f32 %v1774
        %vm1781 = vmor %vm1779, %vm1780
        %v1782 = vsel %vm1781, %v1774, %v1778
        %v1783 = vand.u32 2147483647, %v1773
        %vm1784 = vcmp.eq.f32.partialorder %v1783, 8.507059e+37
        %v1785 = vand.u32 %v1773, 2147483648
        %v1786 = vor.u32 1.1754944e-38, %v1785
        %v1787 = vsel %vm1784, %v1786, %v1782
        %v1788 = vmul.f32 %v1770, %v1787
        %v1789 = vmul.f32 %v1788, %v1690
        %v1790 = vadd.f32 %v1626, %v1789
        %s1791 = scalar_lea.vmem %s2, 1
        %v1792 = vld [vmem:[%s1791] sm:$0x1]
        %s1793 = scalar_lea.vmem %s3, 1
        %v1794 = vld [vmem:[%s1793] sm:$0x1]
        %v1795 = vsel %vm652, %v1790, 0.0
        %1796 = vadd.xlane.f32.xlu0 %v1795
        %v1797 = vpop.xlane.xlu0 %1796
        %v1798 = vmul.f32 %v1797, %v662
        %v1799 = vsub.f32 %v1790, %v1798
        %v1800 = vmul.f32 %v1799, %v1799
        %v1801 = vsel %vm652, %v1800, 0.0
        %1802 = vadd.xlane.f32.xlu0 %v1801
        %v1803 = vpop.xlane.xlu0 %1802
        %v1804 = vmul.f32 %v1803, %v662
        %v1805 = vadd.f32 %v1804, 1e-05
        %v1806 = vrsqrt.pop %v1805
        %v1807 = vmul.f32 %v1806, %v1805
        %v1808 = vmul.f32 %v1807, %v1806
        %v1809 = vmul.f32 0.5, %v1808
        %v1810 = vsub.f32 1.5, %v1809
        %v1811 = vmul.f32 %v1806, %v1810
        %vm1812 = vweird.f32 %v1805
        %vm1813 = vweird.f32 %v1806
        %vm1814 = vmor %vm1812, %vm1813
        %v1815 = vsel %vm1814, %v1806, %v1811
        %v1816 = vmul.f32 %v1799, %v1815
        %v1818 = vperm.slane %v1792, 0
        %v1820 = vmul.f32 %v1816, %v1818
        %v1822 = vperm.slane %v1794, 0
        %v1824 = vadd.f32 %v1820, %v1822
        %s1825 = scalar_lea.vmem %s4, 32
        %v1826 = vld [vmem:[%s1825] sm:$0xff]
        %v1827 = vld [vmem:[%s1825 + $0x8] sm:$0xff]
        %v1828 = vld [vmem:[%s1825 + $0x10] sm:$0xff]
        %v1829 = vld [vmem:[%s1825 + $0x18] sm:$0xff]
        %s1830 = scalar_lea.vmem %s5, 1
        %v1831 = vld [vmem:[%s1830] sm:$0x1]
        %v1833 = vperm.slane %v1831, 0
        %v1836 = vsel %vm652, %v1824, 0
        %1838 = vmatpush.msra.mxu0 0.0
        %1839 = vmatpush.msra.mxu0 0.0
        %1840 = vmatpush.msra.mxu0 0.0
        %1841 = vmatpush.msra.mxu0 0.0
        %1842 = vmatpush.msra.mxu0 0.0
        %1843 = vmatpush.msra.mxu0 0.0
        %1844 = vmatpush.msra.mxu0 0.0
        %1845 = vmatpush.msra.mxu0 0.0
        %1846 = vmatpush.msra.mxu0 0.0
        %1847 = vmatpush.msra.mxu0 0.0
        %1848 = vmatpush.msra.mxu0 0.0
        %1849 = vmatpush.msra.mxu0 0.0
        %1850 = vmatpush.msra.mxu0 %v1829
        %1851 = vmatpush.msra.mxu0 %v1828
        %1852 = vmatpush.msra.mxu0 %v1827
        %1853 = vmatpush.msra.mxu0 %v1826
        %1854 = vmatmul.f32.gmra.mxu0 %v1836
        %v1855 = vpop.f32.mrf.mxu0
        %v1856 = vadd.f32 %v1833, %v1855
        %1857 = vdwg.mxu0
        %s1858 = scalar_lea.vmem %s6, 32
        %v1859 = vld [vmem:[%s1858] sm:$0xff]
        %v1860 = vld [vmem:[%s1858 + $0x8] sm:$0xff]
        %v1861 = vld [vmem:[%s1858 + $0x10] sm:$0xff]
        %v1862 = vld [vmem:[%s1858 + $0x18] sm:$0xff]
        %1864 = vrot.lane.b32.xlu0 %v1856, 96
        %v1865 = vpop.permute.xlu0 %1864
        %v1866 = vsel %vm728, %v1856, 0
        %v1868 = vsel %vm728, %v1865, 0
        %1870 = vmatpush.xpose.msra.mxu0 0.0
        %1871 = vmatpush.xpose.msra.mxu0 0.0
        %1872 = vmatpush.xpose.msra.mxu0 0.0
        %1873 = vmatpush.xpose.msra.mxu0 0.0
        %1874 = vmatpush.xpose.msra.mxu0 0.0
        %1875 = vmatpush.xpose.msra.mxu0 0.0
        %1876 = vmatpush.xpose.msra.mxu0 0.0
        %1877 = vmatpush.xpose.msra.mxu0 0.0
        %1878 = vmatpush.xpose.msra.mxu0 0.0
        %1879 = vmatpush.xpose.msra.mxu0 0.0
        %1880 = vmatpush.xpose.msra.mxu0 0.0
        %1881 = vmatpush.xpose.msra.mxu0 0.0
        %1882 = vmatpush.xpose.msra.mxu0 0.0
        %1883 = vmatpush.xpose.msra.mxu0 0.0
        %1884 = vmatpush.xpose.msra.mxu0 0.0
        %1885 = vmatpush.xpose.msra.mxu0 %v1868
        %1886 = vmatmul.f32.gmra.mxu0 %v1866
        %v1887 = vpop.f32.mrf.mxu0
        %v1888 = vadd.f32 0.0, %v1887
        %1889 = vdwg.mxu0
        %v1890 = vmul.f32 %v1888, 0.5
        %v1891 = vadd.f32 %v1890, %v649
        %v1892 = vsel %vm755, %v1891, -inf
        %1893 = vmax.xlane.f32.xlu0 %v1892
        %v1894 = vpop.xlane.xlu0 %1893
        %v1895 = vsub.f32 %v1891, %v1894
        %v1896 = vmul.f32 %v1895, 1.442695
        %v1897 = vpow.pop %v1896
        %v1898 = vsel %vm755, %v1897, 0.0
        %1899 = vadd.xlane.f32.xlu0 %v1898
        %v1900 = vpop.xlane.xlu0 %1899
        %v1901 = vrcp.pop %v1900
        %v1902 = vmul.f32 %v1900, %v1901
        %v1903 = vsub.f32 1.0, %v1902
        %v1904 = vmul.f32 %v1901, %v1903
        %v1905 = vadd.f32 %v1901, %v1904
        %vm1906 = vweird.f32 %v1900
        %vm1907 = vweird.f32 %v1901
        %vm1908 = vmor %vm1906, %vm1907
        %v1909 = vsel %vm1908, %v1901, %v1905
        %v1910 = vand.u32 2147483647, %v1900
        %vm1911 = vcmp.eq.f32.partialorder %v1910, 8.507059e+37
        %v1912 = vand.u32 %v1900, 2147483648
        %v1913 = vor.u32 1.1754944e-38, %v1912
        %v1914 = vsel %vm1911, %v1913, %v1909
        %v1915 = vmul.f32 %v1897, %v1914
        %v1916 = vmul.f32 %v1915, %v647
        %1917 = vrot.lane.b32.xlu0 %v1856, 64
        %v1918 = vpop.permute.xlu0 %1917
        %v1921 = vsel %vm755, %v1916, 0
        %1923 = vmatpush.msra.mxu0 0.0
        %1924 = vmatpush.msra.mxu0 0.0
        %1925 = vmatpush.msra.mxu0 0.0
        %1926 = vmatpush.msra.mxu0 0.0
        %1927 = vmatpush.msra.mxu0 0.0
        %1928 = vmatpush.msra.mxu0 0.0
        %1929 = vmatpush.msra.mxu0 0.0
        %1930 = vmatpush.msra.mxu0 0.0
        %1931 = vmatpush.msra.mxu0 0.0
        %1932 = vmatpush.msra.mxu0 0.0
        %1933 = vmatpush.msra.mxu0 0.0
        %1934 = vmatpush.msra.mxu0 0.0
        %1935 = vmatpush.msra.mxu0 0.0
        %1936 = vmatpush.msra.mxu0 0.0
        %1937 = vmatpush.msra.mxu0 0.0
        %1938 = vmatpush.msra.mxu0 %v1918
        %1939 = vmatmul.f32.gmra.mxu0 %v1921
        %v1940 = vpop.f32.mrf.mxu0
        %v1941 = vadd.f32 0.0, %v1940
        %1942 = vdwg.mxu0
        %1943 = vrot.lane.b32.xlu0 %v1856, 124
        %v1944 = vpop.permute.xlu0 %1943
        %1945 = vrot.lane.b32.xlu0 %v1856, 92
        %v1946 = vpop.permute.xlu0 %1945
        %v1947 = vsel %vm728, %v1944, 0
        %v1949 = vsel %vm728, %v1946, 0
        %1951 = vmatpush.xpose.msra.mxu0 0.0
        %1952 = vmatpush.xpose.msra.mxu0 0.0
        %1953 = vmatpush.xpose.msra.mxu0 0.0
        %1954 = vmatpush.xpose.msra.mxu0 0.0
        %1955 = vmatpush.xpose.msra.mxu0 0.0
        %1956 = vmatpush.xpose.msra.mxu0 0.0
        %1957 = vmatpush.xpose.msra.mxu0 0.0
        %1958 = vmatpush.xpose.msra.mxu0 0.0
        %1959 = vmatpush.xpose.msra.mxu0 0.0
        %1960 = vmatpush.xpose.msra.mxu0 0.0
        %1961 = vmatpush.xpose.msra.mxu0 0.0
        %1962 = vmatpush.xpose.msra.mxu0 0.0
        %1963 = vmatpush.xpose.msra.mxu0 0.0
        %1964 = vmatpush.xpose.msra.mxu0 0.0
        %1965 = vmatpush.xpose.msra.mxu0 0.0
        %1966 = vmatpush.xpose.msra.mxu0 %v1949
        %1967 = vmatmul.f32.gmra.mxu0 %v1947
        %v1968 = vpop.f32.mrf.mxu0
        %v1969 = vadd.f32 0.0, %v1968
        %1970 = vdwg.mxu0
        %v1971 = vmul.f32 %v1969, 0.5
        %v1972 = vadd.f32 %v1971, %v649
        %v1973 = vsel %vm755, %v1972, -inf
        %1974 = vmax.xlane.f32.xlu0 %v1973
        %v1975 = vpop.xlane.xlu0 %1974
        %v1976 = vsub.f32 %v1972, %v1975
        %v1977 = vmul.f32 %v1976, 1.442695
        %v1978 = vpow.pop %v1977
        %v1979 = vsel %vm755, %v1978, 0.0
        %1980 = vadd.xlane.f32.xlu0 %v1979
        %v1981 = vpop.xlane.xlu0 %1980
        %v1982 = vrcp.pop %v1981
        %v1983 = vmul.f32 %v1981, %v1982
        %v1984 = vsub.f32 1.0, %v1983
        %v1985 = vmul.f32 %v1982, %v1984
        %v1986 = vadd.f32 %v1982, %v1985
        %vm1987 = vweird.f32 %v1981
        %vm1988 = vweird.f32 %v1982
        %vm1989 = vmor %vm1987, %vm1988
        %v1990 = vsel %vm1989, %v1982, %v1986
        %v1991 = vand.u32 2147483647, %v1981
        %vm1992 = vcmp.eq.f32.partialorder %v1991, 8.507059e+37
        %v1993 = vand.u32 %v1981, 2147483648
        %v1994 = vor.u32 1.1754944e-38, %v1993
        %v1995 = vsel %vm1992, %v1994, %v1990
        %v1996 = vmul.f32 %v1978, %v1995
        %v1997 = vmul.f32 %v1996, %v647
        %1998 = vrot.lane.b32.xlu0 %v1856, 60
        %v1999 = vpop.permute.xlu0 %1998
        %v2002 = vsel %vm755, %v1997, 0
        %2004 = vmatpush.msra.mxu0 0.0
        %2005 = vmatpush.msra.mxu0 0.0
        %2006 = vmatpush.msra.mxu0 0.0
        %2007 = vmatpush.msra.mxu0 0.0
        %2008 = vmatpush.msra.mxu0 0.0
        %2009 = vmatpush.msra.mxu0 0.0
        %2010 = vmatpush.msra.mxu0 0.0
        %2011 = vmatpush.msra.mxu0 0.0
        %2012 = vmatpush.msra.mxu0 0.0
        %2013 = vmatpush.msra.mxu0 0.0
        %2014 = vmatpush.msra.mxu0 0.0
        %2015 = vmatpush.msra.mxu0 0.0
        %2016 = vmatpush.msra.mxu0 0.0
        %2017 = vmatpush.msra.mxu0 0.0
        %2018 = vmatpush.msra.mxu0 0.0
        %2019 = vmatpush.msra.mxu0 %v1999
        %2020 = vmatmul.f32.gmra.mxu0 %v2002
        %v2021 = vpop.f32.mrf.mxu0
        %v2022 = vadd.f32 0.0, %v2021
        %2023 = vdwg.mxu0
        %v2025 = vrot.slane %v1859, 4
        %v2027 = vsel %vm728, %v2022, 0
        %v2029 = vsel %vm893, %v2025, 0
        %2031 = vmatpush.msra.mxu0 0.0
        %2032 = vmatpush.msra.mxu0 0.0
        %2033 = vmatpush.msra.mxu0 0.0
        %2034 = vmatpush.msra.mxu0 0.0
        %2035 = vmatpush.msra.mxu0 0.0
        %2036 = vmatpush.msra.mxu0 0.0
        %2037 = vmatpush.msra.mxu0 0.0
        %2038 = vmatpush.msra.mxu0 0.0
        %2039 = vmatpush.msra.mxu0 0.0
        %2040 = vmatpush.msra.mxu0 0.0
        %2041 = vmatpush.msra.mxu0 0.0
        %2042 = vmatpush.msra.mxu0 0.0
        %2043 = vmatpush.msra.mxu0 0.0
        %2044 = vmatpush.msra.mxu0 0.0
        %2045 = vmatpush.msra.mxu0 0.0
        %2046 = vmatpush.msra.mxu0 %v2029
        %2047 = vmatmul.f32.gmra.mxu0 %v2027
        %v2048 = vpop.f32.mrf.mxu0
        %v2049 = vadd.f32 0.0, %v2048
        %2050 = vdwg.mxu0
        %v2052 = vsel %vm728, %v1941, 0
        %v2054 = vsel %vm893, %v1859, 0
        %2056 = vmatpush.msra.mxu0 0.0
        %2057 = vmatpush.msra.mxu0 0.0
        %2058 = vmatpush.msra.mxu0 0.0
        %2059 = vmatpush.msra.mxu0 0.0
        %2060 = vmatpush.msra.mxu0 0.0
        %2061 = vmatpush.msra.mxu0 0.0
        %2062 = vmatpush.msra.mxu0 0.0
        %2063 = vmatpush.msra.mxu0 0.0
        %2064 = vmatpush.msra.mxu0 0.0
        %2065 = vmatpush.msra.mxu0 0.0
        %2066 = vmatpush.msra.mxu0 0.0
        %2067 = vmatpush.msra.mxu0 0.0
        %2068 = vmatpush.msra.mxu0 0.0
        %2069 = vmatpush.msra.mxu0 0.0
        %2070 = vmatpush.msra.mxu0 0.0
        %2071 = vmatpush.msra.mxu0 %v2054
        %2072 = vmatmul.f32.gmra.mxu0 %v2052
        %v2073 = vpop.f32.mrf.mxu0
        %v2074 = vadd.f32 %v2049, %v2073
        %2075 = vdwg.mxu0
        %2076 = vrot.lane.b32.xlu0 %v1856, 120
        %v2077 = vpop.permute.xlu0 %2076
        %2078 = vrot.lane.b32.xlu0 %v1856, 88
        %v2079 = vpop.permute.xlu0 %2078
        %v2080 = vsel %vm728, %v2077, 0
        %v2082 = vsel %vm728, %v2079, 0
        %2084 = vmatpush.xpose.msra.mxu0 0.0
        %2085 = vmatpush.xpose.msra.mxu0 0.0
        %2086 = vmatpush.xpose.msra.mxu0 0.0
        %2087 = vmatpush.xpose.msra.mxu0 0.0
        %2088 = vmatpush.xpose.msra.mxu0 0.0
        %2089 = vmatpush.xpose.msra.mxu0 0.0
        %2090 = vmatpush.xpose.msra.mxu0 0.0
        %2091 = vmatpush.xpose.msra.mxu0 0.0
        %2092 = vmatpush.xpose.msra.mxu0 0.0
        %2093 = vmatpush.xpose.msra.mxu0 0.0
        %2094 = vmatpush.xpose.msra.mxu0 0.0
        %2095 = vmatpush.xpose.msra.mxu0 0.0
        %2096 = vmatpush.xpose.msra.mxu0 0.0
        %2097 = vmatpush.xpose.msra.mxu0 0.0
        %2098 = vmatpush.xpose.msra.mxu0 0.0
        %2099 = vmatpush.xpose.msra.mxu0 %v2082
        %2100 = vmatmul.f32.gmra.mxu0 %v2080
        %v2101 = vpop.f32.mrf.mxu0
        %v2102 = vadd.f32 0.0, %v2101
        %2103 = vdwg.mxu0
        %v2104 = vmul.f32 %v2102, 0.5
        %v2105 = vadd.f32 %v2104, %v649
        %v2106 = vsel %vm755, %v2105, -inf
        %2107 = vmax.xlane.f32.xlu0 %v2106
        %v2108 = vpop.xlane.xlu0 %2107
        %v2109 = vsub.f32 %v2105, %v2108
        %v2110 = vmul.f32 %v2109, 1.442695
        %v2111 = vpow.pop %v2110
        %v2112 = vsel %vm755, %v2111, 0.0
        %2113 = vadd.xlane.f32.xlu0 %v2112
        %v2114 = vpop.xlane.xlu0 %2113
        %v2115 = vrcp.pop %v2114
        %v2116 = vmul.f32 %v2114, %v2115
        %v2117 = vsub.f32 1.0, %v2116
        %v2118 = vmul.f32 %v2115, %v2117
        %v2119 = vadd.f32 %v2115, %v2118
        %vm2120 = vweird.f32 %v2114
        %vm2121 = vweird.f32 %v2115
        %vm2122 = vmor %vm2120, %vm2121
        %v2123 = vsel %vm2122, %v2115, %v2119
        %v2124 = vand.u32 2147483647, %v2114
        %vm2125 = vcmp.eq.f32.partialorder %v2124, 8.507059e+37
        %v2126 = vand.u32 %v2114, 2147483648
        %v2127 = vor.u32 1.1754944e-38, %v2126
        %v2128 = vsel %vm2125, %v2127, %v2123
        %v2129 = vmul.f32 %v2111, %v2128
        %v2130 = vmul.f32 %v2129, %v647
        %2131 = vrot.lane.b32.xlu0 %v1856, 56
        %v2132 = vpop.permute.xlu0 %2131
        %v2135 = vsel %vm755, %v2130, 0
        %2137 = vmatpush.msra.mxu0 0.0
        %2138 = vmatpush.msra.mxu0 0.0
        %2139 = vmatpush.msra.mxu0 0.0
        %2140 = vmatpush.msra.mxu0 0.0
        %2141 = vmatpush.msra.mxu0 0.0
        %2142 = vmatpush.msra.mxu0 0.0
        %2143 = vmatpush.msra.mxu0 0.0
        %2144 = vmatpush.msra.mxu0 0.0
        %2145 = vmatpush.msra.mxu0 0.0
        %2146 = vmatpush.msra.mxu0 0.0
        %2147 = vmatpush.msra.mxu0 0.0
        %2148 = vmatpush.msra.mxu0 0.0
        %2149 = vmatpush.msra.mxu0 0.0
        %2150 = vmatpush.msra.mxu0 0.0
        %2151 = vmatpush.msra.mxu0 0.0
        %2152 = vmatpush.msra.mxu0 %v2132
        %2153 = vmatmul.f32.gmra.mxu0 %v2135
        %v2154 = vpop.f32.mrf.mxu0
        %v2155 = vadd.f32 0.0, %v2154
        %2156 = vdwg.mxu0
        %v2158 = vsel %vm728, %v2155, 0
        %v2161 = vsel %vm893, %v1860, 0
        %2163 = vmatpush.msra.mxu0 0.0
        %2164 = vmatpush.msra.mxu0 0.0
        %2165 = vmatpush.msra.mxu0 0.0
        %2166 = vmatpush.msra.mxu0 0.0
        %2167 = vmatpush.msra.mxu0 0.0
        %2168 = vmatpush.msra.mxu0 0.0
        %2169 = vmatpush.msra.mxu0 0.0
        %2170 = vmatpush.msra.mxu0 0.0
        %2171 = vmatpush.msra.mxu0 0.0
        %2172 = vmatpush.msra.mxu0 0.0
        %2173 = vmatpush.msra.mxu0 0.0
        %2174 = vmatpush.msra.mxu0 0.0
        %2175 = vmatpush.msra.mxu0 0.0
        %2176 = vmatpush.msra.mxu0 0.0
        %2177 = vmatpush.msra.mxu0 0.0
        %2178 = vmatpush.msra.mxu0 %v2161
        %2179 = vmatmul.f32.gmra.mxu0 %v2158
        %v2180 = vpop.f32.mrf.mxu0
        %v2181 = vadd.f32 0.0, %v2180
        %2182 = vdwg.mxu0
        %v2183 = vadd.f32 %v2074, %v2181
        %2184 = vrot.lane.b32.xlu0 %v1856, 116
        %v2185 = vpop.permute.xlu0 %2184
        %2186 = vrot.lane.b32.xlu0 %v1856, 84
        %v2187 = vpop.permute.xlu0 %2186
        %v2188 = vsel %vm728, %v2185, 0
        %v2190 = vsel %vm728, %v2187, 0
        %2192 = vmatpush.xpose.msra.mxu0 0.0
        %2193 = vmatpush.xpose.msra.mxu0 0.0
        %2194 = vmatpush.xpose.msra.mxu0 0.0
        %2195 = vmatpush.xpose.msra.mxu0 0.0
        %2196 = vmatpush.xpose.msra.mxu0 0.0
        %2197 = vmatpush.xpose.msra.mxu0 0.0
        %2198 = vmatpush.xpose.msra.mxu0 0.0
        %2199 = vmatpush.xpose.msra.mxu0 0.0
        %2200 = vmatpush.xpose.msra.mxu0 0.0
        %2201 = vmatpush.xpose.msra.mxu0 0.0
        %2202 = vmatpush.xpose.msra.mxu0 0.0
        %2203 = vmatpush.xpose.msra.mxu0 0.0
        %2204 = vmatpush.xpose.msra.mxu0 0.0
        %2205 = vmatpush.xpose.msra.mxu0 0.0
        %2206 = vmatpush.xpose.msra.mxu0 0.0
        %2207 = vmatpush.xpose.msra.mxu0 %v2190
        %2208 = vmatmul.f32.gmra.mxu0 %v2188
        %v2209 = vpop.f32.mrf.mxu0
        %v2210 = vadd.f32 0.0, %v2209
        %2211 = vdwg.mxu0
        %v2212 = vmul.f32 %v2210, 0.5
        %v2213 = vadd.f32 %v2212, %v649
        %v2214 = vsel %vm755, %v2213, -inf
        %2215 = vmax.xlane.f32.xlu0 %v2214
        %v2216 = vpop.xlane.xlu0 %2215
        %v2217 = vsub.f32 %v2213, %v2216
        %v2218 = vmul.f32 %v2217, 1.442695
        %v2219 = vpow.pop %v2218
        %v2220 = vsel %vm755, %v2219, 0.0
        %2221 = vadd.xlane.f32.xlu0 %v2220
        %v2222 = vpop.xlane.xlu0 %2221
        %v2223 = vrcp.pop %v2222
        %v2224 = vmul.f32 %v2222, %v2223
        %v2225 = vsub.f32 1.0, %v2224
        %v2226 = vmul.f32 %v2223, %v2225
        %v2227 = vadd.f32 %v2223, %v2226
        %vm2228 = vweird.f32 %v2222
        %vm2229 = vweird.f32 %v2223
        %vm2230 = vmor %vm2228, %vm2229
        %v2231 = vsel %vm2230, %v2223, %v2227
        %v2232 = vand.u32 2147483647, %v2222
        %vm2233 = vcmp.eq.f32.partialorder %v2232, 8.507059e+37
        %v2234 = vand.u32 %v2222, 2147483648
        %v2235 = vor.u32 1.1754944e-38, %v2234
        %v2236 = vsel %vm2233, %v2235, %v2231
        %v2237 = vmul.f32 %v2219, %v2236
        %v2238 = vmul.f32 %v2237, %v647
        %2239 = vrot.lane.b32.xlu0 %v1856, 52
        %v2240 = vpop.permute.xlu0 %2239
        %v2243 = vsel %vm755, %v2238, 0
        %2245 = vmatpush.msra.mxu0 0.0
        %2246 = vmatpush.msra.mxu0 0.0
        %2247 = vmatpush.msra.mxu0 0.0
        %2248 = vmatpush.msra.mxu0 0.0
        %2249 = vmatpush.msra.mxu0 0.0
        %2250 = vmatpush.msra.mxu0 0.0
        %2251 = vmatpush.msra.mxu0 0.0
        %2252 = vmatpush.msra.mxu0 0.0
        %2253 = vmatpush.msra.mxu0 0.0
        %2254 = vmatpush.msra.mxu0 0.0
        %2255 = vmatpush.msra.mxu0 0.0
        %2256 = vmatpush.msra.mxu0 0.0
        %2257 = vmatpush.msra.mxu0 0.0
        %2258 = vmatpush.msra.mxu0 0.0
        %2259 = vmatpush.msra.mxu0 0.0
        %2260 = vmatpush.msra.mxu0 %v2240
        %2261 = vmatmul.f32.gmra.mxu0 %v2243
        %v2262 = vpop.f32.mrf.mxu0
        %v2263 = vadd.f32 0.0, %v2262
        %2264 = vdwg.mxu0
        %v2265 = vrot.slane %v1860, 4
        %v2267 = vsel %vm728, %v2263, 0
        %v2269 = vsel %vm893, %v2265, 0
        %2271 = vmatpush.msra.mxu0 0.0
        %2272 = vmatpush.msra.mxu0 0.0
        %2273 = vmatpush.msra.mxu0 0.0
        %2274 = vmatpush.msra.mxu0 0.0
        %2275 = vmatpush.msra.mxu0 0.0
        %2276 = vmatpush.msra.mxu0 0.0
        %2277 = vmatpush.msra.mxu0 0.0
        %2278 = vmatpush.msra.mxu0 0.0
        %2279 = vmatpush.msra.mxu0 0.0
        %2280 = vmatpush.msra.mxu0 0.0
        %2281 = vmatpush.msra.mxu0 0.0
        %2282 = vmatpush.msra.mxu0 0.0
        %2283 = vmatpush.msra.mxu0 0.0
        %2284 = vmatpush.msra.mxu0 0.0
        %2285 = vmatpush.msra.mxu0 0.0
        %2286 = vmatpush.msra.mxu0 %v2269
        %2287 = vmatmul.f32.gmra.mxu0 %v2267
        %v2288 = vpop.f32.mrf.mxu0
        %v2289 = vadd.f32 0.0, %v2288
        %2290 = vdwg.mxu0
        %v2291 = vadd.f32 %v2183, %v2289
        %2292 = vrot.lane.b32.xlu0 %v1856, 112
        %v2293 = vpop.permute.xlu0 %2292
        %2294 = vrot.lane.b32.xlu0 %v1856, 80
        %v2295 = vpop.permute.xlu0 %2294
        %v2296 = vsel %vm728, %v2293, 0
        %v2298 = vsel %vm728, %v2295, 0
        %2300 = vmatpush.xpose.msra.mxu0 0.0
        %2301 = vmatpush.xpose.msra.mxu0 0.0
        %2302 = vmatpush.xpose.msra.mxu0 0.0
        %2303 = vmatpush.xpose.msra.mxu0 0.0
        %2304 = vmatpush.xpose.msra.mxu0 0.0
        %2305 = vmatpush.xpose.msra.mxu0 0.0
        %2306 = vmatpush.xpose.msra.mxu0 0.0
        %2307 = vmatpush.xpose.msra.mxu0 0.0
        %2308 = vmatpush.xpose.msra.mxu0 0.0
        %2309 = vmatpush.xpose.msra.mxu0 0.0
        %2310 = vmatpush.xpose.msra.mxu0 0.0
        %2311 = vmatpush.xpose.msra.mxu0 0.0
        %2312 = vmatpush.xpose.msra.mxu0 0.0
        %2313 = vmatpush.xpose.msra.mxu0 0.0
        %2314 = vmatpush.xpose.msra.mxu0 0.0
        %2315 = vmatpush.xpose.msra.mxu0 %v2298
        %2316 = vmatmul.f32.gmra.mxu0 %v2296
        %v2317 = vpop.f32.mrf.mxu0
        %v2318 = vadd.f32 0.0, %v2317
        %2319 = vdwg.mxu0
        %v2320 = vmul.f32 %v2318, 0.5
        %v2321 = vadd.f32 %v2320, %v649
        %v2322 = vsel %vm755, %v2321, -inf
        %2323 = vmax.xlane.f32.xlu0 %v2322
        %v2324 = vpop.xlane.xlu0 %2323
        %v2325 = vsub.f32 %v2321, %v2324
        %v2326 = vmul.f32 %v2325, 1.442695
        %v2327 = vpow.pop %v2326
        %v2328 = vsel %vm755, %v2327, 0.0
        %2329 = vadd.xlane.f32.xlu0 %v2328
        %v2330 = vpop.xlane.xlu0 %2329
        %v2331 = vrcp.pop %v2330
        %v2332 = vmul.f32 %v2330, %v2331
        %v2333 = vsub.f32 1.0, %v2332
        %v2334 = vmul.f32 %v2331, %v2333
        %v2335 = vadd.f32 %v2331, %v2334
        %vm2336 = vweird.f32 %v2330
        %vm2337 = vweird.f32 %v2331
        %vm2338 = vmor %vm2336, %vm2337
        %v2339 = vsel %vm2338, %v2331, %v2335
        %v2340 = vand.u32 2147483647, %v2330
        %vm2341 = vcmp.eq.f32.partialorder %v2340, 8.507059e+37
        %v2342 = vand.u32 %v2330, 2147483648
        %v2343 = vor.u32 1.1754944e-38, %v2342
        %v2344 = vsel %vm2341, %v2343, %v2339
        %v2345 = vmul.f32 %v2327, %v2344
        %v2346 = vmul.f32 %v2345, %v647
        %2347 = vrot.lane.b32.xlu0 %v1856, 48
        %v2348 = vpop.permute.xlu0 %2347
        %v2351 = vsel %vm755, %v2346, 0
        %2353 = vmatpush.msra.mxu0 0.0
        %2354 = vmatpush.msra.mxu0 0.0
        %2355 = vmatpush.msra.mxu0 0.0
        %2356 = vmatpush.msra.mxu0 0.0
        %2357 = vmatpush.msra.mxu0 0.0
        %2358 = vmatpush.msra.mxu0 0.0
        %2359 = vmatpush.msra.mxu0 0.0
        %2360 = vmatpush.msra.mxu0 0.0
        %2361 = vmatpush.msra.mxu0 0.0
        %2362 = vmatpush.msra.mxu0 0.0
        %2363 = vmatpush.msra.mxu0 0.0
        %2364 = vmatpush.msra.mxu0 0.0
        %2365 = vmatpush.msra.mxu0 0.0
        %2366 = vmatpush.msra.mxu0 0.0
        %2367 = vmatpush.msra.mxu0 0.0
        %2368 = vmatpush.msra.mxu0 %v2348
        %2369 = vmatmul.f32.gmra.mxu0 %v2351
        %v2370 = vpop.f32.mrf.mxu0
        %v2371 = vadd.f32 0.0, %v2370
        %2372 = vdwg.mxu0
        %v2374 = vsel %vm728, %v2371, 0
        %v2377 = vsel %vm893, %v1861, 0
        %2379 = vmatpush.msra.mxu0 0.0
        %2380 = vmatpush.msra.mxu0 0.0
        %2381 = vmatpush.msra.mxu0 0.0
        %2382 = vmatpush.msra.mxu0 0.0
        %2383 = vmatpush.msra.mxu0 0.0
        %2384 = vmatpush.msra.mxu0 0.0
        %2385 = vmatpush.msra.mxu0 0.0
        %2386 = vmatpush.msra.mxu0 0.0
        %2387 = vmatpush.msra.mxu0 0.0
        %2388 = vmatpush.msra.mxu0 0.0
        %2389 = vmatpush.msra.mxu0 0.0
        %2390 = vmatpush.msra.mxu0 0.0
        %2391 = vmatpush.msra.mxu0 0.0
        %2392 = vmatpush.msra.mxu0 0.0
        %2393 = vmatpush.msra.mxu0 0.0
        %2394 = vmatpush.msra.mxu0 %v2377
        %2395 = vmatmul.f32.gmra.mxu0 %v2374
        %v2396 = vpop.f32.mrf.mxu0
        %v2397 = vadd.f32 0.0, %v2396
        %2398 = vdwg.mxu0
        %v2399 = vadd.f32 %v2291, %v2397
        %2400 = vrot.lane.b32.xlu0 %v1856, 108
        %v2401 = vpop.permute.xlu0 %2400
        %2402 = vrot.lane.b32.xlu0 %v1856, 76
        %v2403 = vpop.permute.xlu0 %2402
        %v2404 = vsel %vm728, %v2401, 0
        %v2406 = vsel %vm728, %v2403, 0
        %2408 = vmatpush.xpose.msra.mxu0 0.0
        %2409 = vmatpush.xpose.msra.mxu0 0.0
        %2410 = vmatpush.xpose.msra.mxu0 0.0
        %2411 = vmatpush.xpose.msra.mxu0 0.0
        %2412 = vmatpush.xpose.msra.mxu0 0.0
        %2413 = vmatpush.xpose.msra.mxu0 0.0
        %2414 = vmatpush.xpose.msra.mxu0 0.0
        %2415 = vmatpush.xpose.msra.mxu0 0.0
        %2416 = vmatpush.xpose.msra.mxu0 0.0
        %2417 = vmatpush.xpose.msra.mxu0 0.0
        %2418 = vmatpush.xpose.msra.mxu0 0.0
        %2419 = vmatpush.xpose.msra.mxu0 0.0
        %2420 = vmatpush.xpose.msra.mxu0 0.0
        %2421 = vmatpush.xpose.msra.mxu0 0.0
        %2422 = vmatpush.xpose.msra.mxu0 0.0
        %2423 = vmatpush.xpose.msra.mxu0 %v2406
        %2424 = vmatmul.f32.gmra.mxu0 %v2404
        %v2425 = vpop.f32.mrf.mxu0
        %v2426 = vadd.f32 0.0, %v2425
        %2427 = vdwg.mxu0
        %v2428 = vmul.f32 %v2426, 0.5
        %v2429 = vadd.f32 %v2428, %v649
        %v2430 = vsel %vm755, %v2429, -inf
        %2431 = vmax.xlane.f32.xlu0 %v2430
        %v2432 = vpop.xlane.xlu0 %2431
        %v2433 = vsub.f32 %v2429, %v2432
        %v2434 = vmul.f32 %v2433, 1.442695
        %v2435 = vpow.pop %v2434
        %v2436 = vsel %vm755, %v2435, 0.0
        %2437 = vadd.xlane.f32.xlu0 %v2436
        %v2438 = vpop.xlane.xlu0 %2437
        %v2439 = vrcp.pop %v2438
        %v2440 = vmul.f32 %v2438, %v2439
        %v2441 = vsub.f32 1.0, %v2440
        %v2442 = vmul.f32 %v2439, %v2441
        %v2443 = vadd.f32 %v2439, %v2442
        %vm2444 = vweird.f32 %v2438
        %vm2445 = vweird.f32 %v2439
        %vm2446 = vmor %vm2444, %vm2445
        %v2447 = vsel %vm2446, %v2439, %v2443
        %v2448 = vand.u32 2147483647, %v2438
        %vm2449 = vcmp.eq.f32.partialorder %v2448, 8.507059e+37
        %v2450 = vand.u32 %v2438, 2147483648
        %v2451 = vor.u32 1.1754944e-38, %v2450
        %v2452 = vsel %vm2449, %v2451, %v2447
        %v2453 = vmul.f32 %v2435, %v2452
        %v2454 = vmul.f32 %v2453, %v647
        %2455 = vrot.lane.b32.xlu0 %v1856, 44
        %v2456 = vpop.permute.xlu0 %2455
        %v2459 = vsel %vm755, %v2454, 0
        %2461 = vmatpush.msra.mxu0 0.0
        %2462 = vmatpush.msra.mxu0 0.0
        %2463 = vmatpush.msra.mxu0 0.0
        %2464 = vmatpush.msra.mxu0 0.0
        %2465 = vmatpush.msra.mxu0 0.0
        %2466 = vmatpush.msra.mxu0 0.0
        %2467 = vmatpush.msra.mxu0 0.0
        %2468 = vmatpush.msra.mxu0 0.0
        %2469 = vmatpush.msra.mxu0 0.0
        %2470 = vmatpush.msra.mxu0 0.0
        %2471 = vmatpush.msra.mxu0 0.0
        %2472 = vmatpush.msra.mxu0 0.0
        %2473 = vmatpush.msra.mxu0 0.0
        %2474 = vmatpush.msra.mxu0 0.0
        %2475 = vmatpush.msra.mxu0 0.0
        %2476 = vmatpush.msra.mxu0 %v2456
        %2477 = vmatmul.f32.gmra.mxu0 %v2459
        %v2478 = vpop.f32.mrf.mxu0
        %v2479 = vadd.f32 0.0, %v2478
        %2480 = vdwg.mxu0
        %v2481 = vrot.slane %v1861, 4
        %v2483 = vsel %vm728, %v2479, 0
        %v2485 = vsel %vm893, %v2481, 0
        %2487 = vmatpush.msra.mxu0 0.0
        %2488 = vmatpush.msra.mxu0 0.0
        %2489 = vmatpush.msra.mxu0 0.0
        %2490 = vmatpush.msra.mxu0 0.0
        %2491 = vmatpush.msra.mxu0 0.0
        %2492 = vmatpush.msra.mxu0 0.0
        %2493 = vmatpush.msra.mxu0 0.0
        %2494 = vmatpush.msra.mxu0 0.0
        %2495 = vmatpush.msra.mxu0 0.0
        %2496 = vmatpush.msra.mxu0 0.0
        %2497 = vmatpush.msra.mxu0 0.0
        %2498 = vmatpush.msra.mxu0 0.0
        %2499 = vmatpush.msra.mxu0 0.0
        %2500 = vmatpush.msra.mxu0 0.0
        %2501 = vmatpush.msra.mxu0 0.0
        %2502 = vmatpush.msra.mxu0 %v2485
        %2503 = vmatmul.f32.gmra.mxu0 %v2483
        %v2504 = vpop.f32.mrf.mxu0
        %v2505 = vadd.f32 0.0, %v2504
        %2506 = vdwg.mxu0
        %v2507 = vadd.f32 %v2399, %v2505
        %2508 = vrot.lane.b32.xlu0 %v1856, 104
        %v2509 = vpop.permute.xlu0 %2508
        %2510 = vrot.lane.b32.xlu0 %v1856, 72
        %v2511 = vpop.permute.xlu0 %2510
        %v2512 = vsel %vm728, %v2509, 0
        %v2514 = vsel %vm728, %v2511, 0
        %2516 = vmatpush.xpose.msra.mxu0 0.0
        %2517 = vmatpush.xpose.msra.mxu0 0.0
        %2518 = vmatpush.xpose.msra.mxu0 0.0
        %2519 = vmatpush.xpose.msra.mxu0 0.0
        %2520 = vmatpush.xpose.msra.mxu0 0.0
        %2521 = vmatpush.xpose.msra.mxu0 0.0
        %2522 = vmatpush.xpose.msra.mxu0 0.0
        %2523 = vmatpush.xpose.msra.mxu0 0.0
        %2524 = vmatpush.xpose.msra.mxu0 0.0
        %2525 = vmatpush.xpose.msra.mxu0 0.0
        %2526 = vmatpush.xpose.msra.mxu0 0.0
        %2527 = vmatpush.xpose.msra.mxu0 0.0
        %2528 = vmatpush.xpose.msra.mxu0 0.0
        %2529 = vmatpush.xpose.msra.mxu0 0.0
        %2530 = vmatpush.xpose.msra.mxu0 0.0
        %2531 = vmatpush.xpose.msra.mxu0 %v2514
        %2532 = vmatmul.f32.gmra.mxu0 %v2512
        %v2533 = vpop.f32.mrf.mxu0
        %v2534 = vadd.f32 0.0, %v2533
        %2535 = vdwg.mxu0
        %v2536 = vmul.f32 %v2534, 0.5
        %v2537 = vadd.f32 %v2536, %v649
        %v2538 = vsel %vm755, %v2537, -inf
        %2539 = vmax.xlane.f32.xlu0 %v2538
        %v2540 = vpop.xlane.xlu0 %2539
        %v2541 = vsub.f32 %v2537, %v2540
        %v2542 = vmul.f32 %v2541, 1.442695
        %v2543 = vpow.pop %v2542
        %v2544 = vsel %vm755, %v2543, 0.0
        %2545 = vadd.xlane.f32.xlu0 %v2544
        %v2546 = vpop.xlane.xlu0 %2545
        %v2547 = vrcp.pop %v2546
        %v2548 = vmul.f32 %v2546, %v2547
        %v2549 = vsub.f32 1.0, %v2548
        %v2550 = vmul.f32 %v2547, %v2549
        %v2551 = vadd.f32 %v2547, %v2550
        %vm2552 = vweird.f32 %v2546
        %vm2553 = vweird.f32 %v2547
        %vm2554 = vmor %vm2552, %vm2553
        %v2555 = vsel %vm2554, %v2547, %v2551
        %v2556 = vand.u32 2147483647, %v2546
        %vm2557 = vcmp.eq.f32.partialorder %v2556, 8.507059e+37
        %v2558 = vand.u32 %v2546, 2147483648
        %v2559 = vor.u32 1.1754944e-38, %v2558
        %v2560 = vsel %vm2557, %v2559, %v2555
        %v2561 = vmul.f32 %v2543, %v2560
        %v2562 = vmul.f32 %v2561, %v647
        %2563 = vrot.lane.b32.xlu0 %v1856, 40
        %v2564 = vpop.permute.xlu0 %2563
        %v2567 = vsel %vm755, %v2562, 0
        %2569 = vmatpush.msra.mxu0 0.0
        %2570 = vmatpush.msra.mxu0 0.0
        %2571 = vmatpush.msra.mxu0 0.0
        %2572 = vmatpush.msra.mxu0 0.0
        %2573 = vmatpush.msra.mxu0 0.0
        %2574 = vmatpush.msra.mxu0 0.0
        %2575 = vmatpush.msra.mxu0 0.0
        %2576 = vmatpush.msra.mxu0 0.0
        %2577 = vmatpush.msra.mxu0 0.0
        %2578 = vmatpush.msra.mxu0 0.0
        %2579 = vmatpush.msra.mxu0 0.0
        %2580 = vmatpush.msra.mxu0 0.0
        %2581 = vmatpush.msra.mxu0 0.0
        %2582 = vmatpush.msra.mxu0 0.0
        %2583 = vmatpush.msra.mxu0 0.0
        %2584 = vmatpush.msra.mxu0 %v2564
        %2585 = vmatmul.f32.gmra.mxu0 %v2567
        %v2586 = vpop.f32.mrf.mxu0
        %v2587 = vadd.f32 0.0, %v2586
        %2588 = vdwg.mxu0
        %v2590 = vsel %vm728, %v2587, 0
        %v2593 = vsel %vm893, %v1862, 0
        %2595 = vmatpush.msra.mxu0 0.0
        %2596 = vmatpush.msra.mxu0 0.0
        %2597 = vmatpush.msra.mxu0 0.0
        %2598 = vmatpush.msra.mxu0 0.0
        %2599 = vmatpush.msra.mxu0 0.0
        %2600 = vmatpush.msra.mxu0 0.0
        %2601 = vmatpush.msra.mxu0 0.0
        %2602 = vmatpush.msra.mxu0 0.0
        %2603 = vmatpush.msra.mxu0 0.0
        %2604 = vmatpush.msra.mxu0 0.0
        %2605 = vmatpush.msra.mxu0 0.0
        %2606 = vmatpush.msra.mxu0 0.0
        %2607 = vmatpush.msra.mxu0 0.0
        %2608 = vmatpush.msra.mxu0 0.0
        %2609 = vmatpush.msra.mxu0 0.0
        %2610 = vmatpush.msra.mxu0 %v2593
        %2611 = vmatmul.f32.gmra.mxu0 %v2590
        %v2612 = vpop.f32.mrf.mxu0
        %v2613 = vadd.f32 0.0, %v2612
        %2614 = vdwg.mxu0
        %v2615 = vadd.f32 %v2507, %v2613
        %2616 = vrot.lane.b32.xlu0 %v1856, 100
        %v2617 = vpop.permute.xlu0 %2616
        %2618 = vrot.lane.b32.xlu0 %v1856, 68
        %v2619 = vpop.permute.xlu0 %2618
        %v2620 = vsel %vm728, %v2617, 0
        %v2622 = vsel %vm728, %v2619, 0
        %2624 = vmatpush.xpose.msra.mxu0 0.0
        %2625 = vmatpush.xpose.msra.mxu0 0.0
        %2626 = vmatpush.xpose.msra.mxu0 0.0
        %2627 = vmatpush.xpose.msra.mxu0 0.0
        %2628 = vmatpush.xpose.msra.mxu0 0.0
        %2629 = vmatpush.xpose.msra.mxu0 0.0
        %2630 = vmatpush.xpose.msra.mxu0 0.0
        %2631 = vmatpush.xpose.msra.mxu0 0.0
        %2632 = vmatpush.xpose.msra.mxu0 0.0
        %2633 = vmatpush.xpose.msra.mxu0 0.0
        %2634 = vmatpush.xpose.msra.mxu0 0.0
        %2635 = vmatpush.xpose.msra.mxu0 0.0
        %2636 = vmatpush.xpose.msra.mxu0 0.0
        %2637 = vmatpush.xpose.msra.mxu0 0.0
        %2638 = vmatpush.xpose.msra.mxu0 0.0
        %2639 = vmatpush.xpose.msra.mxu0 %v2622
        %2640 = vmatmul.f32.gmra.mxu0 %v2620
        %v2641 = vpop.f32.mrf.mxu0
        %v2642 = vadd.f32 0.0, %v2641
        %2643 = vdwg.mxu0
        %v2644 = vmul.f32 %v2642, 0.5
        %v2645 = vadd.f32 %v2644, %v649
        %v2646 = vsel %vm755, %v2645, -inf
        %2647 = vmax.xlane.f32.xlu0 %v2646
        %v2648 = vpop.xlane.xlu0 %2647
        %v2649 = vsub.f32 %v2645, %v2648
        %v2650 = vmul.f32 %v2649, 1.442695
        %v2651 = vpow.pop %v2650
        %v2652 = vsel %vm755, %v2651, 0.0
        %2653 = vadd.xlane.f32.xlu0 %v2652
        %v2654 = vpop.xlane.xlu0 %2653
        %v2655 = vrcp.pop %v2654
        %v2656 = vmul.f32 %v2654, %v2655
        %v2657 = vsub.f32 1.0, %v2656
        %v2658 = vmul.f32 %v2655, %v2657
        %v2659 = vadd.f32 %v2655, %v2658
        %vm2660 = vweird.f32 %v2654
        %vm2661 = vweird.f32 %v2655
        %vm2662 = vmor %vm2660, %vm2661
        %v2663 = vsel %vm2662, %v2655, %v2659
        %v2664 = vand.u32 2147483647, %v2654
        %vm2665 = vcmp.eq.f32.partialorder %v2664, 8.507059e+37
        %v2666 = vand.u32 %v2654, 2147483648
        %v2667 = vor.u32 1.1754944e-38, %v2666
        %v2668 = vsel %vm2665, %v2667, %v2663
        %v2669 = vmul.f32 %v2651, %v2668
        %v2670 = vmul.f32 %v2669, %v647
        %2671 = vrot.lane.b32.xlu0 %v1856, 36
        %v2672 = vpop.permute.xlu0 %2671
        %v2675 = vsel %vm755, %v2670, 0
        %2677 = vmatpush.msra.mxu0 0.0
        %2678 = vmatpush.msra.mxu0 0.0
        %2679 = vmatpush.msra.mxu0 0.0
        %2680 = vmatpush.msra.mxu0 0.0
        %2681 = vmatpush.msra.mxu0 0.0
        %2682 = vmatpush.msra.mxu0 0.0
        %2683 = vmatpush.msra.mxu0 0.0
        %2684 = vmatpush.msra.mxu0 0.0
        %2685 = vmatpush.msra.mxu0 0.0
        %2686 = vmatpush.msra.mxu0 0.0
        %2687 = vmatpush.msra.mxu0 0.0
        %2688 = vmatpush.msra.mxu0 0.0
        %2689 = vmatpush.msra.mxu0 0.0
        %2690 = vmatpush.msra.mxu0 0.0
        %2691 = vmatpush.msra.mxu0 0.0
        %2692 = vmatpush.msra.mxu0 %v2672
        %2693 = vmatmul.f32.gmra.mxu0 %v2675
        %v2694 = vpop.f32.mrf.mxu0
        %v2695 = vadd.f32 0.0, %v2694
        %2696 = vdwg.mxu0
        %v2697 = vrot.slane %v1862, 4
        %v2699 = vsel %vm728, %v2695, 0
        %v2701 = vsel %vm893, %v2697, 0
        %2703 = vmatpush.msra.mxu0 0.0
        %2704 = vmatpush.msra.mxu0 0.0
        %2705 = vmatpush.msra.mxu0 0.0
        %2706 = vmatpush.msra.mxu0 0.0
        %2707 = vmatpush.msra.mxu0 0.0
        %2708 = vmatpush.msra.mxu0 0.0
        %2709 = vmatpush.msra.mxu0 0.0
        %2710 = vmatpush.msra.mxu0 0.0
        %2711 = vmatpush.msra.mxu0 0.0
        %2712 = vmatpush.msra.mxu0 0.0
        %2713 = vmatpush.msra.mxu0 0.0
        %2714 = vmatpush.msra.mxu0 0.0
        %2715 = vmatpush.msra.mxu0 0.0
        %2716 = vmatpush.msra.mxu0 0.0
        %2717 = vmatpush.msra.mxu0 0.0
        %2718 = vmatpush.msra.mxu0 %v2701
        %2719 = vmatmul.f32.gmra.mxu0 %v2699
        %v2720 = vpop.f32.mrf.mxu0
        %v2721 = vadd.f32 0.0, %v2720
        %2722 = vdwg.mxu0
        %v2723 = vadd.f32 %v2615, %v2721
        %s2724 = scalar_lea.vmem %s7, 1
        %v2725 = vld [vmem:[%s2724] sm:$0x1]
        %v2727 = vperm.slane %v2725, 0
        %v2729 = vadd.f32 %v2723, %v2727
        %v2730 = vadd.f32 %v2729, %v2729
        %s2731 = scalar_lea.vmem %s8, 1
        %v2732 = vld [vmem:[%s2731] sm:$0x1]
        %s2733 = scalar_lea.vmem %s9, 1
        %v2734 = vld [vmem:[%s2733] sm:$0x1]
        %v2735 = vsel %vm652, %v2730, 0.0
        %2736 = vadd.xlane.f32.xlu0 %v2735
        %v2737 = vpop.xlane.xlu0 %2736
        %v2738 = vmul.f32 %v2737, %v662
        %v2739 = vsub.f32 %v2730, %v2738
        %v2740 = vmul.f32 %v2739, %v2739
        %v2741 = vsel %vm652, %v2740, 0.0
        %2742 = vadd.xlane.f32.xlu0 %v2741
        %v2743 = vpop.xlane.xlu0 %2742
        %v2744 = vmul.f32 %v2743, %v662
        %v2745 = vadd.f32 %v2744, 1e-05
        %v2746 = vrsqrt.pop %v2745
        %v2747 = vmul.f32 %v2746, %v2745
        %v2748 = vmul.f32 %v2747, %v2746
        %v2749 = vmul.f32 0.5, %v2748
        %v2750 = vsub.f32 1.5, %v2749
        %v2751 = vmul.f32 %v2746, %v2750
        %vm2752 = vweird.f32 %v2745
        %vm2753 = vweird.f32 %v2746
        %vm2754 = vmor %vm2752, %vm2753
        %v2755 = vsel %vm2754, %v2746, %v2751
        %v2756 = vmul.f32 %v2739, %v2755
        %v2758 = vperm.slane %v2732, 0
        %v2760 = vmul.f32 %v2756, %v2758
        %v2762 = vperm.slane %v2734, 0
        %v2764 = vadd.f32 %v2760, %v2762
        %s2765 = scalar_lea.vmem %s10, 32
        %v2766 = vld [vmem:[%s2765] sm:$0xff]
        %v2767 = vld [vmem:[%s2765 + $0x8] sm:$0xff]
        %v2768 = vld [vmem:[%s2765 + $0x10] sm:$0xff]
        %v2769 = vld [vmem:[%s2765 + $0x18] sm:$0xff]
        %s2770 = scalar_lea.vmem %s11, 1
        %v2771 = vld [vmem:[%s2770] sm:$0x1]
        %v2773 = vperm.slane %v2771, 0
        %v2776 = vsel %vm652, %v2764, 0
        %2778 = vmatpush.msra.mxu0 0.0
        %2779 = vmatpush.msra.mxu0 0.0
        %2780 = vmatpush.msra.mxu0 0.0
        %2781 = vmatpush.msra.mxu0 0.0
        %2782 = vmatpush.msra.mxu0 0.0
        %2783 = vmatpush.msra.mxu0 0.0
        %2784 = vmatpush.msra.mxu0 0.0
        %2785 = vmatpush.msra.mxu0 0.0
        %2786 = vmatpush.msra.mxu0 0.0
        %2787 = vmatpush.msra.mxu0 0.0
        %2788 = vmatpush.msra.mxu0 0.0
        %2789 = vmatpush.msra.mxu0 0.0
        %2790 = vmatpush.msra.mxu0 %v2769
        %2791 = vmatpush.msra.mxu0 %v2768
        %2792 = vmatpush.msra.mxu0 %v2767
        %2793 = vmatpush.msra.mxu0 %v2766
        %2794 = vmatmul.f32.gmra.mxu0 %v2776
        %v2795 = vpop.f32.mrf.mxu0
        %v2796 = vadd.f32 %v2773, %v2795
        %2797 = vdwg.mxu0
        %v2798 = vmax.f32 %v2796, 0.0
        %v2799 = vsel %vm1659, %v2796, -inf
        %2800 = vmax.xlane.f32.xlu0 %v2799
        %v2801 = vpop.xlane.xlu0 %2800
        %v2802 = vsub.f32 %v2796, %v2801
        %v2803 = vmul.f32 %v2802, 1.442695
        %v2804 = vpow.pop %v2803
        %2806 = vrot.lane.b32.xlu0 %v2804, 64
        %v2807 = vpop.permute.xlu0 %2806
        %v2809 = vsel %vm755, %v2807, 0.0
        %2810 = vadd.xlane.f32.xlu0 %v2809
        %v2811 = vpop.xlane.xlu0 %2810
        %v2812 = vrcp.pop %v2811
        %v2813 = vmul.f32 %v2811, %v2812
        %v2814 = vsub.f32 1.0, %v2813
        %v2815 = vmul.f32 %v2812, %v2814
        %v2816 = vadd.f32 %v2812, %v2815
        %vm2817 = vweird.f32 %v2811
        %vm2818 = vweird.f32 %v2812
        %vm2819 = vmor %vm2817, %vm2818
        %v2820 = vsel %vm2819, %v2812, %v2816
        %v2821 = vand.u32 2147483647, %v2811
        %vm2822 = vcmp.eq.f32.partialorder %v2821, 8.507059e+37
        %v2823 = vand.u32 %v2811, 2147483648
        %v2824 = vor.u32 1.1754944e-38, %v2823
        %v2825 = vsel %vm2822, %v2824, %v2820
        %v2826 = vmul.f32 %v2804, %v2825
        %v2827 = vsel %vm1659, %v2826, -inf
        %2828 = vmax.xlane.f32.xlu0 %v2827
        %v2829 = vpop.xlane.xlu0 %2828
        %vm2830 = vcmp.ge.f32.partialorder %v2826, %v2829
        %v2831 = vsel %vm2830, %v1695, 8
        %v2832 = vsel %vm1659, %v2831, 2147483647
        %v2833 = vand.u32 %v2832, 65535
        %v2834 = vshra.s32 %v2832, 16
        %v2835 = vcvt.s32.f32 %v2833
        %v2836 = vcvt.s32.f32 %v2834
        %2837 = vmin.xlane.f32.xlu0 %v2836
        %v2838 = vpop.xlane.xlu0 %2837
        %vm2839 = vcmp.eq.f32.partialorder %v2836, %v2838
        %v2840 = vsel %vm2839, %v2835, inf
        %2841 = vmin.xlane.f32.xlu0 %v2840
        %v2842 = vpop.xlane.xlu0 %2841
        %v2843 = vcvt.f32.s32 %v2842
        %v2844 = vcvt.f32.s32 %v2838
        %v2845 = vshll.u32 %v2844, 16
        %v2846 = vadd.s32 %v2845, %v2843
        %vm2847 = vcmp.eq.s32.totalorder %v1692, %v2846
        %v2848 = vsel %vm2847, 1, 0
        %v2849 = vcvt.s32.f32 %v2848
        %v2850 = vsel %vm755, %v2849, 0.0
        %v2851 = vrot.slane %v2850, 4
        %v2852 = vadd.f32 %v2850, %v2851
        %v2853 = vrot.slane %v2852, 2
        %v2854 = vadd.f32 %v2852, %v2853
        %v2855 = vrot.slane %v2854, 1
        %v2856 = vadd.f32 %v2854, %v2855
        %v2857 = vsel %vm1659, %v2826, 0.0
        %v2858 = vrot.slane %v2857, 4
        %v2859 = vadd.f32 %v2857, %v2858
        %v2860 = vrot.slane %v2859, 2
        %v2861 = vadd.f32 %v2859, %v2860
        %v2862 = vrot.slane %v2861, 1
        %v2863 = vadd.f32 %v2861, %v2862
        %v2865 = vsel %vm1741, %v2798, 0
        %2867 = vmatpush.msra.mxu0 0.0
        %2868 = vmatpush.msra.mxu0 0.0
        %2869 = vmatpush.msra.mxu0 0.0
        %2870 = vmatpush.msra.mxu0 0.0
        %2871 = vmatpush.msra.mxu0 0.0
        %2872 = vmatpush.msra.mxu0 0.0
        %2873 = vmatpush.msra.mxu0 0.0
        %2874 = vmatpush.msra.mxu0 0.0
        %2875 = vmatpush.msra.mxu0 %v1736
        %2876 = vmatpush.msra.mxu0 %v1735
        %2877 = vmatpush.msra.mxu0 %v1734
        %2878 = vmatpush.msra.mxu0 %v1733
        %2879 = vmatpush.msra.mxu0 %v1732
        %2880 = vmatpush.msra.mxu0 %v1731
        %2881 = vmatpush.msra.mxu0 %v1730
        %2882 = vmatpush.msra.mxu0 %v1729
        %2883 = vmatmul.f32.gmra.mxu0 %v2865
        %v2884 = vpop.f32.mrf.mxu0
        %v2885 = vadd.f32 %v1739, %v2884
        %2886 = vdwg.mxu0
        %v2887 = vsel %vm652, %v2885, -inf
        %2888 = vmax.xlane.f32.xlu0 %v2887
        %v2889 = vpop.xlane.xlu0 %2888
        %v2890 = vsub.f32 %v2885, %v2889
        %v2891 = vmul.f32 %v2890, 1.442695
        %v2892 = vpow.pop %v2891
        %v2893 = vsel %vm652, %v2892, 0.0
        %2894 = vadd.xlane.f32.xlu0 %v2893
        %v2895 = vpop.xlane.xlu0 %2894
        %v2896 = vrcp.pop %v2895
        %v2897 = vmul.f32 %v2895, %v2896
        %v2898 = vsub.f32 1.0, %v2897
        %v2899 = vmul.f32 %v2896, %v2898
        %v2900 = vadd.f32 %v2896, %v2899
        %vm2901 = vweird.f32 %v2895
        %vm2902 = vweird.f32 %v2896
        %vm2903 = vmor %vm2901, %vm2902
        %v2904 = vsel %vm2903, %v2896, %v2900
        %v2905 = vand.u32 2147483647, %v2895
        %vm2906 = vcmp.eq.f32.partialorder %v2905, 8.507059e+37
        %v2907 = vand.u32 %v2895, 2147483648
        %v2908 = vor.u32 1.1754944e-38, %v2907
        %v2909 = vsel %vm2906, %v2908, %v2904
        %v2910 = vmul.f32 %v2892, %v2909
        %v2911 = vmul.f32 %v2910, %v2829
        %v2912 = vadd.f32 %v2764, %v2911
        %vm2913 = vcmask 1040384
        %v2914 = vsel %vm2913, %v1721, %v2856
        %vm2915 = vcmask 58368
        %2916 = vst.msk [vmem:[%s637] sm:$0x3] %vm2915, %v2914
        %v2917 = vsel %vm2913, %v1728, %v2863
        %2919 = vrot.lane.b32.xlu0 %v2917, 64
        %v2920 = vpop.permute.xlu0 %2919
        %2922 = vst.msk [vmem:[%s641] sm:$0x3] %vm2915, %v2920
        %vm2923 = vcmask 7168
        %v2924 = vsel %vm2923, %v1690, %v2829
        %2925 = vxpose.xlu0.b32.start [1/16] %v2924, 128
        %2926 = vxpose.xlu0.b32.cont [2/16] 0.0, 128
        %2927 = vxpose.xlu0.b32.cont [3/16] 0.0, 128
        %2928 = vxpose.xlu0.b32.cont [4/16] 0.0, 128
        %2929 = vxpose.xlu0.b32.cont [5/16] 0.0, 128
        %2930 = vxpose.xlu0.b32.cont [6/16] 0.0, 128
        %2931 = vxpose.xlu0.b32.cont [7/16] 0.0, 128
        %2932 = vxpose.xlu0.b32.cont [8/16] 0.0, 128
        %2933 = vxpose.xlu0.b32.cont [9/16] 0.0, 128
        %2934 = vxpose.xlu0.b32.cont [10/16] 0.0, 128
        %2935 = vxpose.xlu0.b32.cont [11/16] 0.0, 128
        %2936 = vxpose.xlu0.b32.cont [12/16] 0.0, 128
        %2937 = vxpose.xlu0.b32.cont [13/16] 0.0, 128
        %2938 = vxpose.xlu0.b32.cont [14/16] 0.0, 128
        %2939 = vxpose.xlu0.b32.cont [15/16] 0.0, 128
        %2940 = vxpose.xlu0.b32.end [16/16] 0.0, 128
        %v2941 = vpop.trf.xlu0
        %v2942 = vpop.trf.xlu0
        %v2943 = vpop.trf.xlu0
        %v2944 = vpop.trf.xlu0
        %v2945 = vpop.trf.xlu0
        %v2946 = vpop.trf.xlu0
        %v2947 = vpop.trf.xlu0
        %v2948 = vpop.trf.xlu0
        %v2949 = vpop.trf.xlu0
        %v2950 = vpop.trf.xlu0
        %v2951 = vpop.trf.xlu0
        %v2952 = vpop.trf.xlu0
        %v2953 = vpop.trf.xlu0
        %v2954 = vpop.trf.xlu0
        %v2955 = vpop.trf.xlu0
        %v2956 = vpop.trf.xlu0
        %2957 = vst.msk [vmem:[%s645] sm:$0x3] %vm2915, %v2941
        %v2958 = vld [vmem:[%s14] sm:$0x1]
        %v2959 = vld [vmem:[%s15] sm:$0x1]
        %v2960 = vsel %vm652, %v2912, 0.0
        %2961 = vadd.xlane.f32.xlu0 %v2960
        %v2962 = vpop.xlane.xlu0 %2961
        %v2963 = vmul.f32 %v2962, %v662
        %v2964 = vsub.f32 %v2912, %v2963
        %v2965 = vmul.f32 %v2964, %v2964
        %v2966 = vsel %vm652, %v2965, 0.0
        %2967 = vadd.xlane.f32.xlu0 %v2966
        %v2968 = vpop.xlane.xlu0 %2967
        %v2969 = vmul.f32 %v2968, %v662
        %v2970 = vadd.f32 %v2969, 1e-05
        %v2971 = vrsqrt.pop %v2970
        %v2972 = vmul.f32 %v2971, %v2970
        %v2973 = vmul.f32 %v2972, %v2971
        %v2974 = vmul.f32 0.5, %v2973
        %v2975 = vsub.f32 1.5, %v2974
        %v2976 = vmul.f32 %v2971, %v2975
        %vm2977 = vweird.f32 %v2970
        %vm2978 = vweird.f32 %v2971
        %vm2979 = vmor %vm2977, %vm2978
        %v2980 = vsel %vm2979, %v2971, %v2976
        %v2981 = vmul.f32 %v2964, %v2980
        %v2983 = vperm.slane %v2958, 0
        %v2985 = vmul.f32 %v2981, %v2983
        %v2987 = vperm.slane %v2959, 0
        %v2989 = vadd.f32 %v2985, %v2987
        %2990 = vst.msk [vmem:[%s607] sm:$0xff] %vm652, %v2989
        %s2991 = sand.u32 %s388, 1
        %s2992 = scalar_lea.sflag [#allocation3], %s2991
        %s2993 = sand.u32 %s388, 1
        %s2994 = smul.addr %s2993, 8
        %s2995 = scalar_lea.vmem [#allocation2], %s2994
        %p2996 = scmp.lt.s32.totalorder %s34, 1
        %s2997 = scalar_select %p2996, %s34, 1
        %s2998 = smul.addr %s2997, 2
        %s2999 = scalar_lea.vmem %s17, %s2998
        %p3000 = scmp.lt.s32.totalorder %s34, 1
        %s3001 = scalar_select %p3000, %s34, 1
        %s3002 = smul.addr %s3001, 2
        %s3003 = scalar_lea.vmem %s18, %s3002
        %p3004 = scmp.lt.s32.totalorder %s34, 1
        %s3005 = scalar_select %p3004, %s34, 1
        %s3006 = smul.addr %s3005, 2
        %s3007 = scalar_lea.vmem %s19, %s3006
        // Predicated region
        $region85: #{_forward_jit.1} parent=83 // pred_check
          %p3008 = pneg %p398
        $region86: #{_forward_jit.1} parent=83 // pred_check_branch
          %3010 = sbr.rel (%p3008) target = $region88
        $region87: #{_forward_jit.1} parent=83 // pred_region
          %3012 = vsyncadd %s2992, 0
          %s3013 = smul.addr %s34, 8
          %s3014 = scalar_lea.hbm %s16, %s3013
          %s3016 = sshll.u32 %s2995, 4
          %s3017 = int_to_ptr.vmem [resolvable:$true] %s3016
          %s3018 = sshll.u32 %s3014, 4
          %s3019 = int_to_ptr.hbm [resolvable:$true] %s3018
          %3021 = dma.vmem_to_hbm [thread:$0]  %s3017, 128, %s3019, %s2992
        $region88: #{_forward_jit.1} parent=83 // pred_fallthru
          _
        // Predicated region
        $region89: #{_forward_jit.1} parent=83 // pred_check
          %p3022 = pneg %p424
        $region90: #{_forward_jit.1} parent=83 // pred_check_branch
          %3024 = sbr.rel (%p3022) target = $region92
        $region91: #{_forward_jit.1} parent=83 // pred_region
          _
        $region92: #{_forward_jit.1} parent=83 // pred_fallthru
          _
        // Predicated region
        $region93: #{_forward_jit.1} parent=83 // pred_check
          %p3025 = pneg %p450
        $region94: #{_forward_jit.1} parent=83 // pred_check_branch
          %3027 = sbr.rel (%p3025) target = $region96
        $region95: #{_forward_jit.1} parent=83 // pred_region
          _
        $region96: #{_forward_jit.1} parent=83 // pred_fallthru
          _
        // Predicated region
        $region97: #{_forward_jit.1} parent=83 // pred_check
          %p3028 = pneg %p476
        $region98: #{_forward_jit.1} parent=83 // pred_check_branch
          %3030 = sbr.rel (%p3028) target = $region100
        $region99: #{_forward_jit.1} parent=83 // pred_region
          _
        $region100: #{_forward_jit.1} parent=83 // pred_fallthru
          _
      $region84: #{_forward_jit.1} parent=5 // pred_fallthru
        _
      %p3031 = scmp.le.s32.totalorder 2, %s29
      // Predicated region
      $region101: #{_forward_jit.1} parent=5 // pred_check
        %p3032 = pneg %p3031
      $region102: #{_forward_jit.1} parent=5 // pred_check_branch
        %3034 = sbr.rel (%p3032) target = $region104
      $region103: #{_forward_jit.1} parent=5 // pred_region
        %s3035 = ssub.s32 %s29, 2
        // Predicated region
        $region105: #{_forward_jit.1} parent=103 // pred_check
          %p3036 = pneg %p404
        $region106: #{_forward_jit.1} parent=103 // pred_check_branch
          %3038 = sbr.rel (%p3036) target = $region108
        $region107: #{_forward_jit.1} parent=103 // pred_region
          %s3039 = sand.u32 %s389, 1
          %s3040 = scalar_lea.sflag [#allocation3], %s3039
          %s3041 = sand.u32 %s389, 1
          %s3042 = smul.addr %s3041, 8
          %s3043 = scalar_lea.vmem [#allocation2], %s3042
          %3045 = dma.done %s3040, 128
        $region108: #{_forward_jit.1} parent=103 // pred_fallthru
          _
        // Predicated region
        $region109: #{_forward_jit.1} parent=103 // pred_check
          %p3046 = pneg %p430
        $region110: #{_forward_jit.1} parent=103 // pred_check_branch
          %3048 = sbr.rel (%p3046) target = $region112
        $region111: #{_forward_jit.1} parent=103 // pred_region
          %p3049 = scmp.lt.s32.totalorder %s35, 1
          %s3050 = scalar_select %p3049, %s35, 1
          %s3051 = smul.addr %s3050, 2
          %s3052 = scalar_lea.vmem %s17, %s3051
        $region112: #{_forward_jit.1} parent=103 // pred_fallthru
          _
        // Predicated region
        $region113: #{_forward_jit.1} parent=103 // pred_check
          %p3053 = pneg %p456
        $region114: #{_forward_jit.1} parent=103 // pred_check_branch
          %3055 = sbr.rel (%p3053) target = $region116
        $region115: #{_forward_jit.1} parent=103 // pred_region
          %p3056 = scmp.lt.s32.totalorder %s35, 1
          %s3057 = scalar_select %p3056, %s35, 1
          %s3058 = smul.addr %s3057, 2
          %s3059 = scalar_lea.vmem %s18, %s3058
        $region116: #{_forward_jit.1} parent=103 // pred_fallthru
          _
        // Predicated region
        $region117: #{_forward_jit.1} parent=103 // pred_check
          %p3060 = pneg %p482
        $region118: #{_forward_jit.1} parent=103 // pred_check_branch
          %3062 = sbr.rel (%p3060) target = $region120
        $region119: #{_forward_jit.1} parent=103 // pred_region
          %p3063 = scmp.lt.s32.totalorder %s35, 1
          %s3064 = scalar_select %p3063, %s35, 1
          %s3065 = smul.addr %s3064, 2
          %s3066 = scalar_lea.vmem %s19, %s3065
        $region120: #{_forward_jit.1} parent=103 // pred_fallthru
          _
      $region104: #{_forward_jit.1} parent=5 // pred_fallthru
        _
    $region6: #{_forward_jit.1} parent=1 // loop_footer
      %s33 = sadd.s32 1, %s29
    $region7: #{_forward_jit.1} parent=1 // loop_footer_branch
      %28 = sbr.rel target = $region3
    $region8: #{_forward_jit.1} parent=1 // loop_exit
      _
    %3067 = vsyncpa [#allocation3], 1
    %s3068 = scalar_lea.sflag [#allocation3], 1
    %3069 = vsyncpa %s3068, 1

</llo_original>
